<compile_context>
chip_gen: v6e
topology: v6e:2x2x1
jax: 0.10.0
libtpu: 0.0.40
codegen_flags: <defaults>
</compile_context>

<pallas_src>
import math

import jax
import jax.numpy as jnp
from jax import lax
from jax.experimental import pallas as pl
from jax.experimental.pallas import tpu as pltpu  # noqa: F401  (kept for TPU namespace)

# ------------------------- model hyper-parameters ---------------------------
B = 2            # batch
S = 8            # sequence length
H = 32           # hidden size
NH = 2           # attention heads
DH = H // NH     # head dim
I = 64           # FFN intermediate size
L = 2            # encoder layers
C = 10           # num_classes (Config.num_classes)
VOCAB = 100
MAX_POS = 64
NTYPES = 2
EPS = 1e-12      # BERT LayerNorm eps
BS = B * S

# ---- packed small-vector row layout: ONE (PV_ROWS, I) f32 array, one DMA ----
R_EMB_G = 0                          # embedding LN gamma          (width H)
R_EMB_B = 1                          # embedding LN beta           (width H)
R_QKVB = 2                           # + (li*3 + j)*NH + h         (width DH)
R_BO = R_QKVB + L * 3 * NH           # + li   attn output bias     (width H)
R_LN_G = R_BO + L                    # + li*2 + n                  (width H)
R_LN_B = R_LN_G + 2 * L              # + li*2 + n                  (width H)
R_B1 = R_LN_B + 2 * L                # + li   FFN bias 1           (width I)
R_B2 = R_B1 + L                      # + li   FFN bias 2           (width H)
R_FCB = R_B2 + L                     # classifier bias             (width C)
PV_ROWS = R_FCB + 1                  # = 29


# ------------------------------ kernel helpers -------------------------------
def _layernorm(v, g, b):
    mu = jnp.mean(v, axis=-1, keepdims=True)
    var = jnp.mean((v - mu) ** 2, axis=-1, keepdims=True)
    return (v - mu) * lax.rsqrt(var + EPS) * g + b


def _gelu(x):
    # TODO(synk): HF BERT uses exact erf-based GELU; tanh approximation used here.
    c = math.sqrt(2.0 / math.pi)
    return 0.5 * x * (1.0 + jnp.tanh(c * (x + 0.044715 * x * x * x)))


# --------------------------- fused forward kernel ----------------------------
def fused_bert_kernel(ids_ref, tti_ref, mask_ref,
                      word_emb_ref, type_emb_ref, pos_emb_ref,
                      pvec_ref,
                      wqkv_ref, wo_ref, w1_ref, w2_ref, fc_w_ref,
                      logits_ref):
    pvec = pvec_ref[...]                                   # (PV_ROWS, I) f32

    def vrow(r, w):                                        # (1, w), lane-0 aligned
        return pvec[r:r + 1, :w]

    # ---- embeddings (in-kernel gather via one-hot matmul) + LayerNorm ----
    ids = ids_ref[...]                                     # (BS, 1) i32
    tti = tti_ref[...]                                     # (BS, 1) i32
    onehot = (lax.broadcasted_iota(jnp.int32, (BS, VOCAB), 1) == ids
              ).astype(jnp.float32)                        # (BS, VOCAB)
    word_e = jnp.dot(onehot, word_emb_ref[...],
                     preferred_element_type=jnp.float32)   # (BS, H)
    type_e = jnp.where(tti == 0, type_emb_ref[0:1, :], type_emb_ref[1:2, :])
    pos_e = jnp.concatenate([pos_emb_ref[...]] * B, axis=0)  # (BS, H)

    x = _layernorm(word_e + pos_e + type_e, vrow(R_EMB_G, H), vrow(R_EMB_B, H))

    # additive attention mask, HF convention: (1 - m) * -10000
    addmask = (1.0 - mask_ref[...].astype(jnp.float32)) * -10000.0    # (B, S)
    scale = 1.0 / math.sqrt(DH)

    # ---- encoder layers (static unroll; activation resident on-chip) ----
    for li in range(L):
        x_bf = x.astype(jnp.bfloat16)

        # per-head q/k/v projections: weights pre-split per head, so each head's
        # (BS, DH) result is lane-0 aligned (no cross-lane head extraction).
        qs, ks, vs = [], [], []
        base = R_QKVB + (li * 3) * NH
        for h in range(NH):
            q = jnp.dot(x_bf, wqkv_ref[li, 0, h],
                        preferred_element_type=jnp.float32) + vrow(base + 0 * NH + h, DH)
            k = jnp.dot(x_bf, wqkv_ref[li, 1, h],
                        preferred_element_type=jnp.float32) + vrow(base + 1 * NH + h, DH)
            v = jnp.dot(x_bf, wqkv_ref[li, 2, h],
                        preferred_element_type=jnp.float32) + vrow(base + 2 * NH + h, DH)
            qs.append(q); ks.append(k); vs.append(v)

        # attention; per-head context @ Wo_head accumulated in registers
        attn_rows = []
        for b in range(B):
            rs = slice(b * S, (b + 1) * S)                 # sublane-aligned rows
            mb = addmask[b:b + 1, :]                       # (1, S)
            acc = jnp.zeros((S, H), jnp.float32)
            for h in range(NH):
                qh = qs[h][rs]                             # (S, DH)
                kh = ks[h][rs]
                vh = vs[h][rs]
                scores = lax.dot_general(
                    qh, kh, (((1,), (1,)), ((), ())),
                    preferred_element_type=jnp.float32) * scale + mb
                m = jnp.max(scores, axis=-1, keepdims=True)
                p = jnp.exp(scores - m)
                denom = jnp.sum(p, axis=-1, keepdims=True)
                attn = p * pl.reciprocal(denom, approx=True)
                ctx = jnp.dot(attn, vh, preferred_element_type=jnp.float32)
                acc = acc + jnp.dot(ctx.astype(jnp.bfloat16), wo_ref[li, h],
                                    preferred_element_type=jnp.float32)
            attn_rows.append(acc)
        attn_out = jnp.concatenate(attn_rows, axis=0) + vrow(R_BO + li, H)

        y = _layernorm(x + attn_out,
                       vrow(R_LN_G + li * 2 + 0, H), vrow(R_LN_B + li * 2 + 0, H))

        h1 = _gelu(jnp.dot(y.astype(jnp.bfloat16), w1_ref[li],
                           preferred_element_type=jnp.float32) + vrow(R_B1 + li, I))
        h2 = jnp.dot(h1.astype(jnp.bfloat16), w2_ref[li],
                     preferred_element_type=jnp.float32) + vrow(R_B2 + li, H)
        x = _layernorm(y + h2,
                       vrow(R_LN_G + li * 2 + 1, H), vrow(R_LN_B + li * 2 + 1, H))

    # ---- classifier head on the [CLS] rows (rows b*S, still on-chip) ----
    cls = jnp.concatenate([x[b * S:b * S + 1, :] for b in range(B)], axis=0)  # (B,H)
    logits_ref[...] = (jnp.dot(cls.astype(jnp.bfloat16), fc_w_ref[...],
                               preferred_element_type=jnp.float32)
                       + vrow(R_FCB, C))


# ------------------------------ JAX wrapper ----------------------------------
@jax.jit
def bert_classifier_forward(params, input_ids, attention_mask, token_type_ids):
    ids = input_ids.reshape(BS, 1).astype(jnp.int32)
    tti = token_type_ids.reshape(BS, 1).astype(jnp.int32)
    mask = attention_mask.astype(jnp.int32)                # (B, S)
    pos = params["pos_emb"][:S]                            # (S, H), batch-invariant

    args = (ids, tti, mask,
            params["word_emb"], params["type_emb"], pos,
            params["pvec"],
            params["wqkv"], params["wo"], params["w1"], params["w2"],
            params["fc_w"])

    flops = (2 * BS * VOCAB * H
             + L * (3 * NH * 2 * BS * H * DH
                    + B * NH * (2 * S * DH * S + 2 * S * S * DH + 2 * S * DH * H)
                    + 2 * BS * H * I + 2 * BS * I * H)
             + 2 * B * H * C)
    transcendentals = L * (B * NH * S * S + BS * I) + (2 * L + 1) * BS
    bytes_accessed = sum(int(a.size) * a.dtype.itemsize for a in args) + B * C * 4

    return pl.pallas_call(
        fused_bert_kernel,
        out_shape=jax.ShapeDtypeStruct((B, C), jnp.float32),
        cost_estimate=pl.CostEstimate(flops=flops,
                                      transcendentals=transcendentals,
                                      bytes_accessed=bytes_accessed),
    )(*args)


# ------------------------------ parameter init -------------------------------
def init_params(key):
    def nrm(k, shape, scale=0.02):
        return scale * jax.random.normal(k, shape, dtype=jnp.float32)

    keys = jax.random.split(key, 8)
    # TODO(synk): pretrained BertModel weights cannot be loaded; deterministic
    # synthetic mini-BERT parameters with the same structure are used instead.

    # attention weights, pre-split per head in the wrapper
    wqkv = nrm(keys[3], (L, 3, H, H))
    wqkv = wqkv.reshape(L, 3, H, NH, DH).transpose(0, 1, 3, 2, 4)   # (L,3,NH,H,DH)
    wo = nrm(keys[4], (L, H, H)).reshape(L, NH, DH, H)              # (L,NH,DH,H)

    # packed small vectors (biases / LN params) -> single DMA
    pvec = jnp.zeros((PV_ROWS, I), jnp.float32)
    pvec = pvec.at[R_EMB_G, :H].set(1.0)                            # emb LN gamma
    for li in range(L):
        for n in range(2):
            pvec = pvec.at[R_LN_G + li * 2 + n, :H].set(1.0)        # encoder LN gammas
    # all biases and LN betas are zero (matches the previous synthetic init)

    return {
        "word_emb": nrm(keys[0], (VOCAB, H)),
        "pos_emb": nrm(keys[1], (MAX_POS, H)),
        "type_emb": nrm(keys[2], (NTYPES, H)),
        "pvec": pvec,
        "wqkv": wqkv.astype(jnp.bfloat16),
        "wo": wo.astype(jnp.bfloat16),
        "w1": nrm(keys[5], (L, H, I)).astype(jnp.bfloat16),
        "w2": nrm(keys[6], (L, I, H)).astype(jnp.bfloat16),
        "fc_w": nrm(keys[7], (H, C)).astype(jnp.bfloat16),          # pre-transposed Linear
    }


# ----------------------------------- main ------------------------------------
if __name__ == "__main__":
    key = jax.random.PRNGKey(0)
    pkey, ikey = jax.random.split(key)
    params = init_params(pkey)

    input_ids = jax.random.randint(ikey, (B, S), 0, VOCAB, dtype=jnp.int32)
    attention_mask = jnp.ones((B, S), dtype=jnp.int32).at[1, 6:].set(0)
    token_type_ids = jnp.zeros((B, S), dtype=jnp.int32)

    logits = bert_classifier_forward(params, input_ids, attention_mask,
                                     token_type_ids)
    logits = jax.block_until_ready(logits)
    assert logits.shape == (B, C) and logits.dtype == jnp.float32
    print("KERNEL_OK")
</pallas_src>

<mosaic_0001>
module attributes {stable_mosaic.version = 11 : i64} {
  func.func @fused_bert_kernel(%arg0: memref<16x1xi32, #tpu.memory_space<vmem>>, %arg1: memref<16x1xi32, #tpu.memory_space<vmem>>, %arg2: memref<2x8xi32, #tpu.memory_space<vmem>>, %arg3: memref<100x32xf32, #tpu.memory_space<vmem>>, %arg4: memref<2x32xf32, #tpu.memory_space<vmem>>, %arg5: memref<8x32xf32, #tpu.memory_space<vmem>>, %arg6: memref<29x64xf32, #tpu.memory_space<vmem>>, %arg7: memref<2x3x2x32x16xbf16, #tpu.memory_space<vmem>>, %arg8: memref<2x2x16x32xbf16, #tpu.memory_space<vmem>>, %arg9: memref<2x32x64xbf16, #tpu.memory_space<vmem>>, %arg10: memref<2x64x32xbf16, #tpu.memory_space<vmem>>, %arg11: memref<32x10xbf16, #tpu.memory_space<vmem>>, %arg12: memref<2x10xf32, #tpu.memory_space<vmem>>) attributes {dimension_semantics = [], scalar_prefetch = 0 : i64, scratch_operands = 0 : i64, tpu.core_type = #tpu.core_type<tc>} {
    %c0 = arith.constant 0 : index
    %c0_0 = arith.constant 0 : index
    %0 = vector.load %arg6[%c0, %c0_0] : memref<29x64xf32, #tpu.memory_space<vmem>>, vector<29x64xf32>
    %c0_1 = arith.constant 0 : index
    %c0_2 = arith.constant 0 : index
    %1 = vector.load %arg0[%c0_1, %c0_2] : memref<16x1xi32, #tpu.memory_space<vmem>>, vector<16x1xi32>
    %c0_3 = arith.constant 0 : index
    %c0_4 = arith.constant 0 : index
    %2 = vector.load %arg1[%c0_3, %c0_4] : memref<16x1xi32, #tpu.memory_space<vmem>>, vector<16x1xi32>
    %3 = tpu.iota {dimensions = array<i32: 1>} : vector<16x100xi32>
    %4 = vector.broadcast %1 : vector<16x1xi32> to vector<16x100xi32>
    %5 = arith.cmpi eq, %3, %4 : vector<16x100xi32>
    %6 = arith.extui %5 : vector<16x100xi1> to vector<16x100xi32>
    %7 = arith.sitofp %6 : vector<16x100xi32> to vector<16x100xf32>
    %c0_5 = arith.constant 0 : index
    %c0_6 = arith.constant 0 : index
    %8 = vector.load %arg3[%c0_5, %c0_6] : memref<100x32xf32, #tpu.memory_space<vmem>>, vector<100x32xf32>
    %cst = arith.constant dense<0.000000e+00> : vector<16x32xf32>
    %9 = tpu.matmul %7, %8, %cst {dimension_numbers = #tpu.dot_dimension_numbers<[1], [0], [0], [1], [0, 0, 1, 1], [], []>} : vector<16x100xf32>, vector<100x32xf32>, vector<16x32xf32> -> vector<16x32xf32>
    %c0_i32 = arith.constant 0 : i32
    %10 = vector.broadcast %c0_i32 : i32 to vector<16x1xi32>
    %11 = arith.cmpi eq, %2, %10 : vector<16x1xi32>
    %c0_7 = arith.constant 0 : index
    %c0_8 = arith.constant 0 : index
    %12 = vector.load %arg4[%c0_7, %c0_8] : memref<2x32xf32, #tpu.memory_space<vmem>>, vector<1x32xf32>
    %c1 = arith.constant 1 : index
    %c0_9 = arith.constant 0 : index
    %13 = vector.load %arg4[%c1, %c0_9] : memref<2x32xf32, #tpu.memory_space<vmem>>, vector<1x32xf32>
    %14 = vector.shape_cast %11 : vector<16x1xi1> to vector<16x1xi1>
    %15 = vector.broadcast %14 : vector<16x1xi1> to vector<16x32xi1>
    %16 = vector.shape_cast %12 : vector<1x32xf32> to vector<1x32xf32>
    %17 = vector.broadcast %16 : vector<1x32xf32> to vector<16x32xf32>
    %18 = vector.shape_cast %13 : vector<1x32xf32> to vector<1x32xf32>
    %19 = vector.broadcast %18 : vector<1x32xf32> to vector<16x32xf32>
    %20 = arith.select %15, %17, %19 : vector<16x32xi1>, vector<16x32xf32>
    %c0_10 = arith.constant 0 : index
    %c0_11 = arith.constant 0 : index
    %21 = vector.load %arg5[%c0_10, %c0_11] : memref<8x32xf32, #tpu.memory_space<vmem>>, vector<8x32xf32>
    %22 = tpu.concatenate %21, %21 in 0 : vector<8x32xf32>, vector<8x32xf32> -> vector<16x32xf32>
    %23 = arith.addf %9, %22 : vector<16x32xf32>
    %24 = arith.addf %23, %20 : vector<16x32xf32>
    %25 = vector.extract_strided_slice %0 {offsets = [0, 0], sizes = [1, 32], strides = [1, 1]} : vector<29x64xf32> to vector<1x32xf32>
    %26 = vector.extract_strided_slice %0 {offsets = [1, 0], sizes = [1, 32], strides = [1, 1]} : vector<29x64xf32> to vector<1x32xf32>
    %cst_12 = arith.constant dense<0.000000e+00> : vector<16xf32>
    %27 = vector.multi_reduction <add>, %24, %cst_12 [1] : vector<16x32xf32> to vector<16xf32>
    %28 = vector.shape_cast %27 : vector<16xf32> to vector<16x1xf32>
    %cst_13 = arith.constant 3.200000e+01 : f32
    %29 = vector.broadcast %cst_13 : f32 to vector<16x1xf32>
    %30 = arith.divf %28, %29 : vector<16x1xf32>
    %31 = vector.broadcast %30 : vector<16x1xf32> to vector<16x32xf32>
    %32 = arith.subf %24, %31 : vector<16x32xf32>
    %33 = arith.mulf %32, %32 : vector<16x32xf32>
    %cst_14 = arith.constant dense<0.000000e+00> : vector<16xf32>
    %34 = vector.multi_reduction <add>, %33, %cst_14 [1] : vector<16x32xf32> to vector<16xf32>
    %35 = vector.shape_cast %34 : vector<16xf32> to vector<16x1xf32>
    %cst_15 = arith.constant 3.200000e+01 : f32
    %36 = vector.broadcast %cst_15 : f32 to vector<16x1xf32>
    %37 = arith.divf %35, %36 : vector<16x1xf32>
    %38 = vector.broadcast %30 : vector<16x1xf32> to vector<16x32xf32>
    %39 = arith.subf %24, %38 : vector<16x32xf32>
    %cst_16 = arith.constant 9.99999996E-13 : f32
    %40 = vector.broadcast %cst_16 : f32 to vector<16x1xf32>
    %41 = arith.addf %37, %40 : vector<16x1xf32>
    %42 = math.rsqrt %41 : vector<16x1xf32>
    %43 = vector.broadcast %42 : vector<16x1xf32> to vector<16x32xf32>
    %44 = arith.mulf %39, %43 : vector<16x32xf32>
    %45 = vector.broadcast %25 : vector<1x32xf32> to vector<16x32xf32>
    %46 = arith.mulf %44, %45 : vector<16x32xf32>
    %47 = vector.broadcast %26 : vector<1x32xf32> to vector<16x32xf32>
    %48 = arith.addf %46, %47 : vector<16x32xf32>
    %c0_17 = arith.constant 0 : index
    %c0_18 = arith.constant 0 : index
    %49 = vector.load %arg2[%c0_17, %c0_18] : memref<2x8xi32, #tpu.memory_space<vmem>>, vector<2x8xi32>
    %50 = arith.sitofp %49 : vector<2x8xi32> to vector<2x8xf32>
    %cst_19 = arith.constant 1.000000e+00 : f32
    %51 = vector.broadcast %cst_19 : f32 to vector<2x8xf32>
    %52 = arith.subf %51, %50 : vector<2x8xf32>
    %cst_20 = arith.constant -1.000000e+04 : f32
    %53 = vector.broadcast %cst_20 : f32 to vector<2x8xf32>
    %54 = arith.mulf %52, %53 : vector<2x8xf32>
    %55 = arith.truncf %48 : vector<16x32xf32> to vector<16x32xbf16>
    %c0_21 = arith.constant 0 : index
    %c0_22 = arith.constant 0 : index
    %c0_23 = arith.constant 0 : index
    %c0_24 = arith.constant 0 : index
    %c0_25 = arith.constant 0 : index
    %56 = vector.load %arg7[%c0_21, %c0_22, %c0_23, %c0_24, %c0_25] : memref<2x3x2x32x16xbf16, #tpu.memory_space<vmem>>, vector<1x1x1x32x16xbf16>
    %57 = vector.shape_cast %56 : vector<1x1x1x32x16xbf16> to vector<32x16xbf16>
    %cst_26 = arith.constant dense<0.000000e+00> : vector<16x16xf32>
    %58 = tpu.matmul %55, %57, %cst_26 {dimension_numbers = #tpu.dot_dimension_numbers<[1], [0], [0], [1], [0, 0, 1, 1], [], []>} : vector<16x32xbf16>, vector<32x16xbf16>, vector<16x16xf32> -> vector<16x16xf32>
    %59 = vector.extract_strided_slice %0 {offsets = [2, 0], sizes = [1, 16], strides = [1, 1]} : vector<29x64xf32> to vector<1x16xf32>
    %60 = vector.broadcast %59 : vector<1x16xf32> to vector<16x16xf32>
    %61 = arith.addf %58, %60 : vector<16x16xf32>
    %c0_27 = arith.constant 0 : index
    %c1_28 = arith.constant 1 : index
    %c0_29 = arith.constant 0 : index
    %c0_30 = arith.constant 0 : index
    %c0_31 = arith.constant 0 : index
    %62 = vector.load %arg7[%c0_27, %c1_28, %c0_29, %c0_30, %c0_31] : memref<2x3x2x32x16xbf16, #tpu.memory_space<vmem>>, vector<1x1x1x32x16xbf16>
    %63 = vector.shape_cast %62 : vector<1x1x1x32x16xbf16> to vector<32x16xbf16>
    %cst_32 = arith.constant dense<0.000000e+00> : vector<16x16xf32>
    %64 = tpu.matmul %55, %63, %cst_32 {dimension_numbers = #tpu.dot_dimension_numbers<[1], [0], [0], [1], [0, 0, 1, 1], [], []>} : vector<16x32xbf16>, vector<32x16xbf16>, vector<16x16xf32> -> vector<16x16xf32>
    %65 = vector.extract_strided_slice %0 {offsets = [4, 0], sizes = [1, 16], strides = [1, 1]} : vector<29x64xf32> to vector<1x16xf32>
    %66 = vector.broadcast %65 : vector<1x16xf32> to vector<16x16xf32>
    %67 = arith.addf %64, %66 : vector<16x16xf32>
    %c0_33 = arith.constant 0 : index
    %c2 = arith.constant 2 : index
    %c0_34 = arith.constant 0 : index
    %c0_35 = arith.constant 0 : index
    %c0_36 = arith.constant 0 : index
    %68 = vector.load %arg7[%c0_33, %c2, %c0_34, %c0_35, %c0_36] : memref<2x3x2x32x16xbf16, #tpu.memory_space<vmem>>, vector<1x1x1x32x16xbf16>
    %69 = vector.shape_cast %68 : vector<1x1x1x32x16xbf16> to vector<32x16xbf16>
    %cst_37 = arith.constant dense<0.000000e+00> : vector<16x16xf32>
    %70 = tpu.matmul %55, %69, %cst_37 {dimension_numbers = #tpu.dot_dimension_numbers<[1], [0], [0], [1], [0, 0, 1, 1], [], []>} : vector<16x32xbf16>, vector<32x16xbf16>, vector<16x16xf32> -> vector<16x16xf32>
    %71 = vector.extract_strided_slice %0 {offsets = [6, 0], sizes = [1, 16], strides = [1, 1]} : vector<29x64xf32> to vector<1x16xf32>
    %72 = vector.broadcast %71 : vector<1x16xf32> to vector<16x16xf32>
    %73 = arith.addf %70, %72 : vector<16x16xf32>
    %c0_38 = arith.constant 0 : index
    %c0_39 = arith.constant 0 : index
    %c1_40 = arith.constant 1 : index
    %c0_41 = arith.constant 0 : index
    %c0_42 = arith.constant 0 : index
    %74 = vector.load %arg7[%c0_38, %c0_39, %c1_40, %c0_41, %c0_42] : memref<2x3x2x32x16xbf16, #tpu.memory_space<vmem>>, vector<1x1x1x32x16xbf16>
    %75 = vector.shape_cast %74 : vector<1x1x1x32x16xbf16> to vector<32x16xbf16>
    %cst_43 = arith.constant dense<0.000000e+00> : vector<16x16xf32>
    %76 = tpu.matmul %55, %75, %cst_43 {dimension_numbers = #tpu.dot_dimension_numbers<[1], [0], [0], [1], [0, 0, 1, 1], [], []>} : vector<16x32xbf16>, vector<32x16xbf16>, vector<16x16xf32> -> vector<16x16xf32>
    %77 = vector.extract_strided_slice %0 {offsets = [3, 0], sizes = [1, 16], strides = [1, 1]} : vector<29x64xf32> to vector<1x16xf32>
    %78 = vector.broadcast %77 : vector<1x16xf32> to vector<16x16xf32>
    %79 = arith.addf %76, %78 : vector<16x16xf32>
    %c0_44 = arith.constant 0 : index
    %c1_45 = arith.constant 1 : index
    %c1_46 = arith.constant 1 : index
    %c0_47 = arith.constant 0 : index
    %c0_48 = arith.constant 0 : index
    %80 = vector.load %arg7[%c0_44, %c1_45, %c1_46, %c0_47, %c0_48] : memref<2x3x2x32x16xbf16, #tpu.memory_space<vmem>>, vector<1x1x1x32x16xbf16>
    %81 = vector.shape_cast %80 : vector<1x1x1x32x16xbf16> to vector<32x16xbf16>
    %cst_49 = arith.constant dense<0.000000e+00> : vector<16x16xf32>
    %82 = tpu.matmul %55, %81, %cst_49 {dimension_numbers = #tpu.dot_dimension_numbers<[1], [0], [0], [1], [0, 0, 1, 1], [], []>} : vector<16x32xbf16>, vector<32x16xbf16>, vector<16x16xf32> -> vector<16x16xf32>
    %83 = vector.extract_strided_slice %0 {offsets = [5, 0], sizes = [1, 16], strides = [1, 1]} : vector<29x64xf32> to vector<1x16xf32>
    %84 = vector.broadcast %83 : vector<1x16xf32> to vector<16x16xf32>
    %85 = arith.addf %82, %84 : vector<16x16xf32>
    %c0_50 = arith.constant 0 : index
    %c2_51 = arith.constant 2 : index
    %c1_52 = arith.constant 1 : index
    %c0_53 = arith.constant 0 : index
    %c0_54 = arith.constant 0 : index
    %86 = vector.load %arg7[%c0_50, %c2_51, %c1_52, %c0_53, %c0_54] : memref<2x3x2x32x16xbf16, #tpu.memory_space<vmem>>, vector<1x1x1x32x16xbf16>
    %87 = vector.shape_cast %86 : vector<1x1x1x32x16xbf16> to vector<32x16xbf16>
    %cst_55 = arith.constant dense<0.000000e+00> : vector<16x16xf32>
    %88 = tpu.matmul %55, %87, %cst_55 {dimension_numbers = #tpu.dot_dimension_numbers<[1], [0], [0], [1], [0, 0, 1, 1], [], []>} : vector<16x32xbf16>, vector<32x16xbf16>, vector<16x16xf32> -> vector<16x16xf32>
    %89 = vector.extract_strided_slice %0 {offsets = [7, 0], sizes = [1, 16], strides = [1, 1]} : vector<29x64xf32> to vector<1x16xf32>
    %90 = vector.broadcast %89 : vector<1x16xf32> to vector<16x16xf32>
    %91 = arith.addf %88, %90 : vector<16x16xf32>
    %92 = vector.extract_strided_slice %54 {offsets = [0, 0], sizes = [1, 8], strides = [1, 1]} : vector<2x8xf32> to vector<1x8xf32>
    %cst_56 = arith.constant 0.000000e+00 : f32
    %93 = vector.broadcast %cst_56 : f32 to vector<8x32xf32>
    %94 = vector.extract_strided_slice %61 {offsets = [0, 0], sizes = [8, 16], strides = [1, 1]} : vector<16x16xf32> to vector<8x16xf32>
    %95 = vector.extract_strided_slice %67 {offsets = [0, 0], sizes = [8, 16], strides = [1, 1]} : vector<16x16xf32> to vector<8x16xf32>
    %96 = vector.extract_strided_slice %73 {offsets = [0, 0], sizes = [8, 16], strides = [1, 1]} : vector<16x16xf32> to vector<8x16xf32>
    %cst_57 = arith.constant dense<0.000000e+00> : vector<8x8xf32>
    %97 = tpu.matmul %94, %95, %cst_57 {dimension_numbers = #tpu.dot_dimension_numbers<[1], [1], [0], [0], [0, 0, 1, 0], [], []>} : vector<8x16xf32>, vector<8x16xf32>, vector<8x8xf32> -> vector<8x8xf32>
    %cst_58 = arith.constant 2.500000e-01 : f32
    %98 = vector.broadcast %cst_58 : f32 to vector<8x8xf32>
    %99 = arith.mulf %97, %98 : vector<8x8xf32>
    %100 = vector.broadcast %92 : vector<1x8xf32> to vector<8x8xf32>
    %101 = arith.addf %99, %100 : vector<8x8xf32>
    %cst_59 = arith.constant dense<0xFF800000> : vector<8xf32>
    %102 = vector.multi_reduction <maximumf>, %101, %cst_59 [1] : vector<8x8xf32> to vector<8xf32>
    %103 = vector.shape_cast %102 : vector<8xf32> to vector<8x1xf32>
    %104 = vector.broadcast %103 : vector<8x1xf32> to vector<8x8xf32>
    %105 = arith.subf %101, %104 : vector<8x8xf32>
    %106 = math.exp %105 : vector<8x8xf32>
    %cst_60 = arith.constant dense<0.000000e+00> : vector<8xf32>
    %107 = vector.multi_reduction <add>, %106, %cst_60 [1] : vector<8x8xf32> to vector<8xf32>
    %108 = vector.shape_cast %107 : vector<8xf32> to vector<8x1xf32>
    %109 = tpu.reciprocal %108 {approx = true} : vector<8x1xf32> -> vector<8x1xf32>
    %110 = vector.broadcast %109 : vector<8x1xf32> to vector<8x8xf32>
    %111 = arith.mulf %106, %110 : vector<8x8xf32>
    %cst_61 = arith.constant dense<0.000000e+00> : vector<8x16xf32>
    %112 = tpu.matmul %111, %96, %cst_61 {dimension_numbers = #tpu.dot_dimension_numbers<[1], [0], [0], [1], [0, 0, 1, 1], [], []>} : vector<8x8xf32>, vector<8x16xf32>, vector<8x16xf32> -> vector<8x16xf32>
    %113 = arith.truncf %112 : vector<8x16xf32> to vector<8x16xbf16>
    %c0_62 = arith.constant 0 : index
    %c0_63 = arith.constant 0 : index
    %c0_64 = arith.constant 0 : index
    %c0_65 = arith.constant 0 : index
    %114 = vector.load %arg8[%c0_62, %c0_63, %c0_64, %c0_65] : memref<2x2x16x32xbf16, #tpu.memory_space<vmem>>, vector<1x1x16x32xbf16>
    %115 = vector.shape_cast %114 : vector<1x1x16x32xbf16> to vector<16x32xbf16>
    %cst_66 = arith.constant dense<0.000000e+00> : vector<8x32xf32>
    %116 = tpu.matmul %113, %115, %cst_66 {dimension_numbers = #tpu.dot_dimension_numbers<[1], [0], [0], [1], [0, 0, 1, 1], [], []>} : vector<8x16xbf16>, vector<16x32xbf16>, vector<8x32xf32> -> vector<8x32xf32>
    %117 = arith.addf %93, %116 : vector<8x32xf32>
    %118 = vector.extract_strided_slice %79 {offsets = [0, 0], sizes = [8, 16], strides = [1, 1]} : vector<16x16xf32> to vector<8x16xf32>
    %119 = vector.extract_strided_slice %85 {offsets = [0, 0], sizes = [8, 16], strides = [1, 1]} : vector<16x16xf32> to vector<8x16xf32>
    %120 = vector.extract_strided_slice %91 {offsets = [0, 0], sizes = [8, 16], strides = [1, 1]} : vector<16x16xf32> to vector<8x16xf32>
    %cst_67 = arith.constant dense<0.000000e+00> : vector<8x8xf32>
    %121 = tpu.matmul %118, %119, %cst_67 {dimension_numbers = #tpu.dot_dimension_numbers<[1], [1], [0], [0], [0, 0, 1, 0], [], []>} : vector<8x16xf32>, vector<8x16xf32>, vector<8x8xf32> -> vector<8x8xf32>
    %cst_68 = arith.constant 2.500000e-01 : f32
    %122 = vector.broadcast %cst_68 : f32 to vector<8x8xf32>
    %123 = arith.mulf %121, %122 : vector<8x8xf32>
    %124 = vector.broadcast %92 : vector<1x8xf32> to vector<8x8xf32>
    %125 = arith.addf %123, %124 : vector<8x8xf32>
    %cst_69 = arith.constant dense<0xFF800000> : vector<8xf32>
    %126 = vector.multi_reduction <maximumf>, %125, %cst_69 [1] : vector<8x8xf32> to vector<8xf32>
    %127 = vector.shape_cast %126 : vector<8xf32> to vector<8x1xf32>
    %128 = vector.broadcast %127 : vector<8x1xf32> to vector<8x8xf32>
    %129 = arith.subf %125, %128 : vector<8x8xf32>
    %130 = math.exp %129 : vector<8x8xf32>
    %cst_70 = arith.constant dense<0.000000e+00> : vector<8xf32>
    %131 = vector.multi_reduction <add>, %130, %cst_70 [1] : vector<8x8xf32> to vector<8xf32>
    %132 = vector.shape_cast %131 : vector<8xf32> to vector<8x1xf32>
    %133 = tpu.reciprocal %132 {approx = true} : vector<8x1xf32> -> vector<8x1xf32>
    %134 = vector.broadcast %133 : vector<8x1xf32> to vector<8x8xf32>
    %135 = arith.mulf %130, %134 : vector<8x8xf32>
    %cst_71 = arith.constant dense<0.000000e+00> : vector<8x16xf32>
    %136 = tpu.matmul %135, %120, %cst_71 {dimension_numbers = #tpu.dot_dimension_numbers<[1], [0], [0], [1], [0, 0, 1, 1], [], []>} : vector<8x8xf32>, vector<8x16xf32>, vector<8x16xf32> -> vector<8x16xf32>
    %137 = arith.truncf %136 : vector<8x16xf32> to vector<8x16xbf16>
    %c0_72 = arith.constant 0 : index
    %c1_73 = arith.constant 1 : index
    %c0_74 = arith.constant 0 : index
    %c0_75 = arith.constant 0 : index
    %138 = vector.load %arg8[%c0_72, %c1_73, %c0_74, %c0_75] : memref<2x2x16x32xbf16, #tpu.memory_space<vmem>>, vector<1x1x16x32xbf16>
    %139 = vector.shape_cast %138 : vector<1x1x16x32xbf16> to vector<16x32xbf16>
    %cst_76 = arith.constant dense<0.000000e+00> : vector<8x32xf32>
    %140 = tpu.matmul %137, %139, %cst_76 {dimension_numbers = #tpu.dot_dimension_numbers<[1], [0], [0], [1], [0, 0, 1, 1], [], []>} : vector<8x16xbf16>, vector<16x32xbf16>, vector<8x32xf32> -> vector<8x32xf32>
    %141 = arith.addf %117, %140 : vector<8x32xf32>
    %142 = vector.extract_strided_slice %54 {offsets = [1, 0], sizes = [1, 8], strides = [1, 1]} : vector<2x8xf32> to vector<1x8xf32>
    %cst_77 = arith.constant 0.000000e+00 : f32
    %143 = vector.broadcast %cst_77 : f32 to vector<8x32xf32>
    %144 = vector.extract_strided_slice %61 {offsets = [8, 0], sizes = [8, 16], strides = [1, 1]} : vector<16x16xf32> to vector<8x16xf32>
    %145 = vector.extract_strided_slice %67 {offsets = [8, 0], sizes = [8, 16], strides = [1, 1]} : vector<16x16xf32> to vector<8x16xf32>
    %146 = vector.extract_strided_slice %73 {offsets = [8, 0], sizes = [8, 16], strides = [1, 1]} : vector<16x16xf32> to vector<8x16xf32>
    %cst_78 = arith.constant dense<0.000000e+00> : vector<8x8xf32>
    %147 = tpu.matmul %144, %145, %cst_78 {dimension_numbers = #tpu.dot_dimension_numbers<[1], [1], [0], [0], [0, 0, 1, 0], [], []>} : vector<8x16xf32>, vector<8x16xf32>, vector<8x8xf32> -> vector<8x8xf32>
    %cst_79 = arith.constant 2.500000e-01 : f32
    %148 = vector.broadcast %cst_79 : f32 to vector<8x8xf32>
    %149 = arith.mulf %147, %148 : vector<8x8xf32>
    %150 = vector.broadcast %142 : vector<1x8xf32> to vector<8x8xf32>
    %151 = arith.addf %149, %150 : vector<8x8xf32>
    %cst_80 = arith.constant dense<0xFF800000> : vector<8xf32>
    %152 = vector.multi_reduction <maximumf>, %151, %cst_80 [1] : vector<8x8xf32> to vector<8xf32>
    %153 = vector.shape_cast %152 : vector<8xf32> to vector<8x1xf32>
    %154 = vector.broadcast %153 : vector<8x1xf32> to vector<8x8xf32>
    %155 = arith.subf %151, %154 : vector<8x8xf32>
    %156 = math.exp %155 : vector<8x8xf32>
    %cst_81 = arith.constant dense<0.000000e+00> : vector<8xf32>
    %157 = vector.multi_reduction <add>, %156, %cst_81 [1] : vector<8x8xf32> to vector<8xf32>
    %158 = vector.shape_cast %157 : vector<8xf32> to vector<8x1xf32>
    %159 = tpu.reciprocal %158 {approx = true} : vector<8x1xf32> -> vector<8x1xf32>
    %160 = vector.broadcast %159 : vector<8x1xf32> to vector<8x8xf32>
    %161 = arith.mulf %156, %160 : vector<8x8xf32>
    %cst_82 = arith.constant dense<0.000000e+00> : vector<8x16xf32>
    %162 = tpu.matmul %161, %146, %cst_82 {dimension_numbers = #tpu.dot_dimension_numbers<[1], [0], [0], [1], [0, 0, 1, 1], [], []>} : vector<8x8xf32>, vector<8x16xf32>, vector<8x16xf32> -> vector<8x16xf32>
    %163 = arith.truncf %162 : vector<8x16xf32> to vector<8x16xbf16>
    %c0_83 = arith.constant 0 : index
    %c0_84 = arith.constant 0 : index
    %c0_85 = arith.constant 0 : index
    %c0_86 = arith.constant 0 : index
    %164 = vector.load %arg8[%c0_83, %c0_84, %c0_85, %c0_86] : memref<2x2x16x32xbf16, #tpu.memory_space<vmem>>, vector<1x1x16x32xbf16>
    %165 = vector.shape_cast %164 : vector<1x1x16x32xbf16> to vector<16x32xbf16>
    %cst_87 = arith.constant dense<0.000000e+00> : vector<8x32xf32>
    %166 = tpu.matmul %163, %165, %cst_87 {dimension_numbers = #tpu.dot_dimension_numbers<[1], [0], [0], [1], [0, 0, 1, 1], [], []>} : vector<8x16xbf16>, vector<16x32xbf16>, vector<8x32xf32> -> vector<8x32xf32>
    %167 = arith.addf %143, %166 : vector<8x32xf32>
    %168 = vector.extract_strided_slice %79 {offsets = [8, 0], sizes = [8, 16], strides = [1, 1]} : vector<16x16xf32> to vector<8x16xf32>
    %169 = vector.extract_strided_slice %85 {offsets = [8, 0], sizes = [8, 16], strides = [1, 1]} : vector<16x16xf32> to vector<8x16xf32>
    %170 = vector.extract_strided_slice %91 {offsets = [8, 0], sizes = [8, 16], strides = [1, 1]} : vector<16x16xf32> to vector<8x16xf32>
    %cst_88 = arith.constant dense<0.000000e+00> : vector<8x8xf32>
    %171 = tpu.matmul %168, %169, %cst_88 {dimension_numbers = #tpu.dot_dimension_numbers<[1], [1], [0], [0], [0, 0, 1, 0], [], []>} : vector<8x16xf32>, vector<8x16xf32>, vector<8x8xf32> -> vector<8x8xf32>
    %cst_89 = arith.constant 2.500000e-01 : f32
    %172 = vector.broadcast %cst_89 : f32 to vector<8x8xf32>
    %173 = arith.mulf %171, %172 : vector<8x8xf32>
    %174 = vector.broadcast %142 : vector<1x8xf32> to vector<8x8xf32>
    %175 = arith.addf %173, %174 : vector<8x8xf32>
    %cst_90 = arith.constant dense<0xFF800000> : vector<8xf32>
    %176 = vector.multi_reduction <maximumf>, %175, %cst_90 [1] : vector<8x8xf32> to vector<8xf32>
    %177 = vector.shape_cast %176 : vector<8xf32> to vector<8x1xf32>
    %178 = vector.broadcast %177 : vector<8x1xf32> to vector<8x8xf32>
    %179 = arith.subf %175, %178 : vector<8x8xf32>
    %180 = math.exp %179 : vector<8x8xf32>
    %cst_91 = arith.constant dense<0.000000e+00> : vector<8xf32>
    %181 = vector.multi_reduction <add>, %180, %cst_91 [1] : vector<8x8xf32> to vector<8xf32>
    %182 = vector.shape_cast %181 : vector<8xf32> to vector<8x1xf32>
    %183 = tpu.reciprocal %182 {approx = true} : vector<8x1xf32> -> vector<8x1xf32>
    %184 = vector.broadcast %183 : vector<8x1xf32> to vector<8x8xf32>
    %185 = arith.mulf %180, %184 : vector<8x8xf32>
    %cst_92 = arith.constant dense<0.000000e+00> : vector<8x16xf32>
    %186 = tpu.matmul %185, %170, %cst_92 {dimension_numbers = #tpu.dot_dimension_numbers<[1], [0], [0], [1], [0, 0, 1, 1], [], []>} : vector<8x8xf32>, vector<8x16xf32>, vector<8x16xf32> -> vector<8x16xf32>
    %187 = arith.truncf %186 : vector<8x16xf32> to vector<8x16xbf16>
    %c0_93 = arith.constant 0 : index
    %c1_94 = arith.constant 1 : index
    %c0_95 = arith.constant 0 : index
    %c0_96 = arith.constant 0 : index
    %188 = vector.load %arg8[%c0_93, %c1_94, %c0_95, %c0_96] : memref<2x2x16x32xbf16, #tpu.memory_space<vmem>>, vector<1x1x16x32xbf16>
    %189 = vector.shape_cast %188 : vector<1x1x16x32xbf16> to vector<16x32xbf16>
    %cst_97 = arith.constant dense<0.000000e+00> : vector<8x32xf32>
    %190 = tpu.matmul %187, %189, %cst_97 {dimension_numbers = #tpu.dot_dimension_numbers<[1], [0], [0], [1], [0, 0, 1, 1], [], []>} : vector<8x16xbf16>, vector<16x32xbf16>, vector<8x32xf32> -> vector<8x32xf32>
    %191 = arith.addf %167, %190 : vector<8x32xf32>
    %192 = tpu.concatenate %141, %191 in 0 : vector<8x32xf32>, vector<8x32xf32> -> vector<16x32xf32>
    %193 = vector.extract_strided_slice %0 {offsets = [14, 0], sizes = [1, 32], strides = [1, 1]} : vector<29x64xf32> to vector<1x32xf32>
    %194 = vector.broadcast %193 : vector<1x32xf32> to vector<16x32xf32>
    %195 = arith.addf %192, %194 : vector<16x32xf32>
    %196 = arith.addf %48, %195 : vector<16x32xf32>
    %197 = vector.extract_strided_slice %0 {offsets = [16, 0], sizes = [1, 32], strides = [1, 1]} : vector<29x64xf32> to vector<1x32xf32>
    %198 = vector.extract_strided_slice %0 {offsets = [20, 0], sizes = [1, 32], strides = [1, 1]} : vector<29x64xf32> to vector<1x32xf32>
    %cst_98 = arith.constant dense<0.000000e+00> : vector<16xf32>
    %199 = vector.multi_reduction <add>, %196, %cst_98 [1] : vector<16x32xf32> to vector<16xf32>
    %200 = vector.shape_cast %199 : vector<16xf32> to vector<16x1xf32>
    %cst_99 = arith.constant 3.200000e+01 : f32
    %201 = vector.broadcast %cst_99 : f32 to vector<16x1xf32>
    %202 = arith.divf %200, %201 : vector<16x1xf32>
    %203 = vector.broadcast %202 : vector<16x1xf32> to vector<16x32xf32>
    %204 = arith.subf %196, %203 : vector<16x32xf32>
    %205 = arith.mulf %204, %204 : vector<16x32xf32>
    %cst_100 = arith.constant dense<0.000000e+00> : vector<16xf32>
    %206 = vector.multi_reduction <add>, %205, %cst_100 [1] : vector<16x32xf32> to vector<16xf32>
    %207 = vector.shape_cast %206 : vector<16xf32> to vector<16x1xf32>
    %cst_101 = arith.constant 3.200000e+01 : f32
    %208 = vector.broadcast %cst_101 : f32 to vector<16x1xf32>
    %209 = arith.divf %207, %208 : vector<16x1xf32>
    %210 = vector.broadcast %202 : vector<16x1xf32> to vector<16x32xf32>
    %211 = arith.subf %196, %210 : vector<16x32xf32>
    %cst_102 = arith.constant 9.99999996E-13 : f32
    %212 = vector.broadcast %cst_102 : f32 to vector<16x1xf32>
    %213 = arith.addf %209, %212 : vector<16x1xf32>
    %214 = math.rsqrt %213 : vector<16x1xf32>
    %215 = vector.broadcast %214 : vector<16x1xf32> to vector<16x32xf32>
    %216 = arith.mulf %211, %215 : vector<16x32xf32>
    %217 = vector.broadcast %197 : vector<1x32xf32> to vector<16x32xf32>
    %218 = arith.mulf %216, %217 : vector<16x32xf32>
    %219 = vector.broadcast %198 : vector<1x32xf32> to vector<16x32xf32>
    %220 = arith.addf %218, %219 : vector<16x32xf32>
    %221 = arith.truncf %220 : vector<16x32xf32> to vector<16x32xbf16>
    %c0_103 = arith.constant 0 : index
    %c0_104 = arith.constant 0 : index
    %c0_105 = arith.constant 0 : index
    %222 = vector.load %arg9[%c0_103, %c0_104, %c0_105] : memref<2x32x64xbf16, #tpu.memory_space<vmem>>, vector<1x32x64xbf16>
    %223 = vector.shape_cast %222 : vector<1x32x64xbf16> to vector<32x64xbf16>
    %cst_106 = arith.constant dense<0.000000e+00> : vector<16x64xf32>
    %224 = tpu.matmul %221, %223, %cst_106 {dimension_numbers = #tpu.dot_dimension_numbers<[1], [0], [0], [1], [0, 0, 1, 1], [], []>} : vector<16x32xbf16>, vector<32x64xbf16>, vector<16x64xf32> -> vector<16x64xf32>
    %225 = vector.extract_strided_slice %0 {offsets = [24, 0], sizes = [1, 64], strides = [1, 1]} : vector<29x64xf32> to vector<1x64xf32>
    %226 = vector.broadcast %225 : vector<1x64xf32> to vector<16x64xf32>
    %227 = arith.addf %224, %226 : vector<16x64xf32>
    %cst_107 = arith.constant 5.000000e-01 : f32
    %228 = vector.broadcast %cst_107 : f32 to vector<16x64xf32>
    %229 = arith.mulf %228, %227 : vector<16x64xf32>
    %cst_108 = arith.constant 4.471500e-02 : f32
    %230 = vector.broadcast %cst_108 : f32 to vector<16x64xf32>
    %231 = arith.mulf %230, %227 : vector<16x64xf32>
    %232 = arith.mulf %231, %227 : vector<16x64xf32>
    %233 = arith.mulf %232, %227 : vector<16x64xf32>
    %234 = arith.addf %227, %233 : vector<16x64xf32>
    %cst_109 = arith.constant 0.797884583 : f32
    %235 = vector.broadcast %cst_109 : f32 to vector<16x64xf32>
    %236 = arith.mulf %235, %234 : vector<16x64xf32>
    %237 = math.tanh %236 : vector<16x64xf32>
    %cst_110 = arith.constant 1.000000e+00 : f32
    %238 = vector.broadcast %cst_110 : f32 to vector<16x64xf32>
    %239 = arith.addf %238, %237 : vector<16x64xf32>
    %240 = arith.mulf %229, %239 : vector<16x64xf32>
    %241 = arith.truncf %240 : vector<16x64xf32> to vector<16x64xbf16>
    %c0_111 = arith.constant 0 : index
    %c0_112 = arith.constant 0 : index
    %c0_113 = arith.constant 0 : index
    %242 = vector.load %arg10[%c0_111, %c0_112, %c0_113] : memref<2x64x32xbf16, #tpu.memory_space<vmem>>, vector<1x64x32xbf16>
    %243 = vector.shape_cast %242 : vector<1x64x32xbf16> to vector<64x32xbf16>
    %cst_114 = arith.constant dense<0.000000e+00> : vector<16x32xf32>
    %244 = tpu.matmul %241, %243, %cst_114 {dimension_numbers = #tpu.dot_dimension_numbers<[1], [0], [0], [1], [0, 0, 1, 1], [], []>} : vector<16x64xbf16>, vector<64x32xbf16>, vector<16x32xf32> -> vector<16x32xf32>
    %245 = vector.extract_strided_slice %0 {offsets = [26, 0], sizes = [1, 32], strides = [1, 1]} : vector<29x64xf32> to vector<1x32xf32>
    %246 = vector.broadcast %245 : vector<1x32xf32> to vector<16x32xf32>
    %247 = arith.addf %244, %246 : vector<16x32xf32>
    %248 = arith.addf %220, %247 : vector<16x32xf32>
    %249 = vector.extract_strided_slice %0 {offsets = [17, 0], sizes = [1, 32], strides = [1, 1]} : vector<29x64xf32> to vector<1x32xf32>
    %250 = vector.extract_strided_slice %0 {offsets = [21, 0], sizes = [1, 32], strides = [1, 1]} : vector<29x64xf32> to vector<1x32xf32>
    %cst_115 = arith.constant dense<0.000000e+00> : vector<16xf32>
    %251 = vector.multi_reduction <add>, %248, %cst_115 [1] : vector<16x32xf32> to vector<16xf32>
    %252 = vector.shape_cast %251 : vector<16xf32> to vector<16x1xf32>
    %cst_116 = arith.constant 3.200000e+01 : f32
    %253 = vector.broadcast %cst_116 : f32 to vector<16x1xf32>
    %254 = arith.divf %252, %253 : vector<16x1xf32>
    %255 = vector.broadcast %254 : vector<16x1xf32> to vector<16x32xf32>
    %256 = arith.subf %248, %255 : vector<16x32xf32>
    %257 = arith.mulf %256, %256 : vector<16x32xf32>
    %cst_117 = arith.constant dense<0.000000e+00> : vector<16xf32>
    %258 = vector.multi_reduction <add>, %257, %cst_117 [1] : vector<16x32xf32> to vector<16xf32>
    %259 = vector.shape_cast %258 : vector<16xf32> to vector<16x1xf32>
    %cst_118 = arith.constant 3.200000e+01 : f32
    %260 = vector.broadcast %cst_118 : f32 to vector<16x1xf32>
    %261 = arith.divf %259, %260 : vector<16x1xf32>
    %262 = vector.broadcast %254 : vector<16x1xf32> to vector<16x32xf32>
    %263 = arith.subf %248, %262 : vector<16x32xf32>
    %cst_119 = arith.constant 9.99999996E-13 : f32
    %264 = vector.broadcast %cst_119 : f32 to vector<16x1xf32>
    %265 = arith.addf %261, %264 : vector<16x1xf32>
    %266 = math.rsqrt %265 : vector<16x1xf32>
    %267 = vector.broadcast %266 : vector<16x1xf32> to vector<16x32xf32>
    %268 = arith.mulf %263, %267 : vector<16x32xf32>
    %269 = vector.broadcast %249 : vector<1x32xf32> to vector<16x32xf32>
    %270 = arith.mulf %268, %269 : vector<16x32xf32>
    %271 = vector.broadcast %250 : vector<1x32xf32> to vector<16x32xf32>
    %272 = arith.addf %270, %271 : vector<16x32xf32>
    %273 = arith.truncf %272 : vector<16x32xf32> to vector<16x32xbf16>
    %c1_120 = arith.constant 1 : index
    %c0_121 = arith.constant 0 : index
    %c0_122 = arith.constant 0 : index
    %c0_123 = arith.constant 0 : index
    %c0_124 = arith.constant 0 : index
    %274 = vector.load %arg7[%c1_120, %c0_121, %c0_122, %c0_123, %c0_124] : memref<2x3x2x32x16xbf16, #tpu.memory_space<vmem>>, vector<1x1x1x32x16xbf16>
    %275 = vector.shape_cast %274 : vector<1x1x1x32x16xbf16> to vector<32x16xbf16>
    %cst_125 = arith.constant dense<0.000000e+00> : vector<16x16xf32>
    %276 = tpu.matmul %273, %275, %cst_125 {dimension_numbers = #tpu.dot_dimension_numbers<[1], [0], [0], [1], [0, 0, 1, 1], [], []>} : vector<16x32xbf16>, vector<32x16xbf16>, vector<16x16xf32> -> vector<16x16xf32>
    %277 = vector.extract_strided_slice %0 {offsets = [8, 0], sizes = [1, 16], strides = [1, 1]} : vector<29x64xf32> to vector<1x16xf32>
    %278 = vector.broadcast %277 : vector<1x16xf32> to vector<16x16xf32>
    %279 = arith.addf %276, %278 : vector<16x16xf32>
    %c1_126 = arith.constant 1 : index
    %c1_127 = arith.constant 1 : index
    %c0_128 = arith.constant 0 : index
    %c0_129 = arith.constant 0 : index
    %c0_130 = arith.constant 0 : index
    %280 = vector.load %arg7[%c1_126, %c1_127, %c0_128, %c0_129, %c0_130] : memref<2x3x2x32x16xbf16, #tpu.memory_space<vmem>>, vector<1x1x1x32x16xbf16>
    %281 = vector.shape_cast %280 : vector<1x1x1x32x16xbf16> to vector<32x16xbf16>
    %cst_131 = arith.constant dense<0.000000e+00> : vector<16x16xf32>
    %282 = tpu.matmul %273, %281, %cst_131 {dimension_numbers = #tpu.dot_dimension_numbers<[1], [0], [0], [1], [0, 0, 1, 1], [], []>} : vector<16x32xbf16>, vector<32x16xbf16>, vector<16x16xf32> -> vector<16x16xf32>
    %283 = vector.extract_strided_slice %0 {offsets = [10, 0], sizes = [1, 16], strides = [1, 1]} : vector<29x64xf32> to vector<1x16xf32>
    %284 = vector.broadcast %283 : vector<1x16xf32> to vector<16x16xf32>
    %285 = arith.addf %282, %284 : vector<16x16xf32>
    %c1_132 = arith.constant 1 : index
    %c2_133 = arith.constant 2 : index
    %c0_134 = arith.constant 0 : index
    %c0_135 = arith.constant 0 : index
    %c0_136 = arith.constant 0 : index
    %286 = vector.load %arg7[%c1_132, %c2_133, %c0_134, %c0_135, %c0_136] : memref<2x3x2x32x16xbf16, #tpu.memory_space<vmem>>, vector<1x1x1x32x16xbf16>
    %287 = vector.shape_cast %286 : vector<1x1x1x32x16xbf16> to vector<32x16xbf16>
    %cst_137 = arith.constant dense<0.000000e+00> : vector<16x16xf32>
    %288 = tpu.matmul %273, %287, %cst_137 {dimension_numbers = #tpu.dot_dimension_numbers<[1], [0], [0], [1], [0, 0, 1, 1], [], []>} : vector<16x32xbf16>, vector<32x16xbf16>, vector<16x16xf32> -> vector<16x16xf32>
    %289 = vector.extract_strided_slice %0 {offsets = [12, 0], sizes = [1, 16], strides = [1, 1]} : vector<29x64xf32> to vector<1x16xf32>
    %290 = vector.broadcast %289 : vector<1x16xf32> to vector<16x16xf32>
    %291 = arith.addf %288, %290 : vector<16x16xf32>
    %c1_138 = arith.constant 1 : index
    %c0_139 = arith.constant 0 : index
    %c1_140 = arith.constant 1 : index
    %c0_141 = arith.constant 0 : index
    %c0_142 = arith.constant 0 : index
    %292 = vector.load %arg7[%c1_138, %c0_139, %c1_140, %c0_141, %c0_142] : memref<2x3x2x32x16xbf16, #tpu.memory_space<vmem>>, vector<1x1x1x32x16xbf16>
    %293 = vector.shape_cast %292 : vector<1x1x1x32x16xbf16> to vector<32x16xbf16>
    %cst_143 = arith.constant dense<0.000000e+00> : vector<16x16xf32>
    %294 = tpu.matmul %273, %293, %cst_143 {dimension_numbers = #tpu.dot_dimension_numbers<[1], [0], [0], [1], [0, 0, 1, 1], [], []>} : vector<16x32xbf16>, vector<32x16xbf16>, vector<16x16xf32> -> vector<16x16xf32>
    %295 = vector.extract_strided_slice %0 {offsets = [9, 0], sizes = [1, 16], strides = [1, 1]} : vector<29x64xf32> to vector<1x16xf32>
    %296 = vector.broadcast %295 : vector<1x16xf32> to vector<16x16xf32>
    %297 = arith.addf %294, %296 : vector<16x16xf32>
    %c1_144 = arith.constant 1 : index
    %c1_145 = arith.constant 1 : index
    %c1_146 = arith.constant 1 : index
    %c0_147 = arith.constant 0 : index
    %c0_148 = arith.constant 0 : index
    %298 = vector.load %arg7[%c1_144, %c1_145, %c1_146, %c0_147, %c0_148] : memref<2x3x2x32x16xbf16, #tpu.memory_space<vmem>>, vector<1x1x1x32x16xbf16>
    %299 = vector.shape_cast %298 : vector<1x1x1x32x16xbf16> to vector<32x16xbf16>
    %cst_149 = arith.constant dense<0.000000e+00> : vector<16x16xf32>
    %300 = tpu.matmul %273, %299, %cst_149 {dimension_numbers = #tpu.dot_dimension_numbers<[1], [0], [0], [1], [0, 0, 1, 1], [], []>} : vector<16x32xbf16>, vector<32x16xbf16>, vector<16x16xf32> -> vector<16x16xf32>
    %301 = vector.extract_strided_slice %0 {offsets = [11, 0], sizes = [1, 16], strides = [1, 1]} : vector<29x64xf32> to vector<1x16xf32>
    %302 = vector.broadcast %301 : vector<1x16xf32> to vector<16x16xf32>
    %303 = arith.addf %300, %302 : vector<16x16xf32>
    %c1_150 = arith.constant 1 : index
    %c2_151 = arith.constant 2 : index
    %c1_152 = arith.constant 1 : index
    %c0_153 = arith.constant 0 : index
    %c0_154 = arith.constant 0 : index
    %304 = vector.load %arg7[%c1_150, %c2_151, %c1_152, %c0_153, %c0_154] : memref<2x3x2x32x16xbf16, #tpu.memory_space<vmem>>, vector<1x1x1x32x16xbf16>
    %305 = vector.shape_cast %304 : vector<1x1x1x32x16xbf16> to vector<32x16xbf16>
    %cst_155 = arith.constant dense<0.000000e+00> : vector<16x16xf32>
    %306 = tpu.matmul %273, %305, %cst_155 {dimension_numbers = #tpu.dot_dimension_numbers<[1], [0], [0], [1], [0, 0, 1, 1], [], []>} : vector<16x32xbf16>, vector<32x16xbf16>, vector<16x16xf32> -> vector<16x16xf32>
    %307 = vector.extract_strided_slice %0 {offsets = [13, 0], sizes = [1, 16], strides = [1, 1]} : vector<29x64xf32> to vector<1x16xf32>
    %308 = vector.broadcast %307 : vector<1x16xf32> to vector<16x16xf32>
    %309 = arith.addf %306, %308 : vector<16x16xf32>
    %310 = vector.extract_strided_slice %54 {offsets = [0, 0], sizes = [1, 8], strides = [1, 1]} : vector<2x8xf32> to vector<1x8xf32>
    %cst_156 = arith.constant 0.000000e+00 : f32
    %311 = vector.broadcast %cst_156 : f32 to vector<8x32xf32>
    %312 = vector.extract_strided_slice %279 {offsets = [0, 0], sizes = [8, 16], strides = [1, 1]} : vector<16x16xf32> to vector<8x16xf32>
    %313 = vector.extract_strided_slice %285 {offsets = [0, 0], sizes = [8, 16], strides = [1, 1]} : vector<16x16xf32> to vector<8x16xf32>
    %314 = vector.extract_strided_slice %291 {offsets = [0, 0], sizes = [8, 16], strides = [1, 1]} : vector<16x16xf32> to vector<8x16xf32>
    %cst_157 = arith.constant dense<0.000000e+00> : vector<8x8xf32>
    %315 = tpu.matmul %312, %313, %cst_157 {dimension_numbers = #tpu.dot_dimension_numbers<[1], [1], [0], [0], [0, 0, 1, 0], [], []>} : vector<8x16xf32>, vector<8x16xf32>, vector<8x8xf32> -> vector<8x8xf32>
    %cst_158 = arith.constant 2.500000e-01 : f32
    %316 = vector.broadcast %cst_158 : f32 to vector<8x8xf32>
    %317 = arith.mulf %315, %316 : vector<8x8xf32>
    %318 = vector.broadcast %310 : vector<1x8xf32> to vector<8x8xf32>
    %319 = arith.addf %317, %318 : vector<8x8xf32>
    %cst_159 = arith.constant dense<0xFF800000> : vector<8xf32>
    %320 = vector.multi_reduction <maximumf>, %319, %cst_159 [1] : vector<8x8xf32> to vector<8xf32>
    %321 = vector.shape_cast %320 : vector<8xf32> to vector<8x1xf32>
    %322 = vector.broadcast %321 : vector<8x1xf32> to vector<8x8xf32>
    %323 = arith.subf %319, %322 : vector<8x8xf32>
    %324 = math.exp %323 : vector<8x8xf32>
    %cst_160 = arith.constant dense<0.000000e+00> : vector<8xf32>
    %325 = vector.multi_reduction <add>, %324, %cst_160 [1] : vector<8x8xf32> to vector<8xf32>
    %326 = vector.shape_cast %325 : vector<8xf32> to vector<8x1xf32>
    %327 = tpu.reciprocal %326 {approx = true} : vector<8x1xf32> -> vector<8x1xf32>
    %328 = vector.broadcast %327 : vector<8x1xf32> to vector<8x8xf32>
    %329 = arith.mulf %324, %328 : vector<8x8xf32>
    %cst_161 = arith.constant dense<0.000000e+00> : vector<8x16xf32>
    %330 = tpu.matmul %329, %314, %cst_161 {dimension_numbers = #tpu.dot_dimension_numbers<[1], [0], [0], [1], [0, 0, 1, 1], [], []>} : vector<8x8xf32>, vector<8x16xf32>, vector<8x16xf32> -> vector<8x16xf32>
    %331 = arith.truncf %330 : vector<8x16xf32> to vector<8x16xbf16>
    %c1_162 = arith.constant 1 : index
    %c0_163 = arith.constant 0 : index
    %c0_164 = arith.constant 0 : index
    %c0_165 = arith.constant 0 : index
    %332 = vector.load %arg8[%c1_162, %c0_163, %c0_164, %c0_165] : memref<2x2x16x32xbf16, #tpu.memory_space<vmem>>, vector<1x1x16x32xbf16>
    %333 = vector.shape_cast %332 : vector<1x1x16x32xbf16> to vector<16x32xbf16>
    %cst_166 = arith.constant dense<0.000000e+00> : vector<8x32xf32>
    %334 = tpu.matmul %331, %333, %cst_166 {dimension_numbers = #tpu.dot_dimension_numbers<[1], [0], [0], [1], [0, 0, 1, 1], [], []>} : vector<8x16xbf16>, vector<16x32xbf16>, vector<8x32xf32> -> vector<8x32xf32>
    %335 = arith.addf %311, %334 : vector<8x32xf32>
    %336 = vector.extract_strided_slice %297 {offsets = [0, 0], sizes = [8, 16], strides = [1, 1]} : vector<16x16xf32> to vector<8x16xf32>
    %337 = vector.extract_strided_slice %303 {offsets = [0, 0], sizes = [8, 16], strides = [1, 1]} : vector<16x16xf32> to vector<8x16xf32>
    %338 = vector.extract_strided_slice %309 {offsets = [0, 0], sizes = [8, 16], strides = [1, 1]} : vector<16x16xf32> to vector<8x16xf32>
    %cst_167 = arith.constant dense<0.000000e+00> : vector<8x8xf32>
    %339 = tpu.matmul %336, %337, %cst_167 {dimension_numbers = #tpu.dot_dimension_numbers<[1], [1], [0], [0], [0, 0, 1, 0], [], []>} : vector<8x16xf32>, vector<8x16xf32>, vector<8x8xf32> -> vector<8x8xf32>
    %cst_168 = arith.constant 2.500000e-01 : f32
    %340 = vector.broadcast %cst_168 : f32 to vector<8x8xf32>
    %341 = arith.mulf %339, %340 : vector<8x8xf32>
    %342 = vector.broadcast %310 : vector<1x8xf32> to vector<8x8xf32>
    %343 = arith.addf %341, %342 : vector<8x8xf32>
    %cst_169 = arith.constant dense<0xFF800000> : vector<8xf32>
    %344 = vector.multi_reduction <maximumf>, %343, %cst_169 [1] : vector<8x8xf32> to vector<8xf32>
    %345 = vector.shape_cast %344 : vector<8xf32> to vector<8x1xf32>
    %346 = vector.broadcast %345 : vector<8x1xf32> to vector<8x8xf32>
    %347 = arith.subf %343, %346 : vector<8x8xf32>
    %348 = math.exp %347 : vector<8x8xf32>
    %cst_170 = arith.constant dense<0.000000e+00> : vector<8xf32>
    %349 = vector.multi_reduction <add>, %348, %cst_170 [1] : vector<8x8xf32> to vector<8xf32>
    %350 = vector.shape_cast %349 : vector<8xf32> to vector<8x1xf32>
    %351 = tpu.reciprocal %350 {approx = true} : vector<8x1xf32> -> vector<8x1xf32>
    %352 = vector.broadcast %351 : vector<8x1xf32> to vector<8x8xf32>
    %353 = arith.mulf %348, %352 : vector<8x8xf32>
    %cst_171 = arith.constant dense<0.000000e+00> : vector<8x16xf32>
    %354 = tpu.matmul %353, %338, %cst_171 {dimension_numbers = #tpu.dot_dimension_numbers<[1], [0], [0], [1], [0, 0, 1, 1], [], []>} : vector<8x8xf32>, vector<8x16xf32>, vector<8x16xf32> -> vector<8x16xf32>
    %355 = arith.truncf %354 : vector<8x16xf32> to vector<8x16xbf16>
    %c1_172 = arith.constant 1 : index
    %c1_173 = arith.constant 1 : index
    %c0_174 = arith.constant 0 : index
    %c0_175 = arith.constant 0 : index
    %356 = vector.load %arg8[%c1_172, %c1_173, %c0_174, %c0_175] : memref<2x2x16x32xbf16, #tpu.memory_space<vmem>>, vector<1x1x16x32xbf16>
    %357 = vector.shape_cast %356 : vector<1x1x16x32xbf16> to vector<16x32xbf16>
    %cst_176 = arith.constant dense<0.000000e+00> : vector<8x32xf32>
    %358 = tpu.matmul %355, %357, %cst_176 {dimension_numbers = #tpu.dot_dimension_numbers<[1], [0], [0], [1], [0, 0, 1, 1], [], []>} : vector<8x16xbf16>, vector<16x32xbf16>, vector<8x32xf32> -> vector<8x32xf32>
    %359 = arith.addf %335, %358 : vector<8x32xf32>
    %360 = vector.extract_strided_slice %54 {offsets = [1, 0], sizes = [1, 8], strides = [1, 1]} : vector<2x8xf32> to vector<1x8xf32>
    %cst_177 = arith.constant 0.000000e+00 : f32
    %361 = vector.broadcast %cst_177 : f32 to vector<8x32xf32>
    %362 = vector.extract_strided_slice %279 {offsets = [8, 0], sizes = [8, 16], strides = [1, 1]} : vector<16x16xf32> to vector<8x16xf32>
    %363 = vector.extract_strided_slice %285 {offsets = [8, 0], sizes = [8, 16], strides = [1, 1]} : vector<16x16xf32> to vector<8x16xf32>
    %364 = vector.extract_strided_slice %291 {offsets = [8, 0], sizes = [8, 16], strides = [1, 1]} : vector<16x16xf32> to vector<8x16xf32>
    %cst_178 = arith.constant dense<0.000000e+00> : vector<8x8xf32>
    %365 = tpu.matmul %362, %363, %cst_178 {dimension_numbers = #tpu.dot_dimension_numbers<[1], [1], [0], [0], [0, 0, 1, 0], [], []>} : vector<8x16xf32>, vector<8x16xf32>, vector<8x8xf32> -> vector<8x8xf32>
    %cst_179 = arith.constant 2.500000e-01 : f32
    %366 = vector.broadcast %cst_179 : f32 to vector<8x8xf32>
    %367 = arith.mulf %365, %366 : vector<8x8xf32>
    %368 = vector.broadcast %360 : vector<1x8xf32> to vector<8x8xf32>
    %369 = arith.addf %367, %368 : vector<8x8xf32>
    %cst_180 = arith.constant dense<0xFF800000> : vector<8xf32>
    %370 = vector.multi_reduction <maximumf>, %369, %cst_180 [1] : vector<8x8xf32> to vector<8xf32>
    %371 = vector.shape_cast %370 : vector<8xf32> to vector<8x1xf32>
    %372 = vector.broadcast %371 : vector<8x1xf32> to vector<8x8xf32>
    %373 = arith.subf %369, %372 : vector<8x8xf32>
    %374 = math.exp %373 : vector<8x8xf32>
    %cst_181 = arith.constant dense<0.000000e+00> : vector<8xf32>
    %375 = vector.multi_reduction <add>, %374, %cst_181 [1] : vector<8x8xf32> to vector<8xf32>
    %376 = vector.shape_cast %375 : vector<8xf32> to vector<8x1xf32>
    %377 = tpu.reciprocal %376 {approx = true} : vector<8x1xf32> -> vector<8x1xf32>
    %378 = vector.broadcast %377 : vector<8x1xf32> to vector<8x8xf32>
    %379 = arith.mulf %374, %378 : vector<8x8xf32>
    %cst_182 = arith.constant dense<0.000000e+00> : vector<8x16xf32>
    %380 = tpu.matmul %379, %364, %cst_182 {dimension_numbers = #tpu.dot_dimension_numbers<[1], [0], [0], [1], [0, 0, 1, 1], [], []>} : vector<8x8xf32>, vector<8x16xf32>, vector<8x16xf32> -> vector<8x16xf32>
    %381 = arith.truncf %380 : vector<8x16xf32> to vector<8x16xbf16>
    %c1_183 = arith.constant 1 : index
    %c0_184 = arith.constant 0 : index
    %c0_185 = arith.constant 0 : index
    %c0_186 = arith.constant 0 : index
    %382 = vector.load %arg8[%c1_183, %c0_184, %c0_185, %c0_186] : memref<2x2x16x32xbf16, #tpu.memory_space<vmem>>, vector<1x1x16x32xbf16>
    %383 = vector.shape_cast %382 : vector<1x1x16x32xbf16> to vector<16x32xbf16>
    %cst_187 = arith.constant dense<0.000000e+00> : vector<8x32xf32>
    %384 = tpu.matmul %381, %383, %cst_187 {dimension_numbers = #tpu.dot_dimension_numbers<[1], [0], [0], [1], [0, 0, 1, 1], [], []>} : vector<8x16xbf16>, vector<16x32xbf16>, vector<8x32xf32> -> vector<8x32xf32>
    %385 = arith.addf %361, %384 : vector<8x32xf32>
    %386 = vector.extract_strided_slice %297 {offsets = [8, 0], sizes = [8, 16], strides = [1, 1]} : vector<16x16xf32> to vector<8x16xf32>
    %387 = vector.extract_strided_slice %303 {offsets = [8, 0], sizes = [8, 16], strides = [1, 1]} : vector<16x16xf32> to vector<8x16xf32>
    %388 = vector.extract_strided_slice %309 {offsets = [8, 0], sizes = [8, 16], strides = [1, 1]} : vector<16x16xf32> to vector<8x16xf32>
    %cst_188 = arith.constant dense<0.000000e+00> : vector<8x8xf32>
    %389 = tpu.matmul %386, %387, %cst_188 {dimension_numbers = #tpu.dot_dimension_numbers<[1], [1], [0], [0], [0, 0, 1, 0], [], []>} : vector<8x16xf32>, vector<8x16xf32>, vector<8x8xf32> -> vector<8x8xf32>
    %cst_189 = arith.constant 2.500000e-01 : f32
    %390 = vector.broadcast %cst_189 : f32 to vector<8x8xf32>
    %391 = arith.mulf %389, %390 : vector<8x8xf32>
    %392 = vector.broadcast %360 : vector<1x8xf32> to vector<8x8xf32>
    %393 = arith.addf %391, %392 : vector<8x8xf32>
    %cst_190 = arith.constant dense<0xFF800000> : vector<8xf32>
    %394 = vector.multi_reduction <maximumf>, %393, %cst_190 [1] : vector<8x8xf32> to vector<8xf32>
    %395 = vector.shape_cast %394 : vector<8xf32> to vector<8x1xf32>
    %396 = vector.broadcast %395 : vector<8x1xf32> to vector<8x8xf32>
    %397 = arith.subf %393, %396 : vector<8x8xf32>
    %398 = math.exp %397 : vector<8x8xf32>
    %cst_191 = arith.constant dense<0.000000e+00> : vector<8xf32>
    %399 = vector.multi_reduction <add>, %398, %cst_191 [1] : vector<8x8xf32> to vector<8xf32>
    %400 = vector.shape_cast %399 : vector<8xf32> to vector<8x1xf32>
    %401 = tpu.reciprocal %400 {approx = true} : vector<8x1xf32> -> vector<8x1xf32>
    %402 = vector.broadcast %401 : vector<8x1xf32> to vector<8x8xf32>
    %403 = arith.mulf %398, %402 : vector<8x8xf32>
    %cst_192 = arith.constant dense<0.000000e+00> : vector<8x16xf32>
    %404 = tpu.matmul %403, %388, %cst_192 {dimension_numbers = #tpu.dot_dimension_numbers<[1], [0], [0], [1], [0, 0, 1, 1], [], []>} : vector<8x8xf32>, vector<8x16xf32>, vector<8x16xf32> -> vector<8x16xf32>
    %405 = arith.truncf %404 : vector<8x16xf32> to vector<8x16xbf16>
    %c1_193 = arith.constant 1 : index
    %c1_194 = arith.constant 1 : index
    %c0_195 = arith.constant 0 : index
    %c0_196 = arith.constant 0 : index
    %406 = vector.load %arg8[%c1_193, %c1_194, %c0_195, %c0_196] : memref<2x2x16x32xbf16, #tpu.memory_space<vmem>>, vector<1x1x16x32xbf16>
    %407 = vector.shape_cast %406 : vector<1x1x16x32xbf16> to vector<16x32xbf16>
    %cst_197 = arith.constant dense<0.000000e+00> : vector<8x32xf32>
    %408 = tpu.matmul %405, %407, %cst_197 {dimension_numbers = #tpu.dot_dimension_numbers<[1], [0], [0], [1], [0, 0, 1, 1], [], []>} : vector<8x16xbf16>, vector<16x32xbf16>, vector<8x32xf32> -> vector<8x32xf32>
    %409 = arith.addf %385, %408 : vector<8x32xf32>
    %410 = tpu.concatenate %359, %409 in 0 : vector<8x32xf32>, vector<8x32xf32> -> vector<16x32xf32>
    %411 = vector.extract_strided_slice %0 {offsets = [15, 0], sizes = [1, 32], strides = [1, 1]} : vector<29x64xf32> to vector<1x32xf32>
    %412 = vector.broadcast %411 : vector<1x32xf32> to vector<16x32xf32>
    %413 = arith.addf %410, %412 : vector<16x32xf32>
    %414 = arith.addf %272, %413 : vector<16x32xf32>
    %415 = vector.extract_strided_slice %0 {offsets = [18, 0], sizes = [1, 32], strides = [1, 1]} : vector<29x64xf32> to vector<1x32xf32>
    %416 = vector.extract_strided_slice %0 {offsets = [22, 0], sizes = [1, 32], strides = [1, 1]} : vector<29x64xf32> to vector<1x32xf32>
    %cst_198 = arith.constant dense<0.000000e+00> : vector<16xf32>
    %417 = vector.multi_reduction <add>, %414, %cst_198 [1] : vector<16x32xf32> to vector<16xf32>
    %418 = vector.shape_cast %417 : vector<16xf32> to vector<16x1xf32>
    %cst_199 = arith.constant 3.200000e+01 : f32
    %419 = vector.broadcast %cst_199 : f32 to vector<16x1xf32>
    %420 = arith.divf %418, %419 : vector<16x1xf32>
    %421 = vector.broadcast %420 : vector<16x1xf32> to vector<16x32xf32>
    %422 = arith.subf %414, %421 : vector<16x32xf32>
    %423 = arith.mulf %422, %422 : vector<16x32xf32>
    %cst_200 = arith.constant dense<0.000000e+00> : vector<16xf32>
    %424 = vector.multi_reduction <add>, %423, %cst_200 [1] : vector<16x32xf32> to vector<16xf32>
    %425 = vector.shape_cast %424 : vector<16xf32> to vector<16x1xf32>
    %cst_201 = arith.constant 3.200000e+01 : f32
    %426 = vector.broadcast %cst_201 : f32 to vector<16x1xf32>
    %427 = arith.divf %425, %426 : vector<16x1xf32>
    %428 = vector.broadcast %420 : vector<16x1xf32> to vector<16x32xf32>
    %429 = arith.subf %414, %428 : vector<16x32xf32>
    %cst_202 = arith.constant 9.99999996E-13 : f32
    %430 = vector.broadcast %cst_202 : f32 to vector<16x1xf32>
    %431 = arith.addf %427, %430 : vector<16x1xf32>
    %432 = math.rsqrt %431 : vector<16x1xf32>
    %433 = vector.broadcast %432 : vector<16x1xf32> to vector<16x32xf32>
    %434 = arith.mulf %429, %433 : vector<16x32xf32>
    %435 = vector.broadcast %415 : vector<1x32xf32> to vector<16x32xf32>
    %436 = arith.mulf %434, %435 : vector<16x32xf32>
    %437 = vector.broadcast %416 : vector<1x32xf32> to vector<16x32xf32>
    %438 = arith.addf %436, %437 : vector<16x32xf32>
    %439 = arith.truncf %438 : vector<16x32xf32> to vector<16x32xbf16>
    %c1_203 = arith.constant 1 : index
    %c0_204 = arith.constant 0 : index
    %c0_205 = arith.constant 0 : index
    %440 = vector.load %arg9[%c1_203, %c0_204, %c0_205] : memref<2x32x64xbf16, #tpu.memory_space<vmem>>, vector<1x32x64xbf16>
    %441 = vector.shape_cast %440 : vector<1x32x64xbf16> to vector<32x64xbf16>
    %cst_206 = arith.constant dense<0.000000e+00> : vector<16x64xf32>
    %442 = tpu.matmul %439, %441, %cst_206 {dimension_numbers = #tpu.dot_dimension_numbers<[1], [0], [0], [1], [0, 0, 1, 1], [], []>} : vector<16x32xbf16>, vector<32x64xbf16>, vector<16x64xf32> -> vector<16x64xf32>
    %443 = vector.extract_strided_slice %0 {offsets = [25, 0], sizes = [1, 64], strides = [1, 1]} : vector<29x64xf32> to vector<1x64xf32>
    %444 = vector.broadcast %443 : vector<1x64xf32> to vector<16x64xf32>
    %445 = arith.addf %442, %444 : vector<16x64xf32>
    %cst_207 = arith.constant 5.000000e-01 : f32
    %446 = vector.broadcast %cst_207 : f32 to vector<16x64xf32>
    %447 = arith.mulf %446, %445 : vector<16x64xf32>
    %cst_208 = arith.constant 4.471500e-02 : f32
    %448 = vector.broadcast %cst_208 : f32 to vector<16x64xf32>
    %449 = arith.mulf %448, %445 : vector<16x64xf32>
    %450 = arith.mulf %449, %445 : vector<16x64xf32>
    %451 = arith.mulf %450, %445 : vector<16x64xf32>
    %452 = arith.addf %445, %451 : vector<16x64xf32>
    %cst_209 = arith.constant 0.797884583 : f32
    %453 = vector.broadcast %cst_209 : f32 to vector<16x64xf32>
    %454 = arith.mulf %453, %452 : vector<16x64xf32>
    %455 = math.tanh %454 : vector<16x64xf32>
    %cst_210 = arith.constant 1.000000e+00 : f32
    %456 = vector.broadcast %cst_210 : f32 to vector<16x64xf32>
    %457 = arith.addf %456, %455 : vector<16x64xf32>
    %458 = arith.mulf %447, %457 : vector<16x64xf32>
    %459 = arith.truncf %458 : vector<16x64xf32> to vector<16x64xbf16>
    %c1_211 = arith.constant 1 : index
    %c0_212 = arith.constant 0 : index
    %c0_213 = arith.constant 0 : index
    %460 = vector.load %arg10[%c1_211, %c0_212, %c0_213] : memref<2x64x32xbf16, #tpu.memory_space<vmem>>, vector<1x64x32xbf16>
    %461 = vector.shape_cast %460 : vector<1x64x32xbf16> to vector<64x32xbf16>
    %cst_214 = arith.constant dense<0.000000e+00> : vector<16x32xf32>
    %462 = tpu.matmul %459, %461, %cst_214 {dimension_numbers = #tpu.dot_dimension_numbers<[1], [0], [0], [1], [0, 0, 1, 1], [], []>} : vector<16x64xbf16>, vector<64x32xbf16>, vector<16x32xf32> -> vector<16x32xf32>
    %463 = vector.extract_strided_slice %0 {offsets = [27, 0], sizes = [1, 32], strides = [1, 1]} : vector<29x64xf32> to vector<1x32xf32>
    %464 = vector.broadcast %463 : vector<1x32xf32> to vector<16x32xf32>
    %465 = arith.addf %462, %464 : vector<16x32xf32>
    %466 = arith.addf %438, %465 : vector<16x32xf32>
    %467 = vector.extract_strided_slice %0 {offsets = [19, 0], sizes = [1, 32], strides = [1, 1]} : vector<29x64xf32> to vector<1x32xf32>
    %468 = vector.extract_strided_slice %0 {offsets = [23, 0], sizes = [1, 32], strides = [1, 1]} : vector<29x64xf32> to vector<1x32xf32>
    %cst_215 = arith.constant dense<0.000000e+00> : vector<16xf32>
    %469 = vector.multi_reduction <add>, %466, %cst_215 [1] : vector<16x32xf32> to vector<16xf32>
    %470 = vector.shape_cast %469 : vector<16xf32> to vector<16x1xf32>
    %cst_216 = arith.constant 3.200000e+01 : f32
    %471 = vector.broadcast %cst_216 : f32 to vector<16x1xf32>
    %472 = arith.divf %470, %471 : vector<16x1xf32>
    %473 = vector.broadcast %472 : vector<16x1xf32> to vector<16x32xf32>
    %474 = arith.subf %466, %473 : vector<16x32xf32>
    %475 = arith.mulf %474, %474 : vector<16x32xf32>
    %cst_217 = arith.constant dense<0.000000e+00> : vector<16xf32>
    %476 = vector.multi_reduction <add>, %475, %cst_217 [1] : vector<16x32xf32> to vector<16xf32>
    %477 = vector.shape_cast %476 : vector<16xf32> to vector<16x1xf32>
    %cst_218 = arith.constant 3.200000e+01 : f32
    %478 = vector.broadcast %cst_218 : f32 to vector<16x1xf32>
    %479 = arith.divf %477, %478 : vector<16x1xf32>
    %480 = vector.broadcast %472 : vector<16x1xf32> to vector<16x32xf32>
    %481 = arith.subf %466, %480 : vector<16x32xf32>
    %cst_219 = arith.constant 9.99999996E-13 : f32
    %482 = vector.broadcast %cst_219 : f32 to vector<16x1xf32>
    %483 = arith.addf %479, %482 : vector<16x1xf32>
    %484 = math.rsqrt %483 : vector<16x1xf32>
    %485 = vector.broadcast %484 : vector<16x1xf32> to vector<16x32xf32>
    %486 = arith.mulf %481, %485 : vector<16x32xf32>
    %487 = vector.broadcast %467 : vector<1x32xf32> to vector<16x32xf32>
    %488 = arith.mulf %486, %487 : vector<16x32xf32>
    %489 = vector.broadcast %468 : vector<1x32xf32> to vector<16x32xf32>
    %490 = arith.addf %488, %489 : vector<16x32xf32>
    %491 = vector.extract_strided_slice %490 {offsets = [0, 0], sizes = [1, 32], strides = [1, 1]} : vector<16x32xf32> to vector<1x32xf32>
    %492 = vector.extract_strided_slice %490 {offsets = [8, 0], sizes = [1, 32], strides = [1, 1]} : vector<16x32xf32> to vector<1x32xf32>
    %493 = tpu.concatenate %491, %492 in 0 : vector<1x32xf32>, vector<1x32xf32> -> vector<2x32xf32>
    %494 = arith.truncf %493 : vector<2x32xf32> to vector<2x32xbf16>
    %c0_220 = arith.constant 0 : index
    %c0_221 = arith.constant 0 : index
    %495 = vector.load %arg11[%c0_220, %c0_221] : memref<32x10xbf16, #tpu.memory_space<vmem>>, vector<32x10xbf16>
    %cst_222 = arith.constant dense<0.000000e+00> : vector<2x10xf32>
    %496 = tpu.matmul %494, %495, %cst_222 {dimension_numbers = #tpu.dot_dimension_numbers<[1], [0], [0], [1], [0, 0, 1, 1], [], []>} : vector<2x32xbf16>, vector<32x10xbf16>, vector<2x10xf32> -> vector<2x10xf32>
    %497 = vector.extract_strided_slice %0 {offsets = [28, 0], sizes = [1, 10], strides = [1, 1]} : vector<29x64xf32> to vector<1x10xf32>
    %498 = vector.broadcast %497 : vector<1x10xf32> to vector<2x10xf32>
    %499 = arith.addf %496, %498 : vector<2x10xf32>
    %c0_223 = arith.constant 0 : index
    %c0_224 = arith.constant 0 : index
    %500 = vector.load %arg12[%c0_223, %c0_224] : memref<2x10xf32, #tpu.memory_space<vmem>>, vector<2x10xf32>
    tpu.vector_store %arg12[%c0_223, %c0_224], %499 {strides = array<i32>} : memref<2x10xf32, #tpu.memory_space<vmem>>, vector<2x10xf32>,
    return
  }
}

</mosaic_0001>

<llo_original>
// kernel: bert_classifier_forward.1
$region0: #{bert_classifier_forward.1}
  #allocation0 [shape = 'u32[]', space=smem, size = 0x4, offset = 0x4, fixed_abs, tag = 'smem constant byte address 0x4 - core index']
  #allocation1 [shape = 'u32[144,128]{1,0:T(1,128)}', space=vmem, size = 0x12000, scoped, tag = 'internal scratch']
  %s0 = inlined_call_operand.vmem [shape: s32[16,1], index: 0, kind: input, shape index: {}]
  %s1 = inlined_call_operand.vmem [shape: s32[16,1], index: 1, kind: input, shape index: {}]
  %s2 = inlined_call_operand.vmem [shape: s32[2,8], index: 2, kind: input, shape index: {}]
  %s3 = inlined_call_operand.vmem [shape: f32[100,32], index: 3, kind: input, shape index: {}]
  %s4 = inlined_call_operand.vmem [shape: f32[2,32], index: 4, kind: input, shape index: {}]
  %s5 = inlined_call_operand.vmem [shape: f32[8,32], index: 5, kind: input, shape index: {}]
  %s6 = inlined_call_operand.vmem [shape: f32[29,64], index: 6, kind: input, shape index: {}]
  %s7 = inlined_call_operand.vmem [shape: bf16[2,3,2,32,16], index: 7, kind: input, shape index: {}]
  %s8 = inlined_call_operand.vmem [shape: bf16[2,2,16,32], index: 8, kind: input, shape index: {}]
  %s9 = inlined_call_operand.vmem [shape: bf16[2,32,64], index: 9, kind: input, shape index: {}]
  %s10 = inlined_call_operand.vmem [shape: bf16[2,64,32], index: 10, kind: input, shape index: {}]
  %s11 = inlined_call_operand.vmem [shape: bf16[32,10], index: 11, kind: input, shape index: {}]
  %s12 = inlined_call_operand.hbm [shape: f32[2,10], index: 12, kind: output, shape index: {}]
  %s13 = sld [smem:[#allocation0]]
  $region58: #{bert_classifier_forward.1} parent=0
    _
  %s15 = ssub.s32 1, %s13
  %s16 = scalar_select 0, %s15, %s13
  $region1: #{bert_classifier_forward.1} parent=0
    #allocation2 [shape = 'u8[1024]{0}', space=vmem, size = 0x400, scoped, tag = 'output window, operand 0, single buffered']
    #allocation3 [shape = 's32[1]{0}', space=sflag, size = 0x4, scoped, tag = 'scoped memory for bert_classifier_forward.1']
    %17 = vsyncpa [#allocation3], 0
    // Predicated region
    $region2: #{bert_classifier_forward.1} parent=1 // pred_check
      _
    $region3: #{bert_classifier_forward.1} parent=1 // pred_check_branch
      %19 = sbr.rel (0) target = $region5
    $region4: #{bert_classifier_forward.1} parent=1 // pred_region
      _
    $region5: #{bert_classifier_forward.1} parent=1 // pred_fallthru
      _
    // Predicated region
    $region6: #{bert_classifier_forward.1} parent=1 // pred_check
      _
    $region7: #{bert_classifier_forward.1} parent=1 // pred_check_branch
      %21 = sbr.rel (0) target = $region9
    $region8: #{bert_classifier_forward.1} parent=1 // pred_region
      _
    $region9: #{bert_classifier_forward.1} parent=1 // pred_fallthru
      _
    // Predicated region
    $region10: #{bert_classifier_forward.1} parent=1 // pred_check
      _
    $region11: #{bert_classifier_forward.1} parent=1 // pred_check_branch
      %23 = sbr.rel (0) target = $region13
    $region12: #{bert_classifier_forward.1} parent=1 // pred_region
      _
    $region13: #{bert_classifier_forward.1} parent=1 // pred_fallthru
      _
    // Predicated region
    $region14: #{bert_classifier_forward.1} parent=1 // pred_check
      _
    $region15: #{bert_classifier_forward.1} parent=1 // pred_check_branch
      %25 = sbr.rel (0) target = $region17
    $region16: #{bert_classifier_forward.1} parent=1 // pred_region
      _
    $region17: #{bert_classifier_forward.1} parent=1 // pred_fallthru
      _
    // Predicated region
    $region18: #{bert_classifier_forward.1} parent=1 // pred_check
      _
    $region19: #{bert_classifier_forward.1} parent=1 // pred_check_branch
      %27 = sbr.rel (0) target = $region21
    $region20: #{bert_classifier_forward.1} parent=1 // pred_region
      _
    $region21: #{bert_classifier_forward.1} parent=1 // pred_fallthru
      _
    // Predicated region
    $region22: #{bert_classifier_forward.1} parent=1 // pred_check
      _
    $region23: #{bert_classifier_forward.1} parent=1 // pred_check_branch
      %29 = sbr.rel (0) target = $region25
    $region24: #{bert_classifier_forward.1} parent=1 // pred_region
      _
    $region25: #{bert_classifier_forward.1} parent=1 // pred_fallthru
      _
    // Predicated region
    $region26: #{bert_classifier_forward.1} parent=1 // pred_check
      _
    $region27: #{bert_classifier_forward.1} parent=1 // pred_check_branch
      %31 = sbr.rel (0) target = $region29
    $region28: #{bert_classifier_forward.1} parent=1 // pred_region
      _
    $region29: #{bert_classifier_forward.1} parent=1 // pred_fallthru
      _
    // Predicated region
    $region30: #{bert_classifier_forward.1} parent=1 // pred_check
      _
    $region31: #{bert_classifier_forward.1} parent=1 // pred_check_branch
      %33 = sbr.rel (0) target = $region33
    $region32: #{bert_classifier_forward.1} parent=1 // pred_region
      _
    $region33: #{bert_classifier_forward.1} parent=1 // pred_fallthru
      _
    // Predicated region
    $region34: #{bert_classifier_forward.1} parent=1 // pred_check
      _
    $region35: #{bert_classifier_forward.1} parent=1 // pred_check_branch
      %35 = sbr.rel (0) target = $region37
    $region36: #{bert_classifier_forward.1} parent=1 // pred_region
      _
    $region37: #{bert_classifier_forward.1} parent=1 // pred_fallthru
      _
    // Predicated region
    $region38: #{bert_classifier_forward.1} parent=1 // pred_check
      _
    $region39: #{bert_classifier_forward.1} parent=1 // pred_check_branch
      %37 = sbr.rel (0) target = $region41
    $region40: #{bert_classifier_forward.1} parent=1 // pred_region
      _
    $region41: #{bert_classifier_forward.1} parent=1 // pred_fallthru
      _
    // Predicated region
    $region42: #{bert_classifier_forward.1} parent=1 // pred_check
      _
    $region43: #{bert_classifier_forward.1} parent=1 // pred_check_branch
      %39 = sbr.rel (0) target = $region45
    $region44: #{bert_classifier_forward.1} parent=1 // pred_region
      _
    $region45: #{bert_classifier_forward.1} parent=1 // pred_fallthru
      _
    // Predicated region
    $region46: #{bert_classifier_forward.1} parent=1 // pred_check
      _
    $region47: #{bert_classifier_forward.1} parent=1 // pred_check_branch
      %41 = sbr.rel (0) target = $region49
    $region48: #{bert_classifier_forward.1} parent=1 // pred_region
      _
    $region49: #{bert_classifier_forward.1} parent=1 // pred_fallthru
      _
    %v43 = vld [vmem:[%s6] sm:$0xff]
    %v44 = vld [vmem:[%s6 + $0x8] sm:$0xff]
    %v45 = vld [vmem:[%s6 + $0x10] sm:$0xff]
    %v46 = vld [vmem:[%s6 + $0x18] sm:$0x1f]
    %v47 = vld [vmem:[%s0] sm:$0xff]
    %v48 = vld [vmem:[%s0 + $0x8] sm:$0xff]
    %v49 = vld [vmem:[%s1] sm:$0xff]
    %v50 = vld [vmem:[%s1 + $0x8] sm:$0xff]
    %v51 = vlaneseq
    %v52 = vand.u32 %v51, 127
    %53 = vset.pattern.permute.xlu0 0
    %54 = vperm.xlu0 %53, %v47
    %v55 = vpop.permute.xlu0 %54
    %56 = vset.pattern.permute.xlu0 0
    %57 = vperm.xlu0 %56, %v48
    %v58 = vpop.permute.xlu0 %57
    %vm59 = vcmp.eq.s32.totalorder %v52, %v55
    %vm60 = vcmp.eq.s32.totalorder %v52, %v58
    %v61 = vsel %vm59, 1, 0
    %v62 = vsel %vm60, 1, 0
    %v63 = vcvt.s32.f32 %v61
    %v64 = vcvt.s32.f32 %v62
    %v65 = vld [vmem:[%s3] sm:$0xff]
    %v66 = vld [vmem:[%s3 + $0x8] sm:$0xff]
    %v67 = vld [vmem:[%s3 + $0x10] sm:$0xff]
    %v68 = vld [vmem:[%s3 + $0x18] sm:$0xff]
    %v69 = vld [vmem:[%s3 + $0x20] sm:$0xff]
    %v70 = vld [vmem:[%s3 + $0x28] sm:$0xff]
    %v71 = vld [vmem:[%s3 + $0x30] sm:$0xff]
    %v72 = vld [vmem:[%s3 + $0x38] sm:$0xff]
    %v73 = vld [vmem:[%s3 + $0x40] sm:$0xff]
    %v74 = vld [vmem:[%s3 + $0x48] sm:$0xff]
    %v75 = vld [vmem:[%s3 + $0x50] sm:$0xff]
    %v76 = vld [vmem:[%s3 + $0x58] sm:$0xff]
    %v77 = vld [vmem:[%s3 + $0x60] sm:$0xf]
    %vm78 = vcmp.eq.s32.totalorder %v49, 0
    %vm79 = vcmp.eq.s32.totalorder %v50, 0
    %v80 = vld [vmem:[%s4] sm:$0x1]
    %v81 = vld [vmem:[%s4 + $0x1] sm:$0x1]
    %v82 = vsel %vm78, 1, 0
    %v83 = vsel %vm79, 1, 0
    %84 = vset.pattern.permute.xlu0 0
    %85 = vperm.xlu0 %84, %v82
    %v86 = vpop.permute.xlu0 %85
    %87 = vset.pattern.permute.xlu0 0
    %88 = vperm.xlu0 %87, %v83
    %v89 = vpop.permute.xlu0 %88
    %vm90 = vcmp.eq.s32.totalorder %v86, 1
    %vm91 = vcmp.eq.s32.totalorder %v89, 1
    %v92 = vlaneseq
    %v93 = vshrl.u32 %v92, 7
    %v94 = vsub.s32 0, %v93
    %v95 = vrot.slane %v80, %v94
    %v96 = vlaneseq
    %v97 = vshrl.u32 %v96, 7
    %v98 = vsub.s32 0, %v97
    %v99 = vrot.slane %v81, %v98
    %v100 = vsel %vm90, %v95, %v99
    %v101 = vsel %vm91, %v95, %v99
    %v102 = vld [vmem:[%s5] sm:$0xff]
    %vm103 = vcmask 818176
    %v105 = vsel %vm103, %v63, 0
    %v108 = vsel %vm103, %v64, 0
    %vm110 = vcmask 1043456
    %v112 = vsel %vm110, %v77, 0
    %114 = vmatprep.subr.mxu0 0.0
    %115 = vmatpush1.msra.mxu0 0.0
    %116 = vmatprep.subr.mxu0 0.0
    %117 = vmatpush1.msra.mxu0 0.0
    %118 = vmatprep.subr.mxu0 0.0
    %119 = vmatpush1.msra.mxu0 0.0
    %120 = vmatprep.subr.mxu0 0.0
    %121 = vmatpush1.msra.mxu0 %v112
    %122 = vmatprep.subr.mxu0 0.0
    %123 = vmatpush1.msra.mxu0 %v76
    %124 = vmatprep.subr.mxu0 0.0
    %125 = vmatpush1.msra.mxu0 %v75
    %126 = vmatprep.subr.mxu0 0.0
    %127 = vmatpush1.msra.mxu0 %v74
    %128 = vmatprep.subr.mxu0 0.0
    %129 = vmatpush1.msra.mxu0 %v73
    %130 = vmatprep.subr.mxu0 0.0
    %131 = vmatpush1.msra.mxu0 %v72
    %132 = vmatprep.subr.mxu0 0.0
    %133 = vmatpush1.msra.mxu0 %v71
    %134 = vmatprep.subr.mxu0 0.0
    %135 = vmatpush1.msra.mxu0 %v70
    %136 = vmatprep.subr.mxu0 0.0
    %137 = vmatpush1.msra.mxu0 %v69
    %138 = vmatprep.subr.mxu0 0.0
    %139 = vmatpush1.msra.mxu0 %v68
    %140 = vmatprep.subr.mxu0 0.0
    %141 = vmatpush1.msra.mxu0 %v67
    %142 = vmatprep.subr.mxu0 0.0
    %143 = vmatpush1.msra.mxu0 %v66
    %144 = vmatprep.subr.mxu0 0.0
    %145 = vmatpush1.msra.mxu0 %v65
    %146 = vmatprep.subr.mxu0 0.0
    %147 = vmatpush2.msra.mxu0 0.0
    %148 = vmatprep.subr.mxu0 0.0
    %149 = vmatpush2.msra.mxu0 0.0
    %150 = vmatprep.subr.mxu0 0.0
    %151 = vmatpush2.msra.mxu0 0.0
    %152 = vmatprep.subr.mxu0 0.0
    %153 = vmatpush2.msra.mxu0 0.0
    %154 = vmatprep.subr.mxu0 0.0
    %155 = vmatpush2.msra.mxu0 0.0
    %156 = vmatprep.subr.mxu0 0.0
    %157 = vmatpush2.msra.mxu0 0.0
    %158 = vmatprep.subr.mxu0 0.0
    %159 = vmatpush2.msra.mxu0 0.0
    %160 = vmatprep.subr.mxu0 0.0
    %161 = vmatpush2.msra.mxu0 0.0
    %162 = vmatprep.subr.mxu0 0.0
    %163 = vmatpush2.msra.mxu0 0.0
    %164 = vmatprep.subr.mxu0 0.0
    %165 = vmatpush2.msra.mxu0 0.0
    %166 = vmatprep.subr.mxu0 0.0
    %167 = vmatpush2.msra.mxu0 0.0
    %168 = vmatprep.subr.mxu0 0.0
    %169 = vmatpush2.msra.mxu0 0.0
    %170 = vmatprep.subr.mxu0 0.0
    %171 = vmatpush2.msra.mxu0 0.0
    %172 = vmatprep.subr.mxu0 0.0
    %173 = vmatpush2.msra.mxu0 0.0
    %174 = vmatprep.subr.mxu0 0.0
    %175 = vmatpush2.msra.mxu0 0.0
    %176 = vmatprep.subr.mxu0 0.0
    %177 = vmatpush2.msra.mxu0 0.0
    %178 = vmatprep.mubr.f32.mxu0 0.0
    %179 = vmatmul.mubr.f32.gmra.mxu0 %v105
    %v180 = vpop.f32.mrf.mxu0
    %v181 = vadd.f32 %v102, %v180
    %v182 = vpop.f32.mrf.mxu0
    %183 = vmatprep.mubr.f32.mxu0 0.0
    %184 = vmatmul.mubr.f32.gmra.mxu0 %v108
    %v185 = vpop.f32.mrf.mxu0
    %v186 = vadd.f32 %v102, %v185
    %v187 = vpop.f32.mrf.mxu0
    %188 = vdwg.mxu0
    %v189 = vadd.f32 %v181, %v100
    %v190 = vadd.f32 %v186, %v101
    %vm191 = vcmask 261120
    %v192 = vsel %vm191, %v189, 0.0
    %193 = vadd.xlane.f32.xlu0 %v192
    %v194 = vpop.xlane.xlu0 %193
    %v195 = vsel %vm191, %v190, 0.0
    %196 = vadd.xlane.f32.xlu0 %v195
    %v197 = vpop.xlane.xlu0 %196
    %v198 = vrcp.pop 32.0
    %v199 = vmul.f32 %v194, %v198
    %v200 = vmul.f32 %v197, %v198
    %v201 = vsub.f32 %v189, %v199
    %v202 = vsub.f32 %v190, %v200
    %v203 = vmul.f32 %v201, %v201
    %v204 = vmul.f32 %v202, %v202
    %v205 = vsel %vm191, %v203, 0.0
    %206 = vadd.xlane.f32.xlu0 %v205
    %v207 = vpop.xlane.xlu0 %206
    %v208 = vsel %vm191, %v204, 0.0
    %209 = vadd.xlane.f32.xlu0 %v208
    %v210 = vpop.xlane.xlu0 %209
    %v211 = vmul.f32 %v207, %v198
    %v212 = vmul.f32 %v210, %v198
    %v213 = vadd.f32 %v211, 1e-12
    %v214 = vadd.f32 %v212, 1e-12
    %v215 = vrsqrt.pop %v213
    %v216 = vrsqrt.pop %v214
    %v217 = vmul.f32 %v201, %v215
    %v218 = vmul.f32 %v202, %v216
    %v219 = vlaneseq
    %v220 = vshrl.u32 %v219, 7
    %v221 = vsub.s32 0, %v220
    %v222 = vrot.slane %v43, %v221
    %v223 = vmul.f32 %v217, %v222
    %v224 = vmul.f32 %v218, %v222
    %v225 = vlaneseq
    %v226 = vshrl.u32 %v225, 7
    %v227 = vsub.s32 1, %v226
    %v228 = vrot.slane %v43, %v227
    %v229 = vadd.f32 %v223, %v228
    %v230 = vadd.f32 %v224, %v228
    %v231 = vld [vmem:[%s2] sm:$0x3]
    %v232 = vcvt.s32.f32 %v231
    %v233 = vsub.f32 1.0, %v232
    %v234 = vmul.f32 %v233, -10000.0
    %v235 = vpack.c.bf16 %v230, %v229
    %v236 = vld [vmem:[%s7] sm:$0xf]
    %v237 = vld [vmem:[%s7 + $0x4] sm:$0xf]
    %v238 = vld [vmem:[%s7 + $0x8] sm:$0xf]
    %v239 = vld [vmem:[%s7 + $0xc] sm:$0xf]
    %v240 = vlaneseq
    %v241 = vshrl.u32 %v240, 7
    %v242 = vsub.s32 2, %v241
    %v243 = vrot.slane %v43, %v242
    %v248 = vunpack.c.l.b16 %v236
    %v249 = vunpack.c.l.b16 %v237
    %v250 = vunpack.c.l.b16 %v238
    %v251 = vunpack.c.l.b16 %v239
    %v252 = vpack.c.b16 %v249, %v248
    %v253 = vpack.c.b16 %v251, %v250
    %v257 = vsel %vm191, %v235, 0
    %259 = vmatprep.subr.bf16.mxu0 0
    %260 = vmatpush1.bf16.msra.mxu0 0
    %261 = vmatprep.subr.bf16.mxu0 0
    %262 = vmatpush1.bf16.msra.mxu0 0
    %263 = vmatprep.subr.bf16.mxu0 0
    %264 = vmatpush1.bf16.msra.mxu0 0
    %265 = vmatprep.subr.bf16.mxu0 0
    %266 = vmatpush1.bf16.msra.mxu0 0
    %267 = vmatprep.subr.bf16.mxu0 0
    %268 = vmatpush1.bf16.msra.mxu0 0
    %269 = vmatprep.subr.bf16.mxu0 0
    %270 = vmatpush1.bf16.msra.mxu0 0
    %271 = vmatprep.subr.bf16.mxu0 0
    %272 = vmatpush1.bf16.msra.mxu0 %v253
    %273 = vmatprep.subr.bf16.mxu0 0
    %274 = vmatpush1.bf16.msra.mxu0 %v252
    %275 = vmatprep.subr.bf16.mxu0 0
    %276 = vmatpush2.bf16.msra.mxu0 0
    %277 = vmatprep.subr.bf16.mxu0 0
    %278 = vmatpush2.bf16.msra.mxu0 0
    %279 = vmatprep.subr.bf16.mxu0 0
    %280 = vmatpush2.bf16.msra.mxu0 0
    %281 = vmatprep.subr.bf16.mxu0 0
    %282 = vmatpush2.bf16.msra.mxu0 0
    %283 = vmatprep.subr.bf16.mxu0 0
    %284 = vmatpush2.bf16.msra.mxu0 0
    %285 = vmatprep.subr.bf16.mxu0 0
    %286 = vmatpush2.bf16.msra.mxu0 0
    %287 = vmatprep.subr.bf16.mxu0 0
    %288 = vmatpush2.bf16.msra.mxu0 0
    %289 = vmatprep.subr.bf16.mxu0 0
    %290 = vmatpush2.bf16.msra.mxu0 0
    %291 = vmatprep.mubr.bf16.mxu0 0
    %292 = vmatmul.mubr.bf16.gmra.mxu0 %v257
    %v293 = vpop.f32.mrf.mxu0
    %v294 = vadd.f32 %v243, %v293
    %v295 = vpop.f32.mrf.mxu0
    %v296 = vpop.f32.mrf.mxu0
    %v297 = vadd.f32 %v243, %v296
    %v298 = vpop.f32.mrf.mxu0
    %299 = vdwg.mxu0
    %s300 = scalar_lea.vmem %s7, 32
    %v301 = vld [vmem:[%s300] sm:$0xf]
    %v302 = vld [vmem:[%s300 + $0x4] sm:$0xf]
    %v303 = vld [vmem:[%s300 + $0x8] sm:$0xf]
    %v304 = vld [vmem:[%s300 + $0xc] sm:$0xf]
    %v305 = vlaneseq
    %v306 = vshrl.u32 %v305, 7
    %v307 = vsub.s32 4, %v306
    %v308 = vrot.slane %v43, %v307
    %v313 = vunpack.c.l.b16 %v301
    %v314 = vunpack.c.l.b16 %v302
    %v315 = vunpack.c.l.b16 %v303
    %v316 = vunpack.c.l.b16 %v304
    %v317 = vpack.c.b16 %v314, %v313
    %v318 = vpack.c.b16 %v316, %v315
    %321 = vmatprep.subr.bf16.mxu0 0
    %322 = vmatpush1.bf16.msra.mxu0 0
    %323 = vmatprep.subr.bf16.mxu0 0
    %324 = vmatpush1.bf16.msra.mxu0 0
    %325 = vmatprep.subr.bf16.mxu0 0
    %326 = vmatpush1.bf16.msra.mxu0 0
    %327 = vmatprep.subr.bf16.mxu0 0
    %328 = vmatpush1.bf16.msra.mxu0 0
    %329 = vmatprep.subr.bf16.mxu0 0
    %330 = vmatpush1.bf16.msra.mxu0 0
    %331 = vmatprep.subr.bf16.mxu0 0
    %332 = vmatpush1.bf16.msra.mxu0 0
    %333 = vmatprep.subr.bf16.mxu0 0
    %334 = vmatpush1.bf16.msra.mxu0 %v318
    %335 = vmatprep.subr.bf16.mxu0 0
    %336 = vmatpush1.bf16.msra.mxu0 %v317
    %337 = vmatprep.subr.bf16.mxu0 0
    %338 = vmatpush2.bf16.msra.mxu0 0
    %339 = vmatprep.subr.bf16.mxu0 0
    %340 = vmatpush2.bf16.msra.mxu0 0
    %341 = vmatprep.subr.bf16.mxu0 0
    %342 = vmatpush2.bf16.msra.mxu0 0
    %343 = vmatprep.subr.bf16.mxu0 0
    %344 = vmatpush2.bf16.msra.mxu0 0
    %345 = vmatprep.subr.bf16.mxu0 0
    %346 = vmatpush2.bf16.msra.mxu0 0
    %347 = vmatprep.subr.bf16.mxu0 0
    %348 = vmatpush2.bf16.msra.mxu0 0
    %349 = vmatprep.subr.bf16.mxu0 0
    %350 = vmatpush2.bf16.msra.mxu0 0
    %351 = vmatprep.subr.bf16.mxu0 0
    %352 = vmatpush2.bf16.msra.mxu0 0
    %353 = vmatprep.mubr.bf16.mxu0 0
    %354 = vmatmul.mubr.bf16.gmra.mxu0 %v257
    %v355 = vpop.f32.mrf.mxu0
    %v356 = vadd.f32 %v308, %v355
    %v357 = vpop.f32.mrf.mxu0
    %v358 = vpop.f32.mrf.mxu0
    %v359 = vadd.f32 %v308, %v358
    %v360 = vpop.f32.mrf.mxu0
    %361 = vdwg.mxu0
    %s362 = scalar_lea.vmem %s7, 64
    %v363 = vld [vmem:[%s362] sm:$0xf]
    %v364 = vld [vmem:[%s362 + $0x4] sm:$0xf]
    %v365 = vld [vmem:[%s362 + $0x8] sm:$0xf]
    %v366 = vld [vmem:[%s362 + $0xc] sm:$0xf]
    %v367 = vlaneseq
    %v368 = vshrl.u32 %v367, 7
    %v369 = vsub.s32 6, %v368
    %v370 = vrot.slane %v43, %v369
    %v375 = vunpack.c.l.b16 %v363
    %v376 = vunpack.c.l.b16 %v364
    %v377 = vunpack.c.l.b16 %v365
    %v378 = vunpack.c.l.b16 %v366
    %v379 = vpack.c.b16 %v376, %v375
    %v380 = vpack.c.b16 %v378, %v377
    %383 = vmatprep.subr.bf16.mxu0 0
    %384 = vmatpush1.bf16.msra.mxu0 0
    %385 = vmatprep.subr.bf16.mxu0 0
    %386 = vmatpush1.bf16.msra.mxu0 0
    %387 = vmatprep.subr.bf16.mxu0 0
    %388 = vmatpush1.bf16.msra.mxu0 0
    %389 = vmatprep.subr.bf16.mxu0 0
    %390 = vmatpush1.bf16.msra.mxu0 0
    %391 = vmatprep.subr.bf16.mxu0 0
    %392 = vmatpush1.bf16.msra.mxu0 0
    %393 = vmatprep.subr.bf16.mxu0 0
    %394 = vmatpush1.bf16.msra.mxu0 0
    %395 = vmatprep.subr.bf16.mxu0 0
    %396 = vmatpush1.bf16.msra.mxu0 %v380
    %397 = vmatprep.subr.bf16.mxu0 0
    %398 = vmatpush1.bf16.msra.mxu0 %v379
    %399 = vmatprep.subr.bf16.mxu0 0
    %400 = vmatpush2.bf16.msra.mxu0 0
    %401 = vmatprep.subr.bf16.mxu0 0
    %402 = vmatpush2.bf16.msra.mxu0 0
    %403 = vmatprep.subr.bf16.mxu0 0
    %404 = vmatpush2.bf16.msra.mxu0 0
    %405 = vmatprep.subr.bf16.mxu0 0
    %406 = vmatpush2.bf16.msra.mxu0 0
    %407 = vmatprep.subr.bf16.mxu0 0
    %408 = vmatpush2.bf16.msra.mxu0 0
    %409 = vmatprep.subr.bf16.mxu0 0
    %410 = vmatpush2.bf16.msra.mxu0 0
    %411 = vmatprep.subr.bf16.mxu0 0
    %412 = vmatpush2.bf16.msra.mxu0 0
    %413 = vmatprep.subr.bf16.mxu0 0
    %414 = vmatpush2.bf16.msra.mxu0 0
    %415 = vmatprep.mubr.bf16.mxu0 0
    %416 = vmatmul.mubr.bf16.gmra.mxu0 %v257
    %v417 = vpop.f32.mrf.mxu0
    %v418 = vadd.f32 %v370, %v417
    %v419 = vpop.f32.mrf.mxu0
    %v420 = vpop.f32.mrf.mxu0
    %v421 = vadd.f32 %v370, %v420
    %v422 = vpop.f32.mrf.mxu0
    %423 = vdwg.mxu0
    %s424 = scalar_lea.vmem %s7, 16
    %v425 = vld [vmem:[%s424] sm:$0xf]
    %v426 = vld [vmem:[%s424 + $0x4] sm:$0xf]
    %v427 = vld [vmem:[%s424 + $0x8] sm:$0xf]
    %v428 = vld [vmem:[%s424 + $0xc] sm:$0xf]
    %v429 = vlaneseq
    %v430 = vshrl.u32 %v429, 7
    %v431 = vsub.s32 3, %v430
    %v432 = vrot.slane %v43, %v431
    %v437 = vunpack.c.l.b16 %v425
    %v438 = vunpack.c.l.b16 %v426
    %v439 = vunpack.c.l.b16 %v427
    %v440 = vunpack.c.l.b16 %v428
    %v441 = vpack.c.b16 %v438, %v437
    %v442 = vpack.c.b16 %v440, %v439
    %445 = vmatprep.subr.bf16.mxu0 0
    %446 = vmatpush1.bf16.msra.mxu0 0
    %447 = vmatprep.subr.bf16.mxu0 0
    %448 = vmatpush1.bf16.msra.mxu0 0
    %449 = vmatprep.subr.bf16.mxu0 0
    %450 = vmatpush1.bf16.msra.mxu0 0
    %451 = vmatprep.subr.bf16.mxu0 0
    %452 = vmatpush1.bf16.msra.mxu0 0
    %453 = vmatprep.subr.bf16.mxu0 0
    %454 = vmatpush1.bf16.msra.mxu0 0
    %455 = vmatprep.subr.bf16.mxu0 0
    %456 = vmatpush1.bf16.msra.mxu0 0
    %457 = vmatprep.subr.bf16.mxu0 0
    %458 = vmatpush1.bf16.msra.mxu0 %v442
    %459 = vmatprep.subr.bf16.mxu0 0
    %460 = vmatpush1.bf16.msra.mxu0 %v441
    %461 = vmatprep.subr.bf16.mxu0 0
    %462 = vmatpush2.bf16.msra.mxu0 0
    %463 = vmatprep.subr.bf16.mxu0 0
    %464 = vmatpush2.bf16.msra.mxu0 0
    %465 = vmatprep.subr.bf16.mxu0 0
    %466 = vmatpush2.bf16.msra.mxu0 0
    %467 = vmatprep.subr.bf16.mxu0 0
    %468 = vmatpush2.bf16.msra.mxu0 0
    %469 = vmatprep.subr.bf16.mxu0 0
    %470 = vmatpush2.bf16.msra.mxu0 0
    %471 = vmatprep.subr.bf16.mxu0 0
    %472 = vmatpush2.bf16.msra.mxu0 0
    %473 = vmatprep.subr.bf16.mxu0 0
    %474 = vmatpush2.bf16.msra.mxu0 0
    %475 = vmatprep.subr.bf16.mxu0 0
    %476 = vmatpush2.bf16.msra.mxu0 0
    %477 = vmatprep.mubr.bf16.mxu0 0
    %478 = vmatmul.mubr.bf16.gmra.mxu0 %v257
    %v479 = vpop.f32.mrf.mxu0
    %v480 = vadd.f32 %v432, %v479
    %v481 = vpop.f32.mrf.mxu0
    %v482 = vpop.f32.mrf.mxu0
    %v483 = vadd.f32 %v432, %v482
    %v484 = vpop.f32.mrf.mxu0
    %485 = vdwg.mxu0
    %s486 = scalar_lea.vmem %s7, 48
    %v487 = vld [vmem:[%s486] sm:$0xf]
    %v488 = vld [vmem:[%s486 + $0x4] sm:$0xf]
    %v489 = vld [vmem:[%s486 + $0x8] sm:$0xf]
    %v490 = vld [vmem:[%s486 + $0xc] sm:$0xf]
    %v491 = vlaneseq
    %v492 = vshrl.u32 %v491, 7
    %v493 = vsub.s32 5, %v492
    %v494 = vrot.slane %v43, %v493
    %v499 = vunpack.c.l.b16 %v487
    %v500 = vunpack.c.l.b16 %v488
    %v501 = vunpack.c.l.b16 %v489
    %v502 = vunpack.c.l.b16 %v490
    %v503 = vpack.c.b16 %v500, %v499
    %v504 = vpack.c.b16 %v502, %v501
    %507 = vmatprep.subr.bf16.mxu0 0
    %508 = vmatpush1.bf16.msra.mxu0 0
    %509 = vmatprep.subr.bf16.mxu0 0
    %510 = vmatpush1.bf16.msra.mxu0 0
    %511 = vmatprep.subr.bf16.mxu0 0
    %512 = vmatpush1.bf16.msra.mxu0 0
    %513 = vmatprep.subr.bf16.mxu0 0
    %514 = vmatpush1.bf16.msra.mxu0 0
    %515 = vmatprep.subr.bf16.mxu0 0
    %516 = vmatpush1.bf16.msra.mxu0 0
    %517 = vmatprep.subr.bf16.mxu0 0
    %518 = vmatpush1.bf16.msra.mxu0 0
    %519 = vmatprep.subr.bf16.mxu0 0
    %520 = vmatpush1.bf16.msra.mxu0 %v504
    %521 = vmatprep.subr.bf16.mxu0 0
    %522 = vmatpush1.bf16.msra.mxu0 %v503
    %523 = vmatprep.subr.bf16.mxu0 0
    %524 = vmatpush2.bf16.msra.mxu0 0
    %525 = vmatprep.subr.bf16.mxu0 0
    %526 = vmatpush2.bf16.msra.mxu0 0
    %527 = vmatprep.subr.bf16.mxu0 0
    %528 = vmatpush2.bf16.msra.mxu0 0
    %529 = vmatprep.subr.bf16.mxu0 0
    %530 = vmatpush2.bf16.msra.mxu0 0
    %531 = vmatprep.subr.bf16.mxu0 0
    %532 = vmatpush2.bf16.msra.mxu0 0
    %533 = vmatprep.subr.bf16.mxu0 0
    %534 = vmatpush2.bf16.msra.mxu0 0
    %535 = vmatprep.subr.bf16.mxu0 0
    %536 = vmatpush2.bf16.msra.mxu0 0
    %537 = vmatprep.subr.bf16.mxu0 0
    %538 = vmatpush2.bf16.msra.mxu0 0
    %539 = vmatprep.mubr.bf16.mxu0 0
    %540 = vmatmul.mubr.bf16.gmra.mxu0 %v257
    %v541 = vpop.f32.mrf.mxu0
    %v542 = vadd.f32 %v494, %v541
    %v543 = vpop.f32.mrf.mxu0
    %v544 = vpop.f32.mrf.mxu0
    %v545 = vadd.f32 %v494, %v544
    %v546 = vpop.f32.mrf.mxu0
    %547 = vdwg.mxu0
    %s548 = scalar_lea.vmem %s7, 80
    %v549 = vld [vmem:[%s548] sm:$0xf]
    %v550 = vld [vmem:[%s548 + $0x4] sm:$0xf]
    %v551 = vld [vmem:[%s548 + $0x8] sm:$0xf]
    %v552 = vld [vmem:[%s548 + $0xc] sm:$0xf]
    %v553 = vlaneseq
    %v554 = vshrl.u32 %v553, 7
    %v555 = vsub.s32 7, %v554
    %v556 = vrot.slane %v43, %v555
    %v561 = vunpack.c.l.b16 %v549
    %v562 = vunpack.c.l.b16 %v550
    %v563 = vunpack.c.l.b16 %v551
    %v564 = vunpack.c.l.b16 %v552
    %v565 = vpack.c.b16 %v562, %v561
    %v566 = vpack.c.b16 %v564, %v563
    %569 = vmatprep.subr.bf16.mxu0 0
    %570 = vmatpush1.bf16.msra.mxu0 0
    %571 = vmatprep.subr.bf16.mxu0 0
    %572 = vmatpush1.bf16.msra.mxu0 0
    %573 = vmatprep.subr.bf16.mxu0 0
    %574 = vmatpush1.bf16.msra.mxu0 0
    %575 = vmatprep.subr.bf16.mxu0 0
    %576 = vmatpush1.bf16.msra.mxu0 0
    %577 = vmatprep.subr.bf16.mxu0 0
    %578 = vmatpush1.bf16.msra.mxu0 0
    %579 = vmatprep.subr.bf16.mxu0 0
    %580 = vmatpush1.bf16.msra.mxu0 0
    %581 = vmatprep.subr.bf16.mxu0 0
    %582 = vmatpush1.bf16.msra.mxu0 %v566
    %583 = vmatprep.subr.bf16.mxu0 0
    %584 = vmatpush1.bf16.msra.mxu0 %v565
    %585 = vmatprep.subr.bf16.mxu0 0
    %586 = vmatpush2.bf16.msra.mxu0 0
    %587 = vmatprep.subr.bf16.mxu0 0
    %588 = vmatpush2.bf16.msra.mxu0 0
    %589 = vmatprep.subr.bf16.mxu0 0
    %590 = vmatpush2.bf16.msra.mxu0 0
    %591 = vmatprep.subr.bf16.mxu0 0
    %592 = vmatpush2.bf16.msra.mxu0 0
    %593 = vmatprep.subr.bf16.mxu0 0
    %594 = vmatpush2.bf16.msra.mxu0 0
    %595 = vmatprep.subr.bf16.mxu0 0
    %596 = vmatpush2.bf16.msra.mxu0 0
    %597 = vmatprep.subr.bf16.mxu0 0
    %598 = vmatpush2.bf16.msra.mxu0 0
    %599 = vmatprep.subr.bf16.mxu0 0
    %600 = vmatpush2.bf16.msra.mxu0 0
    %601 = vmatprep.mubr.bf16.mxu0 0
    %602 = vmatmul.mubr.bf16.gmra.mxu0 %v257
    %v603 = vpop.f32.mrf.mxu0
    %v604 = vadd.f32 %v556, %v603
    %v605 = vpop.f32.mrf.mxu0
    %v606 = vpop.f32.mrf.mxu0
    %v607 = vadd.f32 %v556, %v606
    %v608 = vpop.f32.mrf.mxu0
    %609 = vdwg.mxu0
    %vm610 = vcmask 130048
    %v612 = vsel %vm610, %v294, 0
    %v615 = vsel %vm610, %v356, 0
    %617 = vmatprep.subr.mxu0 0.0
    %618 = vmatpush1.xpose.msra.mxu0 0.0
    %619 = vmatprep.subr.mxu0 0.0
    %620 = vmatpush1.xpose.msra.mxu0 0.0
    %621 = vmatprep.subr.mxu0 0.0
    %622 = vmatpush1.xpose.msra.mxu0 0.0
    %623 = vmatprep.subr.mxu0 0.0
    %624 = vmatpush1.xpose.msra.mxu0 0.0
    %625 = vmatprep.subr.mxu0 0.0
    %626 = vmatpush1.xpose.msra.mxu0 0.0
    %627 = vmatprep.subr.mxu0 0.0
    %628 = vmatpush1.xpose.msra.mxu0 0.0
    %629 = vmatprep.subr.mxu0 0.0
    %630 = vmatpush1.xpose.msra.mxu0 0.0
    %631 = vmatprep.subr.mxu0 0.0
    %632 = vmatpush1.xpose.msra.mxu0 0.0
    %633 = vmatprep.subr.mxu0 0.0
    %634 = vmatpush1.xpose.msra.mxu0 0.0
    %635 = vmatprep.subr.mxu0 0.0
    %636 = vmatpush1.xpose.msra.mxu0 0.0
    %637 = vmatprep.subr.mxu0 0.0
    %638 = vmatpush1.xpose.msra.mxu0 0.0
    %639 = vmatprep.subr.mxu0 0.0
    %640 = vmatpush1.xpose.msra.mxu0 0.0
    %641 = vmatprep.subr.mxu0 0.0
    %642 = vmatpush1.xpose.msra.mxu0 0.0
    %643 = vmatprep.subr.mxu0 0.0
    %644 = vmatpush1.xpose.msra.mxu0 0.0
    %645 = vmatprep.subr.mxu0 0.0
    %646 = vmatpush1.xpose.msra.mxu0 0.0
    %647 = vmatprep.subr.mxu0 0.0
    %648 = vmatpush1.xpose.msra.mxu0 %v615
    %649 = vmatprep.subr.mxu0 0.0
    %650 = vmatpush2.xpose.msra.mxu0 0.0
    %651 = vmatprep.subr.mxu0 0.0
    %652 = vmatpush2.xpose.msra.mxu0 0.0
    %653 = vmatprep.subr.mxu0 0.0
    %654 = vmatpush2.xpose.msra.mxu0 0.0
    %655 = vmatprep.subr.mxu0 0.0
    %656 = vmatpush2.xpose.msra.mxu0 0.0
    %657 = vmatprep.subr.mxu0 0.0
    %658 = vmatpush2.xpose.msra.mxu0 0.0
    %659 = vmatprep.subr.mxu0 0.0
    %660 = vmatpush2.xpose.msra.mxu0 0.0
    %661 = vmatprep.subr.mxu0 0.0
    %662 = vmatpush2.xpose.msra.mxu0 0.0
    %663 = vmatprep.subr.mxu0 0.0
    %664 = vmatpush2.xpose.msra.mxu0 0.0
    %665 = vmatprep.subr.mxu0 0.0
    %666 = vmatpush2.xpose.msra.mxu0 0.0
    %667 = vmatprep.subr.mxu0 0.0
    %668 = vmatpush2.xpose.msra.mxu0 0.0
    %669 = vmatprep.subr.mxu0 0.0
    %670 = vmatpush2.xpose.msra.mxu0 0.0
    %671 = vmatprep.subr.mxu0 0.0
    %672 = vmatpush2.xpose.msra.mxu0 0.0
    %673 = vmatprep.subr.mxu0 0.0
    %674 = vmatpush2.xpose.msra.mxu0 0.0
    %675 = vmatprep.subr.mxu0 0.0
    %676 = vmatpush2.xpose.msra.mxu0 0.0
    %677 = vmatprep.subr.mxu0 0.0
    %678 = vmatpush2.xpose.msra.mxu0 0.0
    %679 = vmatprep.subr.mxu0 0.0
    %680 = vmatpush2.xpose.msra.mxu0 0.0
    %681 = vmatprep.mubr.f32.mxu0 0.0
    %682 = vmatmul.mubr.f32.gmra.mxu0 %v612
    %v683 = vpop.f32.mrf.mxu0
    %v684 = vadd.f32 0.0, %v683
    %v685 = vpop.f32.mrf.mxu0
    %686 = vdwg.mxu0
    %v687 = vmul.f32 %v684, 0.25
    %v688 = vlaneseq
    %v689 = vshrl.u32 %v688, 7
    %v690 = vsub.s32 0, %v689
    %v691 = vrot.slane %v234, %v690
    %v692 = vadd.f32 %v687, %v691
    %vm693 = vcmask 64512
    %v694 = vsel %vm693, %v692, -inf
    %695 = vmax.xlane.f32.xlu0 %v694
    %v696 = vpop.xlane.xlu0 %695
    %v697 = vsub.f32 %v692, %v696
    %v698 = vmul.f32 %v697, 1.442695
    %v699 = vpow.pop %v698
    %v700 = vsel %vm693, %v699, 0.0
    %701 = vadd.xlane.f32.xlu0 %v700
    %v702 = vpop.xlane.xlu0 %701
    %v703 = vrcp.pop %v702
    %v704 = vmul.f32 %v699, %v703
    %v706 = vsel %vm693, %v704, 0
    %708 = vmatprep.subr.mxu0 0.0
    %709 = vmatpush1.msra.mxu0 0.0
    %710 = vmatprep.subr.mxu0 0.0
    %711 = vmatpush1.msra.mxu0 0.0
    %712 = vmatprep.subr.mxu0 0.0
    %713 = vmatpush1.msra.mxu0 0.0
    %714 = vmatprep.subr.mxu0 0.0
    %715 = vmatpush1.msra.mxu0 0.0
    %716 = vmatprep.subr.mxu0 0.0
    %717 = vmatpush1.msra.mxu0 0.0
    %718 = vmatprep.subr.mxu0 0.0
    %719 = vmatpush1.msra.mxu0 0.0
    %720 = vmatprep.subr.mxu0 0.0
    %721 = vmatpush1.msra.mxu0 0.0
    %722 = vmatprep.subr.mxu0 0.0
    %723 = vmatpush1.msra.mxu0 0.0
    %724 = vmatprep.subr.mxu0 0.0
    %725 = vmatpush1.msra.mxu0 0.0
    %726 = vmatprep.subr.mxu0 0.0
    %727 = vmatpush1.msra.mxu0 0.0
    %728 = vmatprep.subr.mxu0 0.0
    %729 = vmatpush1.msra.mxu0 0.0
    %730 = vmatprep.subr.mxu0 0.0
    %731 = vmatpush1.msra.mxu0 0.0
    %732 = vmatprep.subr.mxu0 0.0
    %733 = vmatpush1.msra.mxu0 0.0
    %734 = vmatprep.subr.mxu0 0.0
    %735 = vmatpush1.msra.mxu0 0.0
    %736 = vmatprep.subr.mxu0 0.0
    %737 = vmatpush1.msra.mxu0 0.0
    %738 = vmatprep.subr.mxu0 0.0
    %739 = vmatpush1.msra.mxu0 %v418
    %740 = vmatprep.subr.mxu0 0.0
    %741 = vmatpush2.msra.mxu0 0.0
    %742 = vmatprep.subr.mxu0 0.0
    %743 = vmatpush2.msra.mxu0 0.0
    %744 = vmatprep.subr.mxu0 0.0
    %745 = vmatpush2.msra.mxu0 0.0
    %746 = vmatprep.subr.mxu0 0.0
    %747 = vmatpush2.msra.mxu0 0.0
    %748 = vmatprep.subr.mxu0 0.0
    %749 = vmatpush2.msra.mxu0 0.0
    %750 = vmatprep.subr.mxu0 0.0
    %751 = vmatpush2.msra.mxu0 0.0
    %752 = vmatprep.subr.mxu0 0.0
    %753 = vmatpush2.msra.mxu0 0.0
    %754 = vmatprep.subr.mxu0 0.0
    %755 = vmatpush2.msra.mxu0 0.0
    %756 = vmatprep.subr.mxu0 0.0
    %757 = vmatpush2.msra.mxu0 0.0
    %758 = vmatprep.subr.mxu0 0.0
    %759 = vmatpush2.msra.mxu0 0.0
    %760 = vmatprep.subr.mxu0 0.0
    %761 = vmatpush2.msra.mxu0 0.0
    %762 = vmatprep.subr.mxu0 0.0
    %763 = vmatpush2.msra.mxu0 0.0
    %764 = vmatprep.subr.mxu0 0.0
    %765 = vmatpush2.msra.mxu0 0.0
    %766 = vmatprep.subr.mxu0 0.0
    %767 = vmatpush2.msra.mxu0 0.0
    %768 = vmatprep.subr.mxu0 0.0
    %769 = vmatpush2.msra.mxu0 0.0
    %770 = vmatprep.subr.mxu0 0.0
    %771 = vmatpush2.msra.mxu0 0.0
    %772 = vmatprep.mubr.f32.mxu0 0.0
    %773 = vmatmul.mubr.f32.gmra.mxu0 %v706
    %v774 = vpop.f32.mrf.mxu0
    %v775 = vadd.f32 0.0, %v774
    %v776 = vpop.f32.mrf.mxu0
    %777 = vdwg.mxu0
    %v778 = vpack.c.bf16 %v775, %v775
    %v779 = vld [vmem:[%s8] sm:$0xf]
    %v780 = vld [vmem:[%s8 + $0x4] sm:$0xf]
    %v782 = vsel %vm610, %v480, 0
    %v785 = vsel %vm610, %v542, 0
    %787 = vmatprep.subr.mxu0 0.0
    %788 = vmatpush1.xpose.msra.mxu0 0.0
    %789 = vmatprep.subr.mxu0 0.0
    %790 = vmatpush1.xpose.msra.mxu0 0.0
    %791 = vmatprep.subr.mxu0 0.0
    %792 = vmatpush1.xpose.msra.mxu0 0.0
    %793 = vmatprep.subr.mxu0 0.0
    %794 = vmatpush1.xpose.msra.mxu0 0.0
    %795 = vmatprep.subr.mxu0 0.0
    %796 = vmatpush1.xpose.msra.mxu0 0.0
    %797 = vmatprep.subr.mxu0 0.0
    %798 = vmatpush1.xpose.msra.mxu0 0.0
    %799 = vmatprep.subr.mxu0 0.0
    %800 = vmatpush1.xpose.msra.mxu0 0.0
    %801 = vmatprep.subr.mxu0 0.0
    %802 = vmatpush1.xpose.msra.mxu0 0.0
    %803 = vmatprep.subr.mxu0 0.0
    %804 = vmatpush1.xpose.msra.mxu0 0.0
    %805 = vmatprep.subr.mxu0 0.0
    %806 = vmatpush1.xpose.msra.mxu0 0.0
    %807 = vmatprep.subr.mxu0 0.0
    %808 = vmatpush1.xpose.msra.mxu0 0.0
    %809 = vmatprep.subr.mxu0 0.0
    %810 = vmatpush1.xpose.msra.mxu0 0.0
    %811 = vmatprep.subr.mxu0 0.0
    %812 = vmatpush1.xpose.msra.mxu0 0.0
    %813 = vmatprep.subr.mxu0 0.0
    %814 = vmatpush1.xpose.msra.mxu0 0.0
    %815 = vmatprep.subr.mxu0 0.0
    %816 = vmatpush1.xpose.msra.mxu0 0.0
    %817 = vmatprep.subr.mxu0 0.0
    %818 = vmatpush1.xpose.msra.mxu0 %v785
    %819 = vmatprep.subr.mxu0 0.0
    %820 = vmatpush2.xpose.msra.mxu0 0.0
    %821 = vmatprep.subr.mxu0 0.0
    %822 = vmatpush2.xpose.msra.mxu0 0.0
    %823 = vmatprep.subr.mxu0 0.0
    %824 = vmatpush2.xpose.msra.mxu0 0.0
    %825 = vmatprep.subr.mxu0 0.0
    %826 = vmatpush2.xpose.msra.mxu0 0.0
    %827 = vmatprep.subr.mxu0 0.0
    %828 = vmatpush2.xpose.msra.mxu0 0.0
    %829 = vmatprep.subr.mxu0 0.0
    %830 = vmatpush2.xpose.msra.mxu0 0.0
    %831 = vmatprep.subr.mxu0 0.0
    %832 = vmatpush2.xpose.msra.mxu0 0.0
    %833 = vmatprep.subr.mxu0 0.0
    %834 = vmatpush2.xpose.msra.mxu0 0.0
    %835 = vmatprep.subr.mxu0 0.0
    %836 = vmatpush2.xpose.msra.mxu0 0.0
    %837 = vmatprep.subr.mxu0 0.0
    %838 = vmatpush2.xpose.msra.mxu0 0.0
    %839 = vmatprep.subr.mxu0 0.0
    %840 = vmatpush2.xpose.msra.mxu0 0.0
    %841 = vmatprep.subr.mxu0 0.0
    %842 = vmatpush2.xpose.msra.mxu0 0.0
    %843 = vmatprep.subr.mxu0 0.0
    %844 = vmatpush2.xpose.msra.mxu0 0.0
    %845 = vmatprep.subr.mxu0 0.0
    %846 = vmatpush2.xpose.msra.mxu0 0.0
    %847 = vmatprep.subr.mxu0 0.0
    %848 = vmatpush2.xpose.msra.mxu0 0.0
    %849 = vmatprep.subr.mxu0 0.0
    %850 = vmatpush2.xpose.msra.mxu0 0.0
    %851 = vmatprep.mubr.f32.mxu0 0.0
    %852 = vmatmul.mubr.f32.gmra.mxu0 %v782
    %v853 = vpop.f32.mrf.mxu0
    %v854 = vadd.f32 0.0, %v853
    %v855 = vpop.f32.mrf.mxu0
    %856 = vdwg.mxu0
    %v857 = vmul.f32 %v854, 0.25
    %v858 = vadd.f32 %v857, %v691
    %v859 = vsel %vm693, %v858, -inf
    %860 = vmax.xlane.f32.xlu0 %v859
    %v861 = vpop.xlane.xlu0 %860
    %v862 = vsub.f32 %v858, %v861
    %v863 = vmul.f32 %v862, 1.442695
    %v864 = vpow.pop %v863
    %v865 = vsel %vm693, %v864, 0.0
    %866 = vadd.xlane.f32.xlu0 %v865
    %v867 = vpop.xlane.xlu0 %866
    %v868 = vrcp.pop %v867
    %v869 = vmul.f32 %v864, %v868
    %v871 = vsel %vm693, %v869, 0
    %873 = vmatprep.subr.mxu0 0.0
    %874 = vmatpush1.msra.mxu0 0.0
    %875 = vmatprep.subr.mxu0 0.0
    %876 = vmatpush1.msra.mxu0 0.0
    %877 = vmatprep.subr.mxu0 0.0
    %878 = vmatpush1.msra.mxu0 0.0
    %879 = vmatprep.subr.mxu0 0.0
    %880 = vmatpush1.msra.mxu0 0.0
    %881 = vmatprep.subr.mxu0 0.0
    %882 = vmatpush1.msra.mxu0 0.0
    %883 = vmatprep.subr.mxu0 0.0
    %884 = vmatpush1.msra.mxu0 0.0
    %885 = vmatprep.subr.mxu0 0.0
    %886 = vmatpush1.msra.mxu0 0.0
    %887 = vmatprep.subr.mxu0 0.0
    %888 = vmatpush1.msra.mxu0 0.0
    %889 = vmatprep.subr.mxu0 0.0
    %890 = vmatpush1.msra.mxu0 0.0
    %891 = vmatprep.subr.mxu0 0.0
    %892 = vmatpush1.msra.mxu0 0.0
    %893 = vmatprep.subr.mxu0 0.0
    %894 = vmatpush1.msra.mxu0 0.0
    %895 = vmatprep.subr.mxu0 0.0
    %896 = vmatpush1.msra.mxu0 0.0
    %897 = vmatprep.subr.mxu0 0.0
    %898 = vmatpush1.msra.mxu0 0.0
    %899 = vmatprep.subr.mxu0 0.0
    %900 = vmatpush1.msra.mxu0 0.0
    %901 = vmatprep.subr.mxu0 0.0
    %902 = vmatpush1.msra.mxu0 0.0
    %903 = vmatprep.subr.mxu0 0.0
    %904 = vmatpush1.msra.mxu0 %v604
    %905 = vmatprep.subr.mxu0 0.0
    %906 = vmatpush2.msra.mxu0 0.0
    %907 = vmatprep.subr.mxu0 0.0
    %908 = vmatpush2.msra.mxu0 0.0
    %909 = vmatprep.subr.mxu0 0.0
    %910 = vmatpush2.msra.mxu0 0.0
    %911 = vmatprep.subr.mxu0 0.0
    %912 = vmatpush2.msra.mxu0 0.0
    %913 = vmatprep.subr.mxu0 0.0
    %914 = vmatpush2.msra.mxu0 0.0
    %915 = vmatprep.subr.mxu0 0.0
    %916 = vmatpush2.msra.mxu0 0.0
    %917 = vmatprep.subr.mxu0 0.0
    %918 = vmatpush2.msra.mxu0 0.0
    %919 = vmatprep.subr.mxu0 0.0
    %920 = vmatpush2.msra.mxu0 0.0
    %921 = vmatprep.subr.mxu0 0.0
    %922 = vmatpush2.msra.mxu0 0.0
    %923 = vmatprep.subr.mxu0 0.0
    %924 = vmatpush2.msra.mxu0 0.0
    %925 = vmatprep.subr.mxu0 0.0
    %926 = vmatpush2.msra.mxu0 0.0
    %927 = vmatprep.subr.mxu0 0.0
    %928 = vmatpush2.msra.mxu0 0.0
    %929 = vmatprep.subr.mxu0 0.0
    %930 = vmatpush2.msra.mxu0 0.0
    %931 = vmatprep.subr.mxu0 0.0
    %932 = vmatpush2.msra.mxu0 0.0
    %933 = vmatprep.subr.mxu0 0.0
    %934 = vmatpush2.msra.mxu0 0.0
    %935 = vmatprep.subr.mxu0 0.0
    %936 = vmatpush2.msra.mxu0 0.0
    %937 = vmatprep.mubr.f32.mxu0 0.0
    %938 = vmatmul.mubr.f32.gmra.mxu0 %v871
    %v939 = vpop.f32.mrf.mxu0
    %v940 = vadd.f32 0.0, %v939
    %v941 = vpop.f32.mrf.mxu0
    %942 = vdwg.mxu0
    %v943 = vpack.c.bf16 %v940, %v940
    %s944 = scalar_lea.vmem %s8, 8
    %v945 = vld [vmem:[%s944] sm:$0xf]
    %v946 = vld [vmem:[%s944 + $0x4] sm:$0xf]
    %v949 = vunpack.c.l.b16 %v945
    %v950 = vunpack.c.l.b16 %v946
    %v951 = vpack.c.b16 %v950, %v949
    %v954 = vsel %vm610, %v943, 0
    %956 = vmatprep.subr.bf16.mxu0 0
    %957 = vmatpush1.bf16.msra.mxu0 0
    %958 = vmatprep.subr.bf16.mxu0 0
    %959 = vmatpush1.bf16.msra.mxu0 0
    %960 = vmatprep.subr.bf16.mxu0 0
    %961 = vmatpush1.bf16.msra.mxu0 0
    %962 = vmatprep.subr.bf16.mxu0 0
    %963 = vmatpush1.bf16.msra.mxu0 0
    %964 = vmatprep.subr.bf16.mxu0 0
    %965 = vmatpush1.bf16.msra.mxu0 0
    %966 = vmatprep.subr.bf16.mxu0 0
    %967 = vmatpush1.bf16.msra.mxu0 0
    %968 = vmatprep.subr.bf16.mxu0 0
    %969 = vmatpush1.bf16.msra.mxu0 0
    %970 = vmatprep.subr.bf16.mxu0 0
    %971 = vmatpush1.bf16.msra.mxu0 %v951
    %972 = vmatprep.subr.bf16.mxu0 0
    %973 = vmatpush2.bf16.msra.mxu0 0
    %974 = vmatprep.subr.bf16.mxu0 0
    %975 = vmatpush2.bf16.msra.mxu0 0
    %976 = vmatprep.subr.bf16.mxu0 0
    %977 = vmatpush2.bf16.msra.mxu0 0
    %978 = vmatprep.subr.bf16.mxu0 0
    %979 = vmatpush2.bf16.msra.mxu0 0
    %980 = vmatprep.subr.bf16.mxu0 0
    %981 = vmatpush2.bf16.msra.mxu0 0
    %982 = vmatprep.subr.bf16.mxu0 0
    %983 = vmatpush2.bf16.msra.mxu0 0
    %984 = vmatprep.subr.bf16.mxu0 0
    %985 = vmatpush2.bf16.msra.mxu0 0
    %986 = vmatprep.subr.bf16.mxu0 0
    %987 = vmatpush2.bf16.msra.mxu0 0
    %988 = vmatprep.mubr.bf16.mxu0 0
    %989 = vmatmul.mubr.bf16.gmra.mxu0 %v954
    %v990 = vpop.f32.mrf.mxu0
    %v991 = vadd.f32 0.0, %v990
    %v992 = vpop.f32.mrf.mxu0
    %v993 = vpop.f32.mrf.mxu0
    %v994 = vpop.f32.mrf.mxu0
    %995 = vdwg.mxu0
    %v998 = vunpack.c.l.b16 %v779
    %v999 = vunpack.c.l.b16 %v780
    %v1000 = vpack.c.b16 %v999, %v998
    %v1003 = vsel %vm610, %v778, 0
    %1005 = vmatprep.subr.bf16.mxu0 0
    %1006 = vmatpush1.bf16.msra.mxu0 0
    %1007 = vmatprep.subr.bf16.mxu0 0
    %1008 = vmatpush1.bf16.msra.mxu0 0
    %1009 = vmatprep.subr.bf16.mxu0 0
    %1010 = vmatpush1.bf16.msra.mxu0 0
    %1011 = vmatprep.subr.bf16.mxu0 0
    %1012 = vmatpush1.bf16.msra.mxu0 0
    %1013 = vmatprep.subr.bf16.mxu0 0
    %1014 = vmatpush1.bf16.msra.mxu0 0
    %1015 = vmatprep.subr.bf16.mxu0 0
    %1016 = vmatpush1.bf16.msra.mxu0 0
    %1017 = vmatprep.subr.bf16.mxu0 0
    %1018 = vmatpush1.bf16.msra.mxu0 0
    %1019 = vmatprep.subr.bf16.mxu0 0
    %1020 = vmatpush1.bf16.msra.mxu0 %v1000
    %1021 = vmatprep.subr.bf16.mxu0 0
    %1022 = vmatpush2.bf16.msra.mxu0 0
    %1023 = vmatprep.subr.bf16.mxu0 0
    %1024 = vmatpush2.bf16.msra.mxu0 0
    %1025 = vmatprep.subr.bf16.mxu0 0
    %1026 = vmatpush2.bf16.msra.mxu0 0
    %1027 = vmatprep.subr.bf16.mxu0 0
    %1028 = vmatpush2.bf16.msra.mxu0 0
    %1029 = vmatprep.subr.bf16.mxu0 0
    %1030 = vmatpush2.bf16.msra.mxu0 0
    %1031 = vmatprep.subr.bf16.mxu0 0
    %1032 = vmatpush2.bf16.msra.mxu0 0
    %1033 = vmatprep.subr.bf16.mxu0 0
    %1034 = vmatpush2.bf16.msra.mxu0 0
    %1035 = vmatprep.subr.bf16.mxu0 0
    %1036 = vmatpush2.bf16.msra.mxu0 0
    %1037 = vmatprep.mubr.bf16.mxu0 0
    %1038 = vmatmul.mubr.bf16.gmra.mxu0 %v1003
    %v1039 = vpop.f32.mrf.mxu0
    %v1040 = vadd.f32 %v991, %v1039
    %v1041 = vpop.f32.mrf.mxu0
    %v1042 = vpop.f32.mrf.mxu0
    %v1043 = vpop.f32.mrf.mxu0
    %1044 = vdwg.mxu0
    %v1046 = vsel %vm610, %v297, 0
    %v1049 = vsel %vm610, %v359, 0
    %1051 = vmatprep.subr.mxu0 0.0
    %1052 = vmatpush1.xpose.msra.mxu0 0.0
    %1053 = vmatprep.subr.mxu0 0.0
    %1054 = vmatpush1.xpose.msra.mxu0 0.0
    %1055 = vmatprep.subr.mxu0 0.0
    %1056 = vmatpush1.xpose.msra.mxu0 0.0
    %1057 = vmatprep.subr.mxu0 0.0
    %1058 = vmatpush1.xpose.msra.mxu0 0.0
    %1059 = vmatprep.subr.mxu0 0.0
    %1060 = vmatpush1.xpose.msra.mxu0 0.0
    %1061 = vmatprep.subr.mxu0 0.0
    %1062 = vmatpush1.xpose.msra.mxu0 0.0
    %1063 = vmatprep.subr.mxu0 0.0
    %1064 = vmatpush1.xpose.msra.mxu0 0.0
    %1065 = vmatprep.subr.mxu0 0.0
    %1066 = vmatpush1.xpose.msra.mxu0 0.0
    %1067 = vmatprep.subr.mxu0 0.0
    %1068 = vmatpush1.xpose.msra.mxu0 0.0
    %1069 = vmatprep.subr.mxu0 0.0
    %1070 = vmatpush1.xpose.msra.mxu0 0.0
    %1071 = vmatprep.subr.mxu0 0.0
    %1072 = vmatpush1.xpose.msra.mxu0 0.0
    %1073 = vmatprep.subr.mxu0 0.0
    %1074 = vmatpush1.xpose.msra.mxu0 0.0
    %1075 = vmatprep.subr.mxu0 0.0
    %1076 = vmatpush1.xpose.msra.mxu0 0.0
    %1077 = vmatprep.subr.mxu0 0.0
    %1078 = vmatpush1.xpose.msra.mxu0 0.0
    %1079 = vmatprep.subr.mxu0 0.0
    %1080 = vmatpush1.xpose.msra.mxu0 0.0
    %1081 = vmatprep.subr.mxu0 0.0
    %1082 = vmatpush1.xpose.msra.mxu0 %v1049
    %1083 = vmatprep.subr.mxu0 0.0
    %1084 = vmatpush2.xpose.msra.mxu0 0.0
    %1085 = vmatprep.subr.mxu0 0.0
    %1086 = vmatpush2.xpose.msra.mxu0 0.0
    %1087 = vmatprep.subr.mxu0 0.0
    %1088 = vmatpush2.xpose.msra.mxu0 0.0
    %1089 = vmatprep.subr.mxu0 0.0
    %1090 = vmatpush2.xpose.msra.mxu0 0.0
    %1091 = vmatprep.subr.mxu0 0.0
    %1092 = vmatpush2.xpose.msra.mxu0 0.0
    %1093 = vmatprep.subr.mxu0 0.0
    %1094 = vmatpush2.xpose.msra.mxu0 0.0
    %1095 = vmatprep.subr.mxu0 0.0
    %1096 = vmatpush2.xpose.msra.mxu0 0.0
    %1097 = vmatprep.subr.mxu0 0.0
    %1098 = vmatpush2.xpose.msra.mxu0 0.0
    %1099 = vmatprep.subr.mxu0 0.0
    %1100 = vmatpush2.xpose.msra.mxu0 0.0
    %1101 = vmatprep.subr.mxu0 0.0
    %1102 = vmatpush2.xpose.msra.mxu0 0.0
    %1103 = vmatprep.subr.mxu0 0.0
    %1104 = vmatpush2.xpose.msra.mxu0 0.0
    %1105 = vmatprep.subr.mxu0 0.0
    %1106 = vmatpush2.xpose.msra.mxu0 0.0
    %1107 = vmatprep.subr.mxu0 0.0
    %1108 = vmatpush2.xpose.msra.mxu0 0.0
    %1109 = vmatprep.subr.mxu0 0.0
    %1110 = vmatpush2.xpose.msra.mxu0 0.0
    %1111 = vmatprep.subr.mxu0 0.0
    %1112 = vmatpush2.xpose.msra.mxu0 0.0
    %1113 = vmatprep.subr.mxu0 0.0
    %1114 = vmatpush2.xpose.msra.mxu0 0.0
    %1115 = vmatprep.mubr.f32.mxu0 0.0
    %1116 = vmatmul.mubr.f32.gmra.mxu0 %v1046
    %v1117 = vpop.f32.mrf.mxu0
    %v1118 = vadd.f32 0.0, %v1117
    %v1119 = vpop.f32.mrf.mxu0
    %1120 = vdwg.mxu0
    %v1121 = vmul.f32 %v1118, 0.25
    %v1122 = vlaneseq
    %v1123 = vshrl.u32 %v1122, 7
    %v1124 = vsub.s32 1, %v1123
    %v1125 = vrot.slane %v234, %v1124
    %v1126 = vadd.f32 %v1121, %v1125
    %v1127 = vsel %vm693, %v1126, -inf
    %1128 = vmax.xlane.f32.xlu0 %v1127
    %v1129 = vpop.xlane.xlu0 %1128
    %v1130 = vsub.f32 %v1126, %v1129
    %v1131 = vmul.f32 %v1130, 1.442695
    %v1132 = vpow.pop %v1131
    %v1133 = vsel %vm693, %v1132, 0.0
    %1134 = vadd.xlane.f32.xlu0 %v1133
    %v1135 = vpop.xlane.xlu0 %1134
    %v1136 = vrcp.pop %v1135
    %v1137 = vmul.f32 %v1132, %v1136
    %v1139 = vsel %vm693, %v1137, 0
    %1141 = vmatprep.subr.mxu0 0.0
    %1142 = vmatpush1.msra.mxu0 0.0
    %1143 = vmatprep.subr.mxu0 0.0
    %1144 = vmatpush1.msra.mxu0 0.0
    %1145 = vmatprep.subr.mxu0 0.0
    %1146 = vmatpush1.msra.mxu0 0.0
    %1147 = vmatprep.subr.mxu0 0.0
    %1148 = vmatpush1.msra.mxu0 0.0
    %1149 = vmatprep.subr.mxu0 0.0
    %1150 = vmatpush1.msra.mxu0 0.0
    %1151 = vmatprep.subr.mxu0 0.0
    %1152 = vmatpush1.msra.mxu0 0.0
    %1153 = vmatprep.subr.mxu0 0.0
    %1154 = vmatpush1.msra.mxu0 0.0
    %1155 = vmatprep.subr.mxu0 0.0
    %1156 = vmatpush1.msra.mxu0 0.0
    %1157 = vmatprep.subr.mxu0 0.0
    %1158 = vmatpush1.msra.mxu0 0.0
    %1159 = vmatprep.subr.mxu0 0.0
    %1160 = vmatpush1.msra.mxu0 0.0
    %1161 = vmatprep.subr.mxu0 0.0
    %1162 = vmatpush1.msra.mxu0 0.0
    %1163 = vmatprep.subr.mxu0 0.0
    %1164 = vmatpush1.msra.mxu0 0.0
    %1165 = vmatprep.subr.mxu0 0.0
    %1166 = vmatpush1.msra.mxu0 0.0
    %1167 = vmatprep.subr.mxu0 0.0
    %1168 = vmatpush1.msra.mxu0 0.0
    %1169 = vmatprep.subr.mxu0 0.0
    %1170 = vmatpush1.msra.mxu0 0.0
    %1171 = vmatprep.subr.mxu0 0.0
    %1172 = vmatpush1.msra.mxu0 %v421
    %1173 = vmatprep.subr.mxu0 0.0
    %1174 = vmatpush2.msra.mxu0 0.0
    %1175 = vmatprep.subr.mxu0 0.0
    %1176 = vmatpush2.msra.mxu0 0.0
    %1177 = vmatprep.subr.mxu0 0.0
    %1178 = vmatpush2.msra.mxu0 0.0
    %1179 = vmatprep.subr.mxu0 0.0
    %1180 = vmatpush2.msra.mxu0 0.0
    %1181 = vmatprep.subr.mxu0 0.0
    %1182 = vmatpush2.msra.mxu0 0.0
    %1183 = vmatprep.subr.mxu0 0.0
    %1184 = vmatpush2.msra.mxu0 0.0
    %1185 = vmatprep.subr.mxu0 0.0
    %1186 = vmatpush2.msra.mxu0 0.0
    %1187 = vmatprep.subr.mxu0 0.0
    %1188 = vmatpush2.msra.mxu0 0.0
    %1189 = vmatprep.subr.mxu0 0.0
    %1190 = vmatpush2.msra.mxu0 0.0
    %1191 = vmatprep.subr.mxu0 0.0
    %1192 = vmatpush2.msra.mxu0 0.0
    %1193 = vmatprep.subr.mxu0 0.0
    %1194 = vmatpush2.msra.mxu0 0.0
    %1195 = vmatprep.subr.mxu0 0.0
    %1196 = vmatpush2.msra.mxu0 0.0
    %1197 = vmatprep.subr.mxu0 0.0
    %1198 = vmatpush2.msra.mxu0 0.0
    %1199 = vmatprep.subr.mxu0 0.0
    %1200 = vmatpush2.msra.mxu0 0.0
    %1201 = vmatprep.subr.mxu0 0.0
    %1202 = vmatpush2.msra.mxu0 0.0
    %1203 = vmatprep.subr.mxu0 0.0
    %1204 = vmatpush2.msra.mxu0 0.0
    %1205 = vmatprep.mubr.f32.mxu0 0.0
    %1206 = vmatmul.mubr.f32.gmra.mxu0 %v1139
    %v1207 = vpop.f32.mrf.mxu0
    %v1208 = vadd.f32 0.0, %v1207
    %v1209 = vpop.f32.mrf.mxu0
    %1210 = vdwg.mxu0
    %v1211 = vpack.c.bf16 %v1208, %v1208
    %v1213 = vsel %vm610, %v483, 0
    %v1216 = vsel %vm610, %v545, 0
    %1218 = vmatprep.subr.mxu0 0.0
    %1219 = vmatpush1.xpose.msra.mxu0 0.0
    %1220 = vmatprep.subr.mxu0 0.0
    %1221 = vmatpush1.xpose.msra.mxu0 0.0
    %1222 = vmatprep.subr.mxu0 0.0
    %1223 = vmatpush1.xpose.msra.mxu0 0.0
    %1224 = vmatprep.subr.mxu0 0.0
    %1225 = vmatpush1.xpose.msra.mxu0 0.0
    %1226 = vmatprep.subr.mxu0 0.0
    %1227 = vmatpush1.xpose.msra.mxu0 0.0
    %1228 = vmatprep.subr.mxu0 0.0
    %1229 = vmatpush1.xpose.msra.mxu0 0.0
    %1230 = vmatprep.subr.mxu0 0.0
    %1231 = vmatpush1.xpose.msra.mxu0 0.0
    %1232 = vmatprep.subr.mxu0 0.0
    %1233 = vmatpush1.xpose.msra.mxu0 0.0
    %1234 = vmatprep.subr.mxu0 0.0
    %1235 = vmatpush1.xpose.msra.mxu0 0.0
    %1236 = vmatprep.subr.mxu0 0.0
    %1237 = vmatpush1.xpose.msra.mxu0 0.0
    %1238 = vmatprep.subr.mxu0 0.0
    %1239 = vmatpush1.xpose.msra.mxu0 0.0
    %1240 = vmatprep.subr.mxu0 0.0
    %1241 = vmatpush1.xpose.msra.mxu0 0.0
    %1242 = vmatprep.subr.mxu0 0.0
    %1243 = vmatpush1.xpose.msra.mxu0 0.0
    %1244 = vmatprep.subr.mxu0 0.0
    %1245 = vmatpush1.xpose.msra.mxu0 0.0
    %1246 = vmatprep.subr.mxu0 0.0
    %1247 = vmatpush1.xpose.msra.mxu0 0.0
    %1248 = vmatprep.subr.mxu0 0.0
    %1249 = vmatpush1.xpose.msra.mxu0 %v1216
    %1250 = vmatprep.subr.mxu0 0.0
    %1251 = vmatpush2.xpose.msra.mxu0 0.0
    %1252 = vmatprep.subr.mxu0 0.0
    %1253 = vmatpush2.xpose.msra.mxu0 0.0
    %1254 = vmatprep.subr.mxu0 0.0
    %1255 = vmatpush2.xpose.msra.mxu0 0.0
    %1256 = vmatprep.subr.mxu0 0.0
    %1257 = vmatpush2.xpose.msra.mxu0 0.0
    %1258 = vmatprep.subr.mxu0 0.0
    %1259 = vmatpush2.xpose.msra.mxu0 0.0
    %1260 = vmatprep.subr.mxu0 0.0
    %1261 = vmatpush2.xpose.msra.mxu0 0.0
    %1262 = vmatprep.subr.mxu0 0.0
    %1263 = vmatpush2.xpose.msra.mxu0 0.0
    %1264 = vmatprep.subr.mxu0 0.0
    %1265 = vmatpush2.xpose.msra.mxu0 0.0
    %1266 = vmatprep.subr.mxu0 0.0
    %1267 = vmatpush2.xpose.msra.mxu0 0.0
    %1268 = vmatprep.subr.mxu0 0.0
    %1269 = vmatpush2.xpose.msra.mxu0 0.0
    %1270 = vmatprep.subr.mxu0 0.0
    %1271 = vmatpush2.xpose.msra.mxu0 0.0
    %1272 = vmatprep.subr.mxu0 0.0
    %1273 = vmatpush2.xpose.msra.mxu0 0.0
    %1274 = vmatprep.subr.mxu0 0.0
    %1275 = vmatpush2.xpose.msra.mxu0 0.0
    %1276 = vmatprep.subr.mxu0 0.0
    %1277 = vmatpush2.xpose.msra.mxu0 0.0
    %1278 = vmatprep.subr.mxu0 0.0
    %1279 = vmatpush2.xpose.msra.mxu0 0.0
    %1280 = vmatprep.subr.mxu0 0.0
    %1281 = vmatpush2.xpose.msra.mxu0 0.0
    %1282 = vmatprep.mubr.f32.mxu0 0.0
    %1283 = vmatmul.mubr.f32.gmra.mxu0 %v1213
    %v1284 = vpop.f32.mrf.mxu0
    %v1285 = vadd.f32 0.0, %v1284
    %v1286 = vpop.f32.mrf.mxu0
    %1287 = vdwg.mxu0
    %v1288 = vmul.f32 %v1285, 0.25
    %v1289 = vadd.f32 %v1288, %v1125
    %v1290 = vsel %vm693, %v1289, -inf
    %1291 = vmax.xlane.f32.xlu0 %v1290
    %v1292 = vpop.xlane.xlu0 %1291
    %v1293 = vsub.f32 %v1289, %v1292
    %v1294 = vmul.f32 %v1293, 1.442695
    %v1295 = vpow.pop %v1294
    %v1296 = vsel %vm693, %v1295, 0.0
    %1297 = vadd.xlane.f32.xlu0 %v1296
    %v1298 = vpop.xlane.xlu0 %1297
    %v1299 = vrcp.pop %v1298
    %v1300 = vmul.f32 %v1295, %v1299
    %v1302 = vsel %vm693, %v1300, 0
    %1304 = vmatprep.subr.mxu0 0.0
    %1305 = vmatpush1.msra.mxu0 0.0
    %1306 = vmatprep.subr.mxu0 0.0
    %1307 = vmatpush1.msra.mxu0 0.0
    %1308 = vmatprep.subr.mxu0 0.0
    %1309 = vmatpush1.msra.mxu0 0.0
    %1310 = vmatprep.subr.mxu0 0.0
    %1311 = vmatpush1.msra.mxu0 0.0
    %1312 = vmatprep.subr.mxu0 0.0
    %1313 = vmatpush1.msra.mxu0 0.0
    %1314 = vmatprep.subr.mxu0 0.0
    %1315 = vmatpush1.msra.mxu0 0.0
    %1316 = vmatprep.subr.mxu0 0.0
    %1317 = vmatpush1.msra.mxu0 0.0
    %1318 = vmatprep.subr.mxu0 0.0
    %1319 = vmatpush1.msra.mxu0 0.0
    %1320 = vmatprep.subr.mxu0 0.0
    %1321 = vmatpush1.msra.mxu0 0.0
    %1322 = vmatprep.subr.mxu0 0.0
    %1323 = vmatpush1.msra.mxu0 0.0
    %1324 = vmatprep.subr.mxu0 0.0
    %1325 = vmatpush1.msra.mxu0 0.0
    %1326 = vmatprep.subr.mxu0 0.0
    %1327 = vmatpush1.msra.mxu0 0.0
    %1328 = vmatprep.subr.mxu0 0.0
    %1329 = vmatpush1.msra.mxu0 0.0
    %1330 = vmatprep.subr.mxu0 0.0
    %1331 = vmatpush1.msra.mxu0 0.0
    %1332 = vmatprep.subr.mxu0 0.0
    %1333 = vmatpush1.msra.mxu0 0.0
    %1334 = vmatprep.subr.mxu0 0.0
    %1335 = vmatpush1.msra.mxu0 %v607
    %1336 = vmatprep.subr.mxu0 0.0
    %1337 = vmatpush2.msra.mxu0 0.0
    %1338 = vmatprep.subr.mxu0 0.0
    %1339 = vmatpush2.msra.mxu0 0.0
    %1340 = vmatprep.subr.mxu0 0.0
    %1341 = vmatpush2.msra.mxu0 0.0
    %1342 = vmatprep.subr.mxu0 0.0
    %1343 = vmatpush2.msra.mxu0 0.0
    %1344 = vmatprep.subr.mxu0 0.0
    %1345 = vmatpush2.msra.mxu0 0.0
    %1346 = vmatprep.subr.mxu0 0.0
    %1347 = vmatpush2.msra.mxu0 0.0
    %1348 = vmatprep.subr.mxu0 0.0
    %1349 = vmatpush2.msra.mxu0 0.0
    %1350 = vmatprep.subr.mxu0 0.0
    %1351 = vmatpush2.msra.mxu0 0.0
    %1352 = vmatprep.subr.mxu0 0.0
    %1353 = vmatpush2.msra.mxu0 0.0
    %1354 = vmatprep.subr.mxu0 0.0
    %1355 = vmatpush2.msra.mxu0 0.0
    %1356 = vmatprep.subr.mxu0 0.0
    %1357 = vmatpush2.msra.mxu0 0.0
    %1358 = vmatprep.subr.mxu0 0.0
    %1359 = vmatpush2.msra.mxu0 0.0
    %1360 = vmatprep.subr.mxu0 0.0
    %1361 = vmatpush2.msra.mxu0 0.0
    %1362 = vmatprep.subr.mxu0 0.0
    %1363 = vmatpush2.msra.mxu0 0.0
    %1364 = vmatprep.subr.mxu0 0.0
    %1365 = vmatpush2.msra.mxu0 0.0
    %1366 = vmatprep.subr.mxu0 0.0
    %1367 = vmatpush2.msra.mxu0 0.0
    %1368 = vmatprep.mubr.f32.mxu0 0.0
    %1369 = vmatmul.mubr.f32.gmra.mxu0 %v1302
    %v1370 = vpop.f32.mrf.mxu0
    %v1371 = vadd.f32 0.0, %v1370
    %v1372 = vpop.f32.mrf.mxu0
    %1373 = vdwg.mxu0
    %v1374 = vpack.c.bf16 %v1371, %v1371
    %v1376 = vsel %vm610, %v1374, 0
    %1378 = vmatprep.subr.bf16.mxu0 0
    %1379 = vmatpush1.bf16.msra.mxu0 0
    %1380 = vmatprep.subr.bf16.mxu0 0
    %1381 = vmatpush1.bf16.msra.mxu0 0
    %1382 = vmatprep.subr.bf16.mxu0 0
    %1383 = vmatpush1.bf16.msra.mxu0 0
    %1384 = vmatprep.subr.bf16.mxu0 0
    %1385 = vmatpush1.bf16.msra.mxu0 0
    %1386 = vmatprep.subr.bf16.mxu0 0
    %1387 = vmatpush1.bf16.msra.mxu0 0
    %1388 = vmatprep.subr.bf16.mxu0 0
    %1389 = vmatpush1.bf16.msra.mxu0 0
    %1390 = vmatprep.subr.bf16.mxu0 0
    %1391 = vmatpush1.bf16.msra.mxu0 0
    %1392 = vmatprep.subr.bf16.mxu0 0
    %1393 = vmatpush1.bf16.msra.mxu0 %v951
    %1394 = vmatprep.subr.bf16.mxu0 0
    %1395 = vmatpush2.bf16.msra.mxu0 0
    %1396 = vmatprep.subr.bf16.mxu0 0
    %1397 = vmatpush2.bf16.msra.mxu0 0
    %1398 = vmatprep.subr.bf16.mxu0 0
    %1399 = vmatpush2.bf16.msra.mxu0 0
    %1400 = vmatprep.subr.bf16.mxu0 0
    %1401 = vmatpush2.bf16.msra.mxu0 0
    %1402 = vmatprep.subr.bf16.mxu0 0
    %1403 = vmatpush2.bf16.msra.mxu0 0
    %1404 = vmatprep.subr.bf16.mxu0 0
    %1405 = vmatpush2.bf16.msra.mxu0 0
    %1406 = vmatprep.subr.bf16.mxu0 0
    %1407 = vmatpush2.bf16.msra.mxu0 0
    %1408 = vmatprep.subr.bf16.mxu0 0
    %1409 = vmatpush2.bf16.msra.mxu0 0
    %1410 = vmatprep.mubr.bf16.mxu0 0
    %1411 = vmatmul.mubr.bf16.gmra.mxu0 %v1376
    %v1412 = vpop.f32.mrf.mxu0
    %v1413 = vadd.f32 0.0, %v1412
    %v1414 = vpop.f32.mrf.mxu0
    %v1415 = vpop.f32.mrf.mxu0
    %v1416 = vpop.f32.mrf.mxu0
    %1417 = vdwg.mxu0
    %v1419 = vsel %vm610, %v1211, 0
    %1421 = vmatprep.subr.bf16.mxu0 0
    %1422 = vmatpush1.bf16.msra.mxu0 0
    %1423 = vmatprep.subr.bf16.mxu0 0
    %1424 = vmatpush1.bf16.msra.mxu0 0
    %1425 = vmatprep.subr.bf16.mxu0 0
    %1426 = vmatpush1.bf16.msra.mxu0 0
    %1427 = vmatprep.subr.bf16.mxu0 0
    %1428 = vmatpush1.bf16.msra.mxu0 0
    %1429 = vmatprep.subr.bf16.mxu0 0
    %1430 = vmatpush1.bf16.msra.mxu0 0
    %1431 = vmatprep.subr.bf16.mxu0 0
    %1432 = vmatpush1.bf16.msra.mxu0 0
    %1433 = vmatprep.subr.bf16.mxu0 0
    %1434 = vmatpush1.bf16.msra.mxu0 0
    %1435 = vmatprep.subr.bf16.mxu0 0
    %1436 = vmatpush1.bf16.msra.mxu0 %v1000
    %1437 = vmatprep.subr.bf16.mxu0 0
    %1438 = vmatpush2.bf16.msra.mxu0 0
    %1439 = vmatprep.subr.bf16.mxu0 0
    %1440 = vmatpush2.bf16.msra.mxu0 0
    %1441 = vmatprep.subr.bf16.mxu0 0
    %1442 = vmatpush2.bf16.msra.mxu0 0
    %1443 = vmatprep.subr.bf16.mxu0 0
    %1444 = vmatpush2.bf16.msra.mxu0 0
    %1445 = vmatprep.subr.bf16.mxu0 0
    %1446 = vmatpush2.bf16.msra.mxu0 0
    %1447 = vmatprep.subr.bf16.mxu0 0
    %1448 = vmatpush2.bf16.msra.mxu0 0
    %1449 = vmatprep.subr.bf16.mxu0 0
    %1450 = vmatpush2.bf16.msra.mxu0 0
    %1451 = vmatprep.subr.bf16.mxu0 0
    %1452 = vmatpush2.bf16.msra.mxu0 0
    %1453 = vmatprep.mubr.bf16.mxu0 0
    %1454 = vmatmul.mubr.bf16.gmra.mxu0 %v1419
    %v1455 = vpop.f32.mrf.mxu0
    %v1456 = vadd.f32 %v1413, %v1455
    %v1457 = vpop.f32.mrf.mxu0
    %v1458 = vpop.f32.mrf.mxu0
    %v1459 = vpop.f32.mrf.mxu0
    %1460 = vdwg.mxu0
    %v1461 = vlaneseq
    %v1462 = vshrl.u32 %v1461, 7
    %v1463 = vsub.s32 6, %v1462
    %v1464 = vrot.slane %v44, %v1463
    %v1465 = vadd.f32 %v1040, %v1464
    %v1466 = vadd.f32 %v1456, %v1464
    %v1467 = vadd.f32 %v229, %v1465
    %v1468 = vadd.f32 %v230, %v1466
    %v1469 = vsel %vm191, %v1467, 0.0
    %1470 = vadd.xlane.f32.xlu0 %v1469
    %v1471 = vpop.xlane.xlu0 %1470
    %v1472 = vsel %vm191, %v1468, 0.0
    %1473 = vadd.xlane.f32.xlu0 %v1472
    %v1474 = vpop.xlane.xlu0 %1473
    %v1475 = vmul.f32 %v1471, %v198
    %v1476 = vmul.f32 %v1474, %v198
    %v1477 = vsub.f32 %v1467, %v1475
    %v1478 = vsub.f32 %v1468, %v1476
    %v1479 = vmul.f32 %v1477, %v1477
    %v1480 = vmul.f32 %v1478, %v1478
    %v1481 = vsel %vm191, %v1479, 0.0
    %1482 = vadd.xlane.f32.xlu0 %v1481
    %v1483 = vpop.xlane.xlu0 %1482
    %v1484 = vsel %vm191, %v1480, 0.0
    %1485 = vadd.xlane.f32.xlu0 %v1484
    %v1486 = vpop.xlane.xlu0 %1485
    %v1487 = vmul.f32 %v1483, %v198
    %v1488 = vmul.f32 %v1486, %v198
    %v1489 = vadd.f32 %v1487, 1e-12
    %v1490 = vadd.f32 %v1488, 1e-12
    %v1491 = vrsqrt.pop %v1489
    %v1492 = vrsqrt.pop %v1490
    %v1493 = vmul.f32 %v1477, %v1491
    %v1494 = vmul.f32 %v1478, %v1492
    %v1495 = vlaneseq
    %v1496 = vshrl.u32 %v1495, 7
    %v1497 = vsub.s32 0, %v1496
    %v1498 = vrot.slane %v45, %v1497
    %v1499 = vmul.f32 %v1493, %v1498
    %v1500 = vmul.f32 %v1494, %v1498
    %v1501 = vlaneseq
    %v1502 = vshrl.u32 %v1501, 7
    %v1503 = vsub.s32 4, %v1502
    %v1504 = vrot.slane %v45, %v1503
    %v1505 = vadd.f32 %v1499, %v1504
    %v1506 = vadd.f32 %v1500, %v1504
    %v1507 = vpack.c.bf16 %v1506, %v1505
    %v1508 = vld [vmem:[%s9] sm:$0xf]
    %v1509 = vld [vmem:[%s9 + $0x4] sm:$0xf]
    %v1510 = vld [vmem:[%s9 + $0x8] sm:$0xf]
    %v1511 = vld [vmem:[%s9 + $0xc] sm:$0xf]
    %v1512 = vlaneseq
    %v1513 = vshrl.u32 %v1512, 7
    %v1514 = vsub.s32 0, %v1513
    %v1515 = vrot.slane %v46, %v1514
    %v1520 = vunpack.c.l.b16 %v1508
    %v1521 = vunpack.c.l.b16 %v1509
    %v1522 = vunpack.c.l.b16 %v1510
    %v1523 = vunpack.c.l.b16 %v1511
    %v1524 = vpack.c.b16 %v1521, %v1520
    %v1525 = vpack.c.b16 %v1523, %v1522
    %v1529 = vsel %vm191, %v1507, 0
    %1531 = vmatprep.subr.bf16.mxu0 0
    %1532 = vmatpush1.bf16.msra.mxu0 0
    %1533 = vmatprep.subr.bf16.mxu0 0
    %1534 = vmatpush1.bf16.msra.mxu0 0
    %1535 = vmatprep.subr.bf16.mxu0 0
    %1536 = vmatpush1.bf16.msra.mxu0 0
    %1537 = vmatprep.subr.bf16.mxu0 0
    %1538 = vmatpush1.bf16.msra.mxu0 0
    %1539 = vmatprep.subr.bf16.mxu0 0
    %1540 = vmatpush1.bf16.msra.mxu0 0
    %1541 = vmatprep.subr.bf16.mxu0 0
    %1542 = vmatpush1.bf16.msra.mxu0 0
    %1543 = vmatprep.subr.bf16.mxu0 0
    %1544 = vmatpush1.bf16.msra.mxu0 %v1525
    %1545 = vmatprep.subr.bf16.mxu0 0
    %1546 = vmatpush1.bf16.msra.mxu0 %v1524
    %1547 = vmatprep.subr.bf16.mxu0 0
    %1548 = vmatpush2.bf16.msra.mxu0 0
    %1549 = vmatprep.subr.bf16.mxu0 0
    %1550 = vmatpush2.bf16.msra.mxu0 0
    %1551 = vmatprep.subr.bf16.mxu0 0
    %1552 = vmatpush2.bf16.msra.mxu0 0
    %1553 = vmatprep.subr.bf16.mxu0 0
    %1554 = vmatpush2.bf16.msra.mxu0 0
    %1555 = vmatprep.subr.bf16.mxu0 0
    %1556 = vmatpush2.bf16.msra.mxu0 0
    %1557 = vmatprep.subr.bf16.mxu0 0
    %1558 = vmatpush2.bf16.msra.mxu0 0
    %1559 = vmatprep.subr.bf16.mxu0 0
    %1560 = vmatpush2.bf16.msra.mxu0 0
    %1561 = vmatprep.subr.bf16.mxu0 0
    %1562 = vmatpush2.bf16.msra.mxu0 0
    %1563 = vmatprep.mubr.bf16.mxu0 0
    %1564 = vmatmul.mubr.bf16.gmra.mxu0 %v1529
    %v1565 = vpop.f32.mrf.mxu0
    %v1566 = vadd.f32 %v1515, %v1565
    %v1567 = vpop.f32.mrf.mxu0
    %v1568 = vpop.f32.mrf.mxu0
    %v1569 = vadd.f32 %v1515, %v1568
    %v1570 = vpop.f32.mrf.mxu0
    %1571 = vdwg.mxu0
    %v1572 = vmul.f32 %v1566, 0.5
    %v1573 = vmul.f32 %v1569, 0.5
    %v1574 = vmul.f32 %v1566, 0.044715
    %v1575 = vmul.f32 %v1569, 0.044715
    %v1576 = vmul.f32 %v1574, %v1566
    %v1577 = vmul.f32 %v1575, %v1569
    %v1578 = vmul.f32 %v1576, %v1566
    %v1579 = vmul.f32 %v1577, %v1569
    %v1580 = vadd.f32 %v1566, %v1578
    %v1581 = vadd.f32 %v1569, %v1579
    %v1582 = vmul.f32 %v1580, 0.7978846
    %v1583 = vmul.f32 %v1581, 0.7978846
    %v1584 = vtanh.pop %v1582
    %v1585 = vtanh.pop %v1583
    %v1586 = vadd.f32 %v1584, 1.0
    %v1587 = vadd.f32 %v1585, 1.0
    %v1588 = vmul.f32 %v1572, %v1586
    %v1589 = vmul.f32 %v1573, %v1587
    %v1590 = vpack.c.bf16 %v1589, %v1588
    %v1591 = vld [vmem:[%s10] sm:$0xf]
    %v1592 = vld [vmem:[%s10 + $0x4] sm:$0xf]
    %v1593 = vld [vmem:[%s10 + $0x8] sm:$0xf]
    %v1594 = vld [vmem:[%s10 + $0xc] sm:$0xf]
    %v1595 = vld [vmem:[%s10 + $0x10] sm:$0xf]
    %v1596 = vld [vmem:[%s10 + $0x14] sm:$0xf]
    %v1597 = vld [vmem:[%s10 + $0x18] sm:$0xf]
    %v1598 = vld [vmem:[%s10 + $0x1c] sm:$0xf]
    %v1599 = vlaneseq
    %v1600 = vshrl.u32 %v1599, 7
    %v1601 = vsub.s32 2, %v1600
    %v1602 = vrot.slane %v46, %v1601
    %v1611 = vunpack.c.l.b16 %v1591
    %v1612 = vunpack.c.l.b16 %v1592
    %v1613 = vunpack.c.l.b16 %v1593
    %v1614 = vunpack.c.l.b16 %v1594
    %v1615 = vunpack.c.l.b16 %v1595
    %v1616 = vunpack.c.l.b16 %v1596
    %v1617 = vunpack.c.l.b16 %v1597
    %v1618 = vunpack.c.l.b16 %v1598
    %v1619 = vpack.c.b16 %v1612, %v1611
    %v1620 = vpack.c.b16 %v1614, %v1613
    %v1621 = vpack.c.b16 %v1616, %v1615
    %v1622 = vpack.c.b16 %v1618, %v1617
    %vm1627 = vcmask 523264
    %v1629 = vsel %vm1627, %v1590, 0
    %1631 = vmatprep.subr.bf16.mxu0 0
    %1632 = vmatpush1.bf16.msra.mxu0 0
    %1633 = vmatprep.subr.bf16.mxu0 0
    %1634 = vmatpush1.bf16.msra.mxu0 0
    %1635 = vmatprep.subr.bf16.mxu0 0
    %1636 = vmatpush1.bf16.msra.mxu0 0
    %1637 = vmatprep.subr.bf16.mxu0 0
    %1638 = vmatpush1.bf16.msra.mxu0 0
    %1639 = vmatprep.subr.bf16.mxu0 0
    %1640 = vmatpush1.bf16.msra.mxu0 %v1622
    %1641 = vmatprep.subr.bf16.mxu0 0
    %1642 = vmatpush1.bf16.msra.mxu0 %v1621
    %1643 = vmatprep.subr.bf16.mxu0 0
    %1644 = vmatpush1.bf16.msra.mxu0 %v1620
    %1645 = vmatprep.subr.bf16.mxu0 0
    %1646 = vmatpush1.bf16.msra.mxu0 %v1619
    %1647 = vmatprep.subr.bf16.mxu0 0
    %1648 = vmatpush2.bf16.msra.mxu0 0
    %1649 = vmatprep.subr.bf16.mxu0 0
    %1650 = vmatpush2.bf16.msra.mxu0 0
    %1651 = vmatprep.subr.bf16.mxu0 0
    %1652 = vmatpush2.bf16.msra.mxu0 0
    %1653 = vmatprep.subr.bf16.mxu0 0
    %1654 = vmatpush2.bf16.msra.mxu0 0
    %1655 = vmatprep.subr.bf16.mxu0 0
    %1656 = vmatpush2.bf16.msra.mxu0 0
    %1657 = vmatprep.subr.bf16.mxu0 0
    %1658 = vmatpush2.bf16.msra.mxu0 0
    %1659 = vmatprep.subr.bf16.mxu0 0
    %1660 = vmatpush2.bf16.msra.mxu0 0
    %1661 = vmatprep.subr.bf16.mxu0 0
    %1662 = vmatpush2.bf16.msra.mxu0 0
    %1663 = vmatprep.mubr.bf16.mxu0 0
    %1664 = vmatmul.mubr.bf16.gmra.mxu0 %v1629
    %v1665 = vpop.f32.mrf.mxu0
    %v1666 = vadd.f32 %v1602, %v1665
    %v1667 = vpop.f32.mrf.mxu0
    %v1668 = vpop.f32.mrf.mxu0
    %v1669 = vadd.f32 %v1602, %v1668
    %v1670 = vpop.f32.mrf.mxu0
    %1671 = vdwg.mxu0
    %v1672 = vadd.f32 %v1505, %v1666
    %v1673 = vadd.f32 %v1506, %v1669
    %v1674 = vsel %vm191, %v1672, 0.0
    %1675 = vadd.xlane.f32.xlu0 %v1674
    %v1676 = vpop.xlane.xlu0 %1675
    %v1677 = vsel %vm191, %v1673, 0.0
    %1678 = vadd.xlane.f32.xlu0 %v1677
    %v1679 = vpop.xlane.xlu0 %1678
    %v1680 = vmul.f32 %v1676, %v198
    %v1681 = vmul.f32 %v1679, %v198
    %v1682 = vsub.f32 %v1672, %v1680
    %v1683 = vsub.f32 %v1673, %v1681
    %v1684 = vmul.f32 %v1682, %v1682
    %v1685 = vmul.f32 %v1683, %v1683
    %v1686 = vsel %vm191, %v1684, 0.0
    %1687 = vadd.xlane.f32.xlu0 %v1686
    %v1688 = vpop.xlane.xlu0 %1687
    %v1689 = vsel %vm191, %v1685, 0.0
    %1690 = vadd.xlane.f32.xlu0 %v1689
    %v1691 = vpop.xlane.xlu0 %1690
    %v1692 = vmul.f32 %v1688, %v198
    %v1693 = vmul.f32 %v1691, %v198
    %v1694 = vadd.f32 %v1692, 1e-12
    %v1695 = vadd.f32 %v1693, 1e-12
    %v1696 = vrsqrt.pop %v1694
    %v1697 = vrsqrt.pop %v1695
    %v1698 = vmul.f32 %v1682, %v1696
    %v1699 = vmul.f32 %v1683, %v1697
    %v1700 = vlaneseq
    %v1701 = vshrl.u32 %v1700, 7
    %v1702 = vsub.s32 1, %v1701
    %v1703 = vrot.slane %v45, %v1702
    %v1704 = vmul.f32 %v1698, %v1703
    %v1705 = vmul.f32 %v1699, %v1703
    %v1706 = vlaneseq
    %v1707 = vshrl.u32 %v1706, 7
    %v1708 = vsub.s32 5, %v1707
    %v1709 = vrot.slane %v45, %v1708
    %v1710 = vadd.f32 %v1704, %v1709
    %v1711 = vadd.f32 %v1705, %v1709
    %v1712 = vpack.c.bf16 %v1711, %v1710
    %s1713 = scalar_lea.vmem %s7, 96
    %v1714 = vld [vmem:[%s1713] sm:$0xf]
    %v1715 = vld [vmem:[%s1713 + $0x4] sm:$0xf]
    %v1716 = vld [vmem:[%s1713 + $0x8] sm:$0xf]
    %v1717 = vld [vmem:[%s1713 + $0xc] sm:$0xf]
    %v1718 = vlaneseq
    %v1719 = vshrl.u32 %v1718, 7
    %v1720 = vsub.s32 0, %v1719
    %v1721 = vrot.slane %v44, %v1720
    %v1726 = vunpack.c.l.b16 %v1714
    %v1727 = vunpack.c.l.b16 %v1715
    %v1728 = vunpack.c.l.b16 %v1716
    %v1729 = vunpack.c.l.b16 %v1717
    %v1730 = vpack.c.b16 %v1727, %v1726
    %v1731 = vpack.c.b16 %v1729, %v1728
    %v1735 = vsel %vm191, %v1712, 0
    %1737 = vmatprep.subr.bf16.mxu0 0
    %1738 = vmatpush1.bf16.msra.mxu0 0
    %1739 = vmatprep.subr.bf16.mxu0 0
    %1740 = vmatpush1.bf16.msra.mxu0 0
    %1741 = vmatprep.subr.bf16.mxu0 0
    %1742 = vmatpush1.bf16.msra.mxu0 0
    %1743 = vmatprep.subr.bf16.mxu0 0
    %1744 = vmatpush1.bf16.msra.mxu0 0
    %1745 = vmatprep.subr.bf16.mxu0 0
    %1746 = vmatpush1.bf16.msra.mxu0 0
    %1747 = vmatprep.subr.bf16.mxu0 0
    %1748 = vmatpush1.bf16.msra.mxu0 0
    %1749 = vmatprep.subr.bf16.mxu0 0
    %1750 = vmatpush1.bf16.msra.mxu0 %v1731
    %1751 = vmatprep.subr.bf16.mxu0 0
    %1752 = vmatpush1.bf16.msra.mxu0 %v1730
    %1753 = vmatprep.subr.bf16.mxu0 0
    %1754 = vmatpush2.bf16.msra.mxu0 0
    %1755 = vmatprep.subr.bf16.mxu0 0
    %1756 = vmatpush2.bf16.msra.mxu0 0
    %1757 = vmatprep.subr.bf16.mxu0 0
    %1758 = vmatpush2.bf16.msra.mxu0 0
    %1759 = vmatprep.subr.bf16.mxu0 0
    %1760 = vmatpush2.bf16.msra.mxu0 0
    %1761 = vmatprep.subr.bf16.mxu0 0
    %1762 = vmatpush2.bf16.msra.mxu0 0
    %1763 = vmatprep.subr.bf16.mxu0 0
    %1764 = vmatpush2.bf16.msra.mxu0 0
    %1765 = vmatprep.subr.bf16.mxu0 0
    %1766 = vmatpush2.bf16.msra.mxu0 0
    %1767 = vmatprep.subr.bf16.mxu0 0
    %1768 = vmatpush2.bf16.msra.mxu0 0
    %1769 = vmatprep.mubr.bf16.mxu0 0
    %1770 = vmatmul.mubr.bf16.gmra.mxu0 %v1735
    %v1771 = vpop.f32.mrf.mxu0
    %v1772 = vadd.f32 %v1721, %v1771
    %v1773 = vpop.f32.mrf.mxu0
    %v1774 = vpop.f32.mrf.mxu0
    %v1775 = vadd.f32 %v1721, %v1774
    %v1776 = vpop.f32.mrf.mxu0
    %1777 = vdwg.mxu0
    %s1778 = scalar_lea.vmem %s7, 128
    %v1779 = vld [vmem:[%s1778] sm:$0xf]
    %v1780 = vld [vmem:[%s1778 + $0x4] sm:$0xf]
    %v1781 = vld [vmem:[%s1778 + $0x8] sm:$0xf]
    %v1782 = vld [vmem:[%s1778 + $0xc] sm:$0xf]
    %v1783 = vlaneseq
    %v1784 = vshrl.u32 %v1783, 7
    %v1785 = vsub.s32 2, %v1784
    %v1786 = vrot.slane %v44, %v1785
    %v1791 = vunpack.c.l.b16 %v1779
    %v1792 = vunpack.c.l.b16 %v1780
    %v1793 = vunpack.c.l.b16 %v1781
    %v1794 = vunpack.c.l.b16 %v1782
    %v1795 = vpack.c.b16 %v1792, %v1791
    %v1796 = vpack.c.b16 %v1794, %v1793
    %1799 = vmatprep.subr.bf16.mxu0 0
    %1800 = vmatpush1.bf16.msra.mxu0 0
    %1801 = vmatprep.subr.bf16.mxu0 0
    %1802 = vmatpush1.bf16.msra.mxu0 0
    %1803 = vmatprep.subr.bf16.mxu0 0
    %1804 = vmatpush1.bf16.msra.mxu0 0
    %1805 = vmatprep.subr.bf16.mxu0 0
    %1806 = vmatpush1.bf16.msra.mxu0 0
    %1807 = vmatprep.subr.bf16.mxu0 0
    %1808 = vmatpush1.bf16.msra.mxu0 0
    %1809 = vmatprep.subr.bf16.mxu0 0
    %1810 = vmatpush1.bf16.msra.mxu0 0
    %1811 = vmatprep.subr.bf16.mxu0 0
    %1812 = vmatpush1.bf16.msra.mxu0 %v1796
    %1813 = vmatprep.subr.bf16.mxu0 0
    %1814 = vmatpush1.bf16.msra.mxu0 %v1795
    %1815 = vmatprep.subr.bf16.mxu0 0
    %1816 = vmatpush2.bf16.msra.mxu0 0
    %1817 = vmatprep.subr.bf16.mxu0 0
    %1818 = vmatpush2.bf16.msra.mxu0 0
    %1819 = vmatprep.subr.bf16.mxu0 0
    %1820 = vmatpush2.bf16.msra.mxu0 0
    %1821 = vmatprep.subr.bf16.mxu0 0
    %1822 = vmatpush2.bf16.msra.mxu0 0
    %1823 = vmatprep.subr.bf16.mxu0 0
    %1824 = vmatpush2.bf16.msra.mxu0 0
    %1825 = vmatprep.subr.bf16.mxu0 0
    %1826 = vmatpush2.bf16.msra.mxu0 0
    %1827 = vmatprep.subr.bf16.mxu0 0
    %1828 = vmatpush2.bf16.msra.mxu0 0
    %1829 = vmatprep.subr.bf16.mxu0 0
    %1830 = vmatpush2.bf16.msra.mxu0 0
    %1831 = vmatprep.mubr.bf16.mxu0 0
    %1832 = vmatmul.mubr.bf16.gmra.mxu0 %v1735
    %v1833 = vpop.f32.mrf.mxu0
    %v1834 = vadd.f32 %v1786, %v1833
    %v1835 = vpop.f32.mrf.mxu0
    %v1836 = vpop.f32.mrf.mxu0
    %v1837 = vadd.f32 %v1786, %v1836
    %v1838 = vpop.f32.mrf.mxu0
    %1839 = vdwg.mxu0
    %s1840 = scalar_lea.vmem %s7, 160
    %v1841 = vld [vmem:[%s1840] sm:$0xf]
    %v1842 = vld [vmem:[%s1840 + $0x4] sm:$0xf]
    %v1843 = vld [vmem:[%s1840 + $0x8] sm:$0xf]
    %v1844 = vld [vmem:[%s1840 + $0xc] sm:$0xf]
    %v1845 = vlaneseq
    %v1846 = vshrl.u32 %v1845, 7
    %v1847 = vsub.s32 4, %v1846
    %v1848 = vrot.slane %v44, %v1847
    %v1853 = vunpack.c.l.b16 %v1841
    %v1854 = vunpack.c.l.b16 %v1842
    %v1855 = vunpack.c.l.b16 %v1843
    %v1856 = vunpack.c.l.b16 %v1844
    %v1857 = vpack.c.b16 %v1854, %v1853
    %v1858 = vpack.c.b16 %v1856, %v1855
    %1861 = vmatprep.subr.bf16.mxu0 0
    %1862 = vmatpush1.bf16.msra.mxu0 0
    %1863 = vmatprep.subr.bf16.mxu0 0
    %1864 = vmatpush1.bf16.msra.mxu0 0
    %1865 = vmatprep.subr.bf16.mxu0 0
    %1866 = vmatpush1.bf16.msra.mxu0 0
    %1867 = vmatprep.subr.bf16.mxu0 0
    %1868 = vmatpush1.bf16.msra.mxu0 0
    %1869 = vmatprep.subr.bf16.mxu0 0
    %1870 = vmatpush1.bf16.msra.mxu0 0
    %1871 = vmatprep.subr.bf16.mxu0 0
    %1872 = vmatpush1.bf16.msra.mxu0 0
    %1873 = vmatprep.subr.bf16.mxu0 0
    %1874 = vmatpush1.bf16.msra.mxu0 %v1858
    %1875 = vmatprep.subr.bf16.mxu0 0
    %1876 = vmatpush1.bf16.msra.mxu0 %v1857
    %1877 = vmatprep.subr.bf16.mxu0 0
    %1878 = vmatpush2.bf16.msra.mxu0 0
    %1879 = vmatprep.subr.bf16.mxu0 0
    %1880 = vmatpush2.bf16.msra.mxu0 0
    %1881 = vmatprep.subr.bf16.mxu0 0
    %1882 = vmatpush2.bf16.msra.mxu0 0
    %1883 = vmatprep.subr.bf16.mxu0 0
    %1884 = vmatpush2.bf16.msra.mxu0 0
    %1885 = vmatprep.subr.bf16.mxu0 0
    %1886 = vmatpush2.bf16.msra.mxu0 0
    %1887 = vmatprep.subr.bf16.mxu0 0
    %1888 = vmatpush2.bf16.msra.mxu0 0
    %1889 = vmatprep.subr.bf16.mxu0 0
    %1890 = vmatpush2.bf16.msra.mxu0 0
    %1891 = vmatprep.subr.bf16.mxu0 0
    %1892 = vmatpush2.bf16.msra.mxu0 0
    %1893 = vmatprep.mubr.bf16.mxu0 0
    %1894 = vmatmul.mubr.bf16.gmra.mxu0 %v1735
    %v1895 = vpop.f32.mrf.mxu0
    %v1896 = vadd.f32 %v1848, %v1895
    %v1897 = vpop.f32.mrf.mxu0
    %v1898 = vpop.f32.mrf.mxu0
    %v1899 = vadd.f32 %v1848, %v1898
    %v1900 = vpop.f32.mrf.mxu0
    %1901 = vdwg.mxu0
    %s1902 = scalar_lea.vmem %s7, 112
    %v1903 = vld [vmem:[%s1902] sm:$0xf]
    %v1904 = vld [vmem:[%s1902 + $0x4] sm:$0xf]
    %v1905 = vld [vmem:[%s1902 + $0x8] sm:$0xf]
    %v1906 = vld [vmem:[%s1902 + $0xc] sm:$0xf]
    %v1907 = vlaneseq
    %v1908 = vshrl.u32 %v1907, 7
    %v1909 = vsub.s32 1, %v1908
    %v1910 = vrot.slane %v44, %v1909
    %v1915 = vunpack.c.l.b16 %v1903
    %v1916 = vunpack.c.l.b16 %v1904
    %v1917 = vunpack.c.l.b16 %v1905
    %v1918 = vunpack.c.l.b16 %v1906
    %v1919 = vpack.c.b16 %v1916, %v1915
    %v1920 = vpack.c.b16 %v1918, %v1917
    %1923 = vmatprep.subr.bf16.mxu0 0
    %1924 = vmatpush1.bf16.msra.mxu0 0
    %1925 = vmatprep.subr.bf16.mxu0 0
    %1926 = vmatpush1.bf16.msra.mxu0 0
    %1927 = vmatprep.subr.bf16.mxu0 0
    %1928 = vmatpush1.bf16.msra.mxu0 0
    %1929 = vmatprep.subr.bf16.mxu0 0
    %1930 = vmatpush1.bf16.msra.mxu0 0
    %1931 = vmatprep.subr.bf16.mxu0 0
    %1932 = vmatpush1.bf16.msra.mxu0 0
    %1933 = vmatprep.subr.bf16.mxu0 0
    %1934 = vmatpush1.bf16.msra.mxu0 0
    %1935 = vmatprep.subr.bf16.mxu0 0
    %1936 = vmatpush1.bf16.msra.mxu0 %v1920
    %1937 = vmatprep.subr.bf16.mxu0 0
    %1938 = vmatpush1.bf16.msra.mxu0 %v1919
    %1939 = vmatprep.subr.bf16.mxu0 0
    %1940 = vmatpush2.bf16.msra.mxu0 0
    %1941 = vmatprep.subr.bf16.mxu0 0
    %1942 = vmatpush2.bf16.msra.mxu0 0
    %1943 = vmatprep.subr.bf16.mxu0 0
    %1944 = vmatpush2.bf16.msra.mxu0 0
    %1945 = vmatprep.subr.bf16.mxu0 0
    %1946 = vmatpush2.bf16.msra.mxu0 0
    %1947 = vmatprep.subr.bf16.mxu0 0
    %1948 = vmatpush2.bf16.msra.mxu0 0
    %1949 = vmatprep.subr.bf16.mxu0 0
    %1950 = vmatpush2.bf16.msra.mxu0 0
    %1951 = vmatprep.subr.bf16.mxu0 0
    %1952 = vmatpush2.bf16.msra.mxu0 0
    %1953 = vmatprep.subr.bf16.mxu0 0
    %1954 = vmatpush2.bf16.msra.mxu0 0
    %1955 = vmatprep.mubr.bf16.mxu0 0
    %1956 = vmatmul.mubr.bf16.gmra.mxu0 %v1735
    %v1957 = vpop.f32.mrf.mxu0
    %v1958 = vadd.f32 %v1910, %v1957
    %v1959 = vpop.f32.mrf.mxu0
    %v1960 = vpop.f32.mrf.mxu0
    %v1961 = vadd.f32 %v1910, %v1960
    %v1962 = vpop.f32.mrf.mxu0
    %1963 = vdwg.mxu0
    %s1964 = scalar_lea.vmem %s7, 144
    %v1965 = vld [vmem:[%s1964] sm:$0xf]
    %v1966 = vld [vmem:[%s1964 + $0x4] sm:$0xf]
    %v1967 = vld [vmem:[%s1964 + $0x8] sm:$0xf]
    %v1968 = vld [vmem:[%s1964 + $0xc] sm:$0xf]
    %v1969 = vlaneseq
    %v1970 = vshrl.u32 %v1969, 7
    %v1971 = vsub.s32 3, %v1970
    %v1972 = vrot.slane %v44, %v1971
    %v1977 = vunpack.c.l.b16 %v1965
    %v1978 = vunpack.c.l.b16 %v1966
    %v1979 = vunpack.c.l.b16 %v1967
    %v1980 = vunpack.c.l.b16 %v1968
    %v1981 = vpack.c.b16 %v1978, %v1977
    %v1982 = vpack.c.b16 %v1980, %v1979
    %1985 = vmatprep.subr.bf16.mxu0 0
    %1986 = vmatpush1.bf16.msra.mxu0 0
    %1987 = vmatprep.subr.bf16.mxu0 0
    %1988 = vmatpush1.bf16.msra.mxu0 0
    %1989 = vmatprep.subr.bf16.mxu0 0
    %1990 = vmatpush1.bf16.msra.mxu0 0
    %1991 = vmatprep.subr.bf16.mxu0 0
    %1992 = vmatpush1.bf16.msra.mxu0 0
    %1993 = vmatprep.subr.bf16.mxu0 0
    %1994 = vmatpush1.bf16.msra.mxu0 0
    %1995 = vmatprep.subr.bf16.mxu0 0
    %1996 = vmatpush1.bf16.msra.mxu0 0
    %1997 = vmatprep.subr.bf16.mxu0 0
    %1998 = vmatpush1.bf16.msra.mxu0 %v1982
    %1999 = vmatprep.subr.bf16.mxu0 0
    %2000 = vmatpush1.bf16.msra.mxu0 %v1981
    %2001 = vmatprep.subr.bf16.mxu0 0
    %2002 = vmatpush2.bf16.msra.mxu0 0
    %2003 = vmatprep.subr.bf16.mxu0 0
    %2004 = vmatpush2.bf16.msra.mxu0 0
    %2005 = vmatprep.subr.bf16.mxu0 0
    %2006 = vmatpush2.bf16.msra.mxu0 0
    %2007 = vmatprep.subr.bf16.mxu0 0
    %2008 = vmatpush2.bf16.msra.mxu0 0
    %2009 = vmatprep.subr.bf16.mxu0 0
    %2010 = vmatpush2.bf16.msra.mxu0 0
    %2011 = vmatprep.subr.bf16.mxu0 0
    %2012 = vmatpush2.bf16.msra.mxu0 0
    %2013 = vmatprep.subr.bf16.mxu0 0
    %2014 = vmatpush2.bf16.msra.mxu0 0
    %2015 = vmatprep.subr.bf16.mxu0 0
    %2016 = vmatpush2.bf16.msra.mxu0 0
    %2017 = vmatprep.mubr.bf16.mxu0 0
    %2018 = vmatmul.mubr.bf16.gmra.mxu0 %v1735
    %v2019 = vpop.f32.mrf.mxu0
    %v2020 = vadd.f32 %v1972, %v2019
    %v2021 = vpop.f32.mrf.mxu0
    %v2022 = vpop.f32.mrf.mxu0
    %v2023 = vadd.f32 %v1972, %v2022
    %v2024 = vpop.f32.mrf.mxu0
    %2025 = vdwg.mxu0
    %s2026 = scalar_lea.vmem %s7, 176
    %v2027 = vld [vmem:[%s2026] sm:$0xf]
    %v2028 = vld [vmem:[%s2026 + $0x4] sm:$0xf]
    %v2029 = vld [vmem:[%s2026 + $0x8] sm:$0xf]
    %v2030 = vld [vmem:[%s2026 + $0xc] sm:$0xf]
    %v2031 = vlaneseq
    %v2032 = vshrl.u32 %v2031, 7
    %v2033 = vsub.s32 5, %v2032
    %v2034 = vrot.slane %v44, %v2033
    %v2039 = vunpack.c.l.b16 %v2027
    %v2040 = vunpack.c.l.b16 %v2028
    %v2041 = vunpack.c.l.b16 %v2029
    %v2042 = vunpack.c.l.b16 %v2030
    %v2043 = vpack.c.b16 %v2040, %v2039
    %v2044 = vpack.c.b16 %v2042, %v2041
    %2047 = vmatprep.subr.bf16.mxu0 0
    %2048 = vmatpush1.bf16.msra.mxu0 0
    %2049 = vmatprep.subr.bf16.mxu0 0
    %2050 = vmatpush1.bf16.msra.mxu0 0
    %2051 = vmatprep.subr.bf16.mxu0 0
    %2052 = vmatpush1.bf16.msra.mxu0 0
    %2053 = vmatprep.subr.bf16.mxu0 0
    %2054 = vmatpush1.bf16.msra.mxu0 0
    %2055 = vmatprep.subr.bf16.mxu0 0
    %2056 = vmatpush1.bf16.msra.mxu0 0
    %2057 = vmatprep.subr.bf16.mxu0 0
    %2058 = vmatpush1.bf16.msra.mxu0 0
    %2059 = vmatprep.subr.bf16.mxu0 0
    %2060 = vmatpush1.bf16.msra.mxu0 %v2044
    %2061 = vmatprep.subr.bf16.mxu0 0
    %2062 = vmatpush1.bf16.msra.mxu0 %v2043
    %2063 = vmatprep.subr.bf16.mxu0 0
    %2064 = vmatpush2.bf16.msra.mxu0 0
    %2065 = vmatprep.subr.bf16.mxu0 0
    %2066 = vmatpush2.bf16.msra.mxu0 0
    %2067 = vmatprep.subr.bf16.mxu0 0
    %2068 = vmatpush2.bf16.msra.mxu0 0
    %2069 = vmatprep.subr.bf16.mxu0 0
    %2070 = vmatpush2.bf16.msra.mxu0 0
    %2071 = vmatprep.subr.bf16.mxu0 0
    %2072 = vmatpush2.bf16.msra.mxu0 0
    %2073 = vmatprep.subr.bf16.mxu0 0
    %2074 = vmatpush2.bf16.msra.mxu0 0
    %2075 = vmatprep.subr.bf16.mxu0 0
    %2076 = vmatpush2.bf16.msra.mxu0 0
    %2077 = vmatprep.subr.bf16.mxu0 0
    %2078 = vmatpush2.bf16.msra.mxu0 0
    %2079 = vmatprep.mubr.bf16.mxu0 0
    %2080 = vmatmul.mubr.bf16.gmra.mxu0 %v1735
    %v2081 = vpop.f32.mrf.mxu0
    %v2082 = vadd.f32 %v2034, %v2081
    %v2083 = vpop.f32.mrf.mxu0
    %v2084 = vpop.f32.mrf.mxu0
    %v2085 = vadd.f32 %v2034, %v2084
    %v2086 = vpop.f32.mrf.mxu0
    %2087 = vdwg.mxu0
    %v2089 = vsel %vm610, %v1772, 0
    %v2092 = vsel %vm610, %v1834, 0
    %2094 = vmatprep.subr.mxu0 0.0
    %2095 = vmatpush1.xpose.msra.mxu0 0.0
    %2096 = vmatprep.subr.mxu0 0.0
    %2097 = vmatpush1.xpose.msra.mxu0 0.0
    %2098 = vmatprep.subr.mxu0 0.0
    %2099 = vmatpush1.xpose.msra.mxu0 0.0
    %2100 = vmatprep.subr.mxu0 0.0
    %2101 = vmatpush1.xpose.msra.mxu0 0.0
    %2102 = vmatprep.subr.mxu0 0.0
    %2103 = vmatpush1.xpose.msra.mxu0 0.0
    %2104 = vmatprep.subr.mxu0 0.0
    %2105 = vmatpush1.xpose.msra.mxu0 0.0
    %2106 = vmatprep.subr.mxu0 0.0
    %2107 = vmatpush1.xpose.msra.mxu0 0.0
    %2108 = vmatprep.subr.mxu0 0.0
    %2109 = vmatpush1.xpose.msra.mxu0 0.0
    %2110 = vmatprep.subr.mxu0 0.0
    %2111 = vmatpush1.xpose.msra.mxu0 0.0
    %2112 = vmatprep.subr.mxu0 0.0
    %2113 = vmatpush1.xpose.msra.mxu0 0.0
    %2114 = vmatprep.subr.mxu0 0.0
    %2115 = vmatpush1.xpose.msra.mxu0 0.0
    %2116 = vmatprep.subr.mxu0 0.0
    %2117 = vmatpush1.xpose.msra.mxu0 0.0
    %2118 = vmatprep.subr.mxu0 0.0
    %2119 = vmatpush1.xpose.msra.mxu0 0.0
    %2120 = vmatprep.subr.mxu0 0.0
    %2121 = vmatpush1.xpose.msra.mxu0 0.0
    %2122 = vmatprep.subr.mxu0 0.0
    %2123 = vmatpush1.xpose.msra.mxu0 0.0
    %2124 = vmatprep.subr.mxu0 0.0
    %2125 = vmatpush1.xpose.msra.mxu0 %v2092
    %2126 = vmatprep.subr.mxu0 0.0
    %2127 = vmatpush2.xpose.msra.mxu0 0.0
    %2128 = vmatprep.subr.mxu0 0.0
    %2129 = vmatpush2.xpose.msra.mxu0 0.0
    %2130 = vmatprep.subr.mxu0 0.0
    %2131 = vmatpush2.xpose.msra.mxu0 0.0
    %2132 = vmatprep.subr.mxu0 0.0
    %2133 = vmatpush2.xpose.msra.mxu0 0.0
    %2134 = vmatprep.subr.mxu0 0.0
    %2135 = vmatpush2.xpose.msra.mxu0 0.0
    %2136 = vmatprep.subr.mxu0 0.0
    %2137 = vmatpush2.xpose.msra.mxu0 0.0
    %2138 = vmatprep.subr.mxu0 0.0
    %2139 = vmatpush2.xpose.msra.mxu0 0.0
    %2140 = vmatprep.subr.mxu0 0.0
    %2141 = vmatpush2.xpose.msra.mxu0 0.0
    %2142 = vmatprep.subr.mxu0 0.0
    %2143 = vmatpush2.xpose.msra.mxu0 0.0
    %2144 = vmatprep.subr.mxu0 0.0
    %2145 = vmatpush2.xpose.msra.mxu0 0.0
    %2146 = vmatprep.subr.mxu0 0.0
    %2147 = vmatpush2.xpose.msra.mxu0 0.0
    %2148 = vmatprep.subr.mxu0 0.0
    %2149 = vmatpush2.xpose.msra.mxu0 0.0
    %2150 = vmatprep.subr.mxu0 0.0
    %2151 = vmatpush2.xpose.msra.mxu0 0.0
    %2152 = vmatprep.subr.mxu0 0.0
    %2153 = vmatpush2.xpose.msra.mxu0 0.0
    %2154 = vmatprep.subr.mxu0 0.0
    %2155 = vmatpush2.xpose.msra.mxu0 0.0
    %2156 = vmatprep.subr.mxu0 0.0
    %2157 = vmatpush2.xpose.msra.mxu0 0.0
    %2158 = vmatprep.mubr.f32.mxu0 0.0
    %2159 = vmatmul.mubr.f32.gmra.mxu0 %v2089
    %v2160 = vpop.f32.mrf.mxu0
    %v2161 = vadd.f32 0.0, %v2160
    %v2162 = vpop.f32.mrf.mxu0
    %2163 = vdwg.mxu0
    %v2164 = vmul.f32 %v2161, 0.25
    %v2165 = vadd.f32 %v2164, %v691
    %v2166 = vsel %vm693, %v2165, -inf
    %2167 = vmax.xlane.f32.xlu0 %v2166
    %v2168 = vpop.xlane.xlu0 %2167
    %v2169 = vsub.f32 %v2165, %v2168
    %v2170 = vmul.f32 %v2169, 1.442695
    %v2171 = vpow.pop %v2170
    %v2172 = vsel %vm693, %v2171, 0.0
    %2173 = vadd.xlane.f32.xlu0 %v2172
    %v2174 = vpop.xlane.xlu0 %2173
    %v2175 = vrcp.pop %v2174
    %v2176 = vmul.f32 %v2171, %v2175
    %v2178 = vsel %vm693, %v2176, 0
    %2180 = vmatprep.subr.mxu0 0.0
    %2181 = vmatpush1.msra.mxu0 0.0
    %2182 = vmatprep.subr.mxu0 0.0
    %2183 = vmatpush1.msra.mxu0 0.0
    %2184 = vmatprep.subr.mxu0 0.0
    %2185 = vmatpush1.msra.mxu0 0.0
    %2186 = vmatprep.subr.mxu0 0.0
    %2187 = vmatpush1.msra.mxu0 0.0
    %2188 = vmatprep.subr.mxu0 0.0
    %2189 = vmatpush1.msra.mxu0 0.0
    %2190 = vmatprep.subr.mxu0 0.0
    %2191 = vmatpush1.msra.mxu0 0.0
    %2192 = vmatprep.subr.mxu0 0.0
    %2193 = vmatpush1.msra.mxu0 0.0
    %2194 = vmatprep.subr.mxu0 0.0
    %2195 = vmatpush1.msra.mxu0 0.0
    %2196 = vmatprep.subr.mxu0 0.0
    %2197 = vmatpush1.msra.mxu0 0.0
    %2198 = vmatprep.subr.mxu0 0.0
    %2199 = vmatpush1.msra.mxu0 0.0
    %2200 = vmatprep.subr.mxu0 0.0
    %2201 = vmatpush1.msra.mxu0 0.0
    %2202 = vmatprep.subr.mxu0 0.0
    %2203 = vmatpush1.msra.mxu0 0.0
    %2204 = vmatprep.subr.mxu0 0.0
    %2205 = vmatpush1.msra.mxu0 0.0
    %2206 = vmatprep.subr.mxu0 0.0
    %2207 = vmatpush1.msra.mxu0 0.0
    %2208 = vmatprep.subr.mxu0 0.0
    %2209 = vmatpush1.msra.mxu0 0.0
    %2210 = vmatprep.subr.mxu0 0.0
    %2211 = vmatpush1.msra.mxu0 %v1896
    %2212 = vmatprep.subr.mxu0 0.0
    %2213 = vmatpush2.msra.mxu0 0.0
    %2214 = vmatprep.subr.mxu0 0.0
    %2215 = vmatpush2.msra.mxu0 0.0
    %2216 = vmatprep.subr.mxu0 0.0
    %2217 = vmatpush2.msra.mxu0 0.0
    %2218 = vmatprep.subr.mxu0 0.0
    %2219 = vmatpush2.msra.mxu0 0.0
    %2220 = vmatprep.subr.mxu0 0.0
    %2221 = vmatpush2.msra.mxu0 0.0
    %2222 = vmatprep.subr.mxu0 0.0
    %2223 = vmatpush2.msra.mxu0 0.0
    %2224 = vmatprep.subr.mxu0 0.0
    %2225 = vmatpush2.msra.mxu0 0.0
    %2226 = vmatprep.subr.mxu0 0.0
    %2227 = vmatpush2.msra.mxu0 0.0
    %2228 = vmatprep.subr.mxu0 0.0
    %2229 = vmatpush2.msra.mxu0 0.0
    %2230 = vmatprep.subr.mxu0 0.0
    %2231 = vmatpush2.msra.mxu0 0.0
    %2232 = vmatprep.subr.mxu0 0.0
    %2233 = vmatpush2.msra.mxu0 0.0
    %2234 = vmatprep.subr.mxu0 0.0
    %2235 = vmatpush2.msra.mxu0 0.0
    %2236 = vmatprep.subr.mxu0 0.0
    %2237 = vmatpush2.msra.mxu0 0.0
    %2238 = vmatprep.subr.mxu0 0.0
    %2239 = vmatpush2.msra.mxu0 0.0
    %2240 = vmatprep.subr.mxu0 0.0
    %2241 = vmatpush2.msra.mxu0 0.0
    %2242 = vmatprep.subr.mxu0 0.0
    %2243 = vmatpush2.msra.mxu0 0.0
    %2244 = vmatprep.mubr.f32.mxu0 0.0
    %2245 = vmatmul.mubr.f32.gmra.mxu0 %v2178
    %v2246 = vpop.f32.mrf.mxu0
    %v2247 = vadd.f32 0.0, %v2246
    %v2248 = vpop.f32.mrf.mxu0
    %2249 = vdwg.mxu0
    %v2250 = vpack.c.bf16 %v2247, %v2247
    %s2251 = scalar_lea.vmem %s8, 16
    %v2252 = vld [vmem:[%s2251] sm:$0xf]
    %v2253 = vld [vmem:[%s2251 + $0x4] sm:$0xf]
    %v2255 = vsel %vm610, %v1958, 0
    %v2258 = vsel %vm610, %v2020, 0
    %2260 = vmatprep.subr.mxu0 0.0
    %2261 = vmatpush1.xpose.msra.mxu0 0.0
    %2262 = vmatprep.subr.mxu0 0.0
    %2263 = vmatpush1.xpose.msra.mxu0 0.0
    %2264 = vmatprep.subr.mxu0 0.0
    %2265 = vmatpush1.xpose.msra.mxu0 0.0
    %2266 = vmatprep.subr.mxu0 0.0
    %2267 = vmatpush1.xpose.msra.mxu0 0.0
    %2268 = vmatprep.subr.mxu0 0.0
    %2269 = vmatpush1.xpose.msra.mxu0 0.0
    %2270 = vmatprep.subr.mxu0 0.0
    %2271 = vmatpush1.xpose.msra.mxu0 0.0
    %2272 = vmatprep.subr.mxu0 0.0
    %2273 = vmatpush1.xpose.msra.mxu0 0.0
    %2274 = vmatprep.subr.mxu0 0.0
    %2275 = vmatpush1.xpose.msra.mxu0 0.0
    %2276 = vmatprep.subr.mxu0 0.0
    %2277 = vmatpush1.xpose.msra.mxu0 0.0
    %2278 = vmatprep.subr.mxu0 0.0
    %2279 = vmatpush1.xpose.msra.mxu0 0.0
    %2280 = vmatprep.subr.mxu0 0.0
    %2281 = vmatpush1.xpose.msra.mxu0 0.0
    %2282 = vmatprep.subr.mxu0 0.0
    %2283 = vmatpush1.xpose.msra.mxu0 0.0
    %2284 = vmatprep.subr.mxu0 0.0
    %2285 = vmatpush1.xpose.msra.mxu0 0.0
    %2286 = vmatprep.subr.mxu0 0.0
    %2287 = vmatpush1.xpose.msra.mxu0 0.0
    %2288 = vmatprep.subr.mxu0 0.0
    %2289 = vmatpush1.xpose.msra.mxu0 0.0
    %2290 = vmatprep.subr.mxu0 0.0
    %2291 = vmatpush1.xpose.msra.mxu0 %v2258
    %2292 = vmatprep.subr.mxu0 0.0
    %2293 = vmatpush2.xpose.msra.mxu0 0.0
    %2294 = vmatprep.subr.mxu0 0.0
    %2295 = vmatpush2.xpose.msra.mxu0 0.0
    %2296 = vmatprep.subr.mxu0 0.0
    %2297 = vmatpush2.xpose.msra.mxu0 0.0
    %2298 = vmatprep.subr.mxu0 0.0
    %2299 = vmatpush2.xpose.msra.mxu0 0.0
    %2300 = vmatprep.subr.mxu0 0.0
    %2301 = vmatpush2.xpose.msra.mxu0 0.0
    %2302 = vmatprep.subr.mxu0 0.0
    %2303 = vmatpush2.xpose.msra.mxu0 0.0
    %2304 = vmatprep.subr.mxu0 0.0
    %2305 = vmatpush2.xpose.msra.mxu0 0.0
    %2306 = vmatprep.subr.mxu0 0.0
    %2307 = vmatpush2.xpose.msra.mxu0 0.0
    %2308 = vmatprep.subr.mxu0 0.0
    %2309 = vmatpush2.xpose.msra.mxu0 0.0
    %2310 = vmatprep.subr.mxu0 0.0
    %2311 = vmatpush2.xpose.msra.mxu0 0.0
    %2312 = vmatprep.subr.mxu0 0.0
    %2313 = vmatpush2.xpose.msra.mxu0 0.0
    %2314 = vmatprep.subr.mxu0 0.0
    %2315 = vmatpush2.xpose.msra.mxu0 0.0
    %2316 = vmatprep.subr.mxu0 0.0
    %2317 = vmatpush2.xpose.msra.mxu0 0.0
    %2318 = vmatprep.subr.mxu0 0.0
    %2319 = vmatpush2.xpose.msra.mxu0 0.0
    %2320 = vmatprep.subr.mxu0 0.0
    %2321 = vmatpush2.xpose.msra.mxu0 0.0
    %2322 = vmatprep.subr.mxu0 0.0
    %2323 = vmatpush2.xpose.msra.mxu0 0.0
    %2324 = vmatprep.mubr.f32.mxu0 0.0
    %2325 = vmatmul.mubr.f32.gmra.mxu0 %v2255
    %v2326 = vpop.f32.mrf.mxu0
    %v2327 = vadd.f32 0.0, %v2326
    %v2328 = vpop.f32.mrf.mxu0
    %2329 = vdwg.mxu0
    %v2330 = vmul.f32 %v2327, 0.25
    %v2331 = vadd.f32 %v2330, %v691
    %v2332 = vsel %vm693, %v2331, -inf
    %2333 = vmax.xlane.f32.xlu0 %v2332
    %v2334 = vpop.xlane.xlu0 %2333
    %v2335 = vsub.f32 %v2331, %v2334
    %v2336 = vmul.f32 %v2335, 1.442695
    %v2337 = vpow.pop %v2336
    %v2338 = vsel %vm693, %v2337, 0.0
    %2339 = vadd.xlane.f32.xlu0 %v2338
    %v2340 = vpop.xlane.xlu0 %2339
    %v2341 = vrcp.pop %v2340
    %v2342 = vmul.f32 %v2337, %v2341
    %v2344 = vsel %vm693, %v2342, 0
    %2346 = vmatprep.subr.mxu0 0.0
    %2347 = vmatpush1.msra.mxu0 0.0
    %2348 = vmatprep.subr.mxu0 0.0
    %2349 = vmatpush1.msra.mxu0 0.0
    %2350 = vmatprep.subr.mxu0 0.0
    %2351 = vmatpush1.msra.mxu0 0.0
    %2352 = vmatprep.subr.mxu0 0.0
    %2353 = vmatpush1.msra.mxu0 0.0
    %2354 = vmatprep.subr.mxu0 0.0
    %2355 = vmatpush1.msra.mxu0 0.0
    %2356 = vmatprep.subr.mxu0 0.0
    %2357 = vmatpush1.msra.mxu0 0.0
    %2358 = vmatprep.subr.mxu0 0.0
    %2359 = vmatpush1.msra.mxu0 0.0
    %2360 = vmatprep.subr.mxu0 0.0
    %2361 = vmatpush1.msra.mxu0 0.0
    %2362 = vmatprep.subr.mxu0 0.0
    %2363 = vmatpush1.msra.mxu0 0.0
    %2364 = vmatprep.subr.mxu0 0.0
    %2365 = vmatpush1.msra.mxu0 0.0
    %2366 = vmatprep.subr.mxu0 0.0
    %2367 = vmatpush1.msra.mxu0 0.0
    %2368 = vmatprep.subr.mxu0 0.0
    %2369 = vmatpush1.msra.mxu0 0.0
    %2370 = vmatprep.subr.mxu0 0.0
    %2371 = vmatpush1.msra.mxu0 0.0
    %2372 = vmatprep.subr.mxu0 0.0
    %2373 = vmatpush1.msra.mxu0 0.0
    %2374 = vmatprep.subr.mxu0 0.0
    %2375 = vmatpush1.msra.mxu0 0.0
    %2376 = vmatprep.subr.mxu0 0.0
    %2377 = vmatpush1.msra.mxu0 %v2082
    %2378 = vmatprep.subr.mxu0 0.0
    %2379 = vmatpush2.msra.mxu0 0.0
    %2380 = vmatprep.subr.mxu0 0.0
    %2381 = vmatpush2.msra.mxu0 0.0
    %2382 = vmatprep.subr.mxu0 0.0
    %2383 = vmatpush2.msra.mxu0 0.0
    %2384 = vmatprep.subr.mxu0 0.0
    %2385 = vmatpush2.msra.mxu0 0.0
    %2386 = vmatprep.subr.mxu0 0.0
    %2387 = vmatpush2.msra.mxu0 0.0
    %2388 = vmatprep.subr.mxu0 0.0
    %2389 = vmatpush2.msra.mxu0 0.0
    %2390 = vmatprep.subr.mxu0 0.0
    %2391 = vmatpush2.msra.mxu0 0.0
    %2392 = vmatprep.subr.mxu0 0.0
    %2393 = vmatpush2.msra.mxu0 0.0
    %2394 = vmatprep.subr.mxu0 0.0
    %2395 = vmatpush2.msra.mxu0 0.0
    %2396 = vmatprep.subr.mxu0 0.0
    %2397 = vmatpush2.msra.mxu0 0.0
    %2398 = vmatprep.subr.mxu0 0.0
    %2399 = vmatpush2.msra.mxu0 0.0
    %2400 = vmatprep.subr.mxu0 0.0
    %2401 = vmatpush2.msra.mxu0 0.0
    %2402 = vmatprep.subr.mxu0 0.0
    %2403 = vmatpush2.msra.mxu0 0.0
    %2404 = vmatprep.subr.mxu0 0.0
    %2405 = vmatpush2.msra.mxu0 0.0
    %2406 = vmatprep.subr.mxu0 0.0
    %2407 = vmatpush2.msra.mxu0 0.0
    %2408 = vmatprep.subr.mxu0 0.0
    %2409 = vmatpush2.msra.mxu0 0.0
    %2410 = vmatprep.mubr.f32.mxu0 0.0
    %2411 = vmatmul.mubr.f32.gmra.mxu0 %v2344
    %v2412 = vpop.f32.mrf.mxu0
    %v2413 = vadd.f32 0.0, %v2412
    %v2414 = vpop.f32.mrf.mxu0
    %2415 = vdwg.mxu0
    %v2416 = vpack.c.bf16 %v2413, %v2413
    %s2417 = scalar_lea.vmem %s8, 24
    %v2418 = vld [vmem:[%s2417] sm:$0xf]
    %v2419 = vld [vmem:[%s2417 + $0x4] sm:$0xf]
    %v2422 = vunpack.c.l.b16 %v2418
    %v2423 = vunpack.c.l.b16 %v2419
    %v2424 = vpack.c.b16 %v2423, %v2422
    %v2427 = vsel %vm610, %v2416, 0
    %2429 = vmatprep.subr.bf16.mxu0 0
    %2430 = vmatpush1.bf16.msra.mxu0 0
    %2431 = vmatprep.subr.bf16.mxu0 0
    %2432 = vmatpush1.bf16.msra.mxu0 0
    %2433 = vmatprep.subr.bf16.mxu0 0
    %2434 = vmatpush1.bf16.msra.mxu0 0
    %2435 = vmatprep.subr.bf16.mxu0 0
    %2436 = vmatpush1.bf16.msra.mxu0 0
    %2437 = vmatprep.subr.bf16.mxu0 0
    %2438 = vmatpush1.bf16.msra.mxu0 0
    %2439 = vmatprep.subr.bf16.mxu0 0
    %2440 = vmatpush1.bf16.msra.mxu0 0
    %2441 = vmatprep.subr.bf16.mxu0 0
    %2442 = vmatpush1.bf16.msra.mxu0 0
    %2443 = vmatprep.subr.bf16.mxu0 0
    %2444 = vmatpush1.bf16.msra.mxu0 %v2424
    %2445 = vmatprep.subr.bf16.mxu0 0
    %2446 = vmatpush2.bf16.msra.mxu0 0
    %2447 = vmatprep.subr.bf16.mxu0 0
    %2448 = vmatpush2.bf16.msra.mxu0 0
    %2449 = vmatprep.subr.bf16.mxu0 0
    %2450 = vmatpush2.bf16.msra.mxu0 0
    %2451 = vmatprep.subr.bf16.mxu0 0
    %2452 = vmatpush2.bf16.msra.mxu0 0
    %2453 = vmatprep.subr.bf16.mxu0 0
    %2454 = vmatpush2.bf16.msra.mxu0 0
    %2455 = vmatprep.subr.bf16.mxu0 0
    %2456 = vmatpush2.bf16.msra.mxu0 0
    %2457 = vmatprep.subr.bf16.mxu0 0
    %2458 = vmatpush2.bf16.msra.mxu0 0
    %2459 = vmatprep.subr.bf16.mxu0 0
    %2460 = vmatpush2.bf16.msra.mxu0 0
    %2461 = vmatprep.mubr.bf16.mxu0 0
    %2462 = vmatmul.mubr.bf16.gmra.mxu0 %v2427
    %v2463 = vpop.f32.mrf.mxu0
    %v2464 = vadd.f32 0.0, %v2463
    %v2465 = vpop.f32.mrf.mxu0
    %v2466 = vpop.f32.mrf.mxu0
    %v2467 = vpop.f32.mrf.mxu0
    %2468 = vdwg.mxu0
    %v2471 = vunpack.c.l.b16 %v2252
    %v2472 = vunpack.c.l.b16 %v2253
    %v2473 = vpack.c.b16 %v2472, %v2471
    %v2476 = vsel %vm610, %v2250, 0
    %2478 = vmatprep.subr.bf16.mxu0 0
    %2479 = vmatpush1.bf16.msra.mxu0 0
    %2480 = vmatprep.subr.bf16.mxu0 0
    %2481 = vmatpush1.bf16.msra.mxu0 0
    %2482 = vmatprep.subr.bf16.mxu0 0
    %2483 = vmatpush1.bf16.msra.mxu0 0
    %2484 = vmatprep.subr.bf16.mxu0 0
    %2485 = vmatpush1.bf16.msra.mxu0 0
    %2486 = vmatprep.subr.bf16.mxu0 0
    %2487 = vmatpush1.bf16.msra.mxu0 0
    %2488 = vmatprep.subr.bf16.mxu0 0
    %2489 = vmatpush1.bf16.msra.mxu0 0
    %2490 = vmatprep.subr.bf16.mxu0 0
    %2491 = vmatpush1.bf16.msra.mxu0 0
    %2492 = vmatprep.subr.bf16.mxu0 0
    %2493 = vmatpush1.bf16.msra.mxu0 %v2473
    %2494 = vmatprep.subr.bf16.mxu0 0
    %2495 = vmatpush2.bf16.msra.mxu0 0
    %2496 = vmatprep.subr.bf16.mxu0 0
    %2497 = vmatpush2.bf16.msra.mxu0 0
    %2498 = vmatprep.subr.bf16.mxu0 0
    %2499 = vmatpush2.bf16.msra.mxu0 0
    %2500 = vmatprep.subr.bf16.mxu0 0
    %2501 = vmatpush2.bf16.msra.mxu0 0
    %2502 = vmatprep.subr.bf16.mxu0 0
    %2503 = vmatpush2.bf16.msra.mxu0 0
    %2504 = vmatprep.subr.bf16.mxu0 0
    %2505 = vmatpush2.bf16.msra.mxu0 0
    %2506 = vmatprep.subr.bf16.mxu0 0
    %2507 = vmatpush2.bf16.msra.mxu0 0
    %2508 = vmatprep.subr.bf16.mxu0 0
    %2509 = vmatpush2.bf16.msra.mxu0 0
    %2510 = vmatprep.mubr.bf16.mxu0 0
    %2511 = vmatmul.mubr.bf16.gmra.mxu0 %v2476
    %v2512 = vpop.f32.mrf.mxu0
    %v2513 = vadd.f32 %v2464, %v2512
    %v2514 = vpop.f32.mrf.mxu0
    %v2515 = vpop.f32.mrf.mxu0
    %v2516 = vpop.f32.mrf.mxu0
    %2517 = vdwg.mxu0
    %v2519 = vsel %vm610, %v1775, 0
    %v2522 = vsel %vm610, %v1837, 0
    %2524 = vmatprep.subr.mxu0 0.0
    %2525 = vmatpush1.xpose.msra.mxu0 0.0
    %2526 = vmatprep.subr.mxu0 0.0
    %2527 = vmatpush1.xpose.msra.mxu0 0.0
    %2528 = vmatprep.subr.mxu0 0.0
    %2529 = vmatpush1.xpose.msra.mxu0 0.0
    %2530 = vmatprep.subr.mxu0 0.0
    %2531 = vmatpush1.xpose.msra.mxu0 0.0
    %2532 = vmatprep.subr.mxu0 0.0
    %2533 = vmatpush1.xpose.msra.mxu0 0.0
    %2534 = vmatprep.subr.mxu0 0.0
    %2535 = vmatpush1.xpose.msra.mxu0 0.0
    %2536 = vmatprep.subr.mxu0 0.0
    %2537 = vmatpush1.xpose.msra.mxu0 0.0
    %2538 = vmatprep.subr.mxu0 0.0
    %2539 = vmatpush1.xpose.msra.mxu0 0.0
    %2540 = vmatprep.subr.mxu0 0.0
    %2541 = vmatpush1.xpose.msra.mxu0 0.0
    %2542 = vmatprep.subr.mxu0 0.0
    %2543 = vmatpush1.xpose.msra.mxu0 0.0
    %2544 = vmatprep.subr.mxu0 0.0
    %2545 = vmatpush1.xpose.msra.mxu0 0.0
    %2546 = vmatprep.subr.mxu0 0.0
    %2547 = vmatpush1.xpose.msra.mxu0 0.0
    %2548 = vmatprep.subr.mxu0 0.0
    %2549 = vmatpush1.xpose.msra.mxu0 0.0
    %2550 = vmatprep.subr.mxu0 0.0
    %2551 = vmatpush1.xpose.msra.mxu0 0.0
    %2552 = vmatprep.subr.mxu0 0.0
    %2553 = vmatpush1.xpose.msra.mxu0 0.0
    %2554 = vmatprep.subr.mxu0 0.0
    %2555 = vmatpush1.xpose.msra.mxu0 %v2522
    %2556 = vmatprep.subr.mxu0 0.0
    %2557 = vmatpush2.xpose.msra.mxu0 0.0
    %2558 = vmatprep.subr.mxu0 0.0
    %2559 = vmatpush2.xpose.msra.mxu0 0.0
    %2560 = vmatprep.subr.mxu0 0.0
    %2561 = vmatpush2.xpose.msra.mxu0 0.0
    %2562 = vmatprep.subr.mxu0 0.0
    %2563 = vmatpush2.xpose.msra.mxu0 0.0
    %2564 = vmatprep.subr.mxu0 0.0
    %2565 = vmatpush2.xpose.msra.mxu0 0.0
    %2566 = vmatprep.subr.mxu0 0.0
    %2567 = vmatpush2.xpose.msra.mxu0 0.0
    %2568 = vmatprep.subr.mxu0 0.0
    %2569 = vmatpush2.xpose.msra.mxu0 0.0
    %2570 = vmatprep.subr.mxu0 0.0
    %2571 = vmatpush2.xpose.msra.mxu0 0.0
    %2572 = vmatprep.subr.mxu0 0.0
    %2573 = vmatpush2.xpose.msra.mxu0 0.0
    %2574 = vmatprep.subr.mxu0 0.0
    %2575 = vmatpush2.xpose.msra.mxu0 0.0
    %2576 = vmatprep.subr.mxu0 0.0
    %2577 = vmatpush2.xpose.msra.mxu0 0.0
    %2578 = vmatprep.subr.mxu0 0.0
    %2579 = vmatpush2.xpose.msra.mxu0 0.0
    %2580 = vmatprep.subr.mxu0 0.0
    %2581 = vmatpush2.xpose.msra.mxu0 0.0
    %2582 = vmatprep.subr.mxu0 0.0
    %2583 = vmatpush2.xpose.msra.mxu0 0.0
    %2584 = vmatprep.subr.mxu0 0.0
    %2585 = vmatpush2.xpose.msra.mxu0 0.0
    %2586 = vmatprep.subr.mxu0 0.0
    %2587 = vmatpush2.xpose.msra.mxu0 0.0
    %2588 = vmatprep.mubr.f32.mxu0 0.0
    %2589 = vmatmul.mubr.f32.gmra.mxu0 %v2519
    %v2590 = vpop.f32.mrf.mxu0
    %v2591 = vadd.f32 0.0, %v2590
    %v2592 = vpop.f32.mrf.mxu0
    %2593 = vdwg.mxu0
    %v2594 = vmul.f32 %v2591, 0.25
    %v2595 = vadd.f32 %v2594, %v1125
    %v2596 = vsel %vm693, %v2595, -inf
    %2597 = vmax.xlane.f32.xlu0 %v2596
    %v2598 = vpop.xlane.xlu0 %2597
    %v2599 = vsub.f32 %v2595, %v2598
    %v2600 = vmul.f32 %v2599, 1.442695
    %v2601 = vpow.pop %v2600
    %v2602 = vsel %vm693, %v2601, 0.0
    %2603 = vadd.xlane.f32.xlu0 %v2602
    %v2604 = vpop.xlane.xlu0 %2603
    %v2605 = vrcp.pop %v2604
    %v2606 = vmul.f32 %v2601, %v2605
    %v2608 = vsel %vm693, %v2606, 0
    %2610 = vmatprep.subr.mxu0 0.0
    %2611 = vmatpush1.msra.mxu0 0.0
    %2612 = vmatprep.subr.mxu0 0.0
    %2613 = vmatpush1.msra.mxu0 0.0
    %2614 = vmatprep.subr.mxu0 0.0
    %2615 = vmatpush1.msra.mxu0 0.0
    %2616 = vmatprep.subr.mxu0 0.0
    %2617 = vmatpush1.msra.mxu0 0.0
    %2618 = vmatprep.subr.mxu0 0.0
    %2619 = vmatpush1.msra.mxu0 0.0
    %2620 = vmatprep.subr.mxu0 0.0
    %2621 = vmatpush1.msra.mxu0 0.0
    %2622 = vmatprep.subr.mxu0 0.0
    %2623 = vmatpush1.msra.mxu0 0.0
    %2624 = vmatprep.subr.mxu0 0.0
    %2625 = vmatpush1.msra.mxu0 0.0
    %2626 = vmatprep.subr.mxu0 0.0
    %2627 = vmatpush1.msra.mxu0 0.0
    %2628 = vmatprep.subr.mxu0 0.0
    %2629 = vmatpush1.msra.mxu0 0.0
    %2630 = vmatprep.subr.mxu0 0.0
    %2631 = vmatpush1.msra.mxu0 0.0
    %2632 = vmatprep.subr.mxu0 0.0
    %2633 = vmatpush1.msra.mxu0 0.0
    %2634 = vmatprep.subr.mxu0 0.0
    %2635 = vmatpush1.msra.mxu0 0.0
    %2636 = vmatprep.subr.mxu0 0.0
    %2637 = vmatpush1.msra.mxu0 0.0
    %2638 = vmatprep.subr.mxu0 0.0
    %2639 = vmatpush1.msra.mxu0 0.0
    %2640 = vmatprep.subr.mxu0 0.0
    %2641 = vmatpush1.msra.mxu0 %v1899
    %2642 = vmatprep.subr.mxu0 0.0
    %2643 = vmatpush2.msra.mxu0 0.0
    %2644 = vmatprep.subr.mxu0 0.0
    %2645 = vmatpush2.msra.mxu0 0.0
    %2646 = vmatprep.subr.mxu0 0.0
    %2647 = vmatpush2.msra.mxu0 0.0
    %2648 = vmatprep.subr.mxu0 0.0
    %2649 = vmatpush2.msra.mxu0 0.0
    %2650 = vmatprep.subr.mxu0 0.0
    %2651 = vmatpush2.msra.mxu0 0.0
    %2652 = vmatprep.subr.mxu0 0.0
    %2653 = vmatpush2.msra.mxu0 0.0
    %2654 = vmatprep.subr.mxu0 0.0
    %2655 = vmatpush2.msra.mxu0 0.0
    %2656 = vmatprep.subr.mxu0 0.0
    %2657 = vmatpush2.msra.mxu0 0.0
    %2658 = vmatprep.subr.mxu0 0.0
    %2659 = vmatpush2.msra.mxu0 0.0
    %2660 = vmatprep.subr.mxu0 0.0
    %2661 = vmatpush2.msra.mxu0 0.0
    %2662 = vmatprep.subr.mxu0 0.0
    %2663 = vmatpush2.msra.mxu0 0.0
    %2664 = vmatprep.subr.mxu0 0.0
    %2665 = vmatpush2.msra.mxu0 0.0
    %2666 = vmatprep.subr.mxu0 0.0
    %2667 = vmatpush2.msra.mxu0 0.0
    %2668 = vmatprep.subr.mxu0 0.0
    %2669 = vmatpush2.msra.mxu0 0.0
    %2670 = vmatprep.subr.mxu0 0.0
    %2671 = vmatpush2.msra.mxu0 0.0
    %2672 = vmatprep.subr.mxu0 0.0
    %2673 = vmatpush2.msra.mxu0 0.0
    %2674 = vmatprep.mubr.f32.mxu0 0.0
    %2675 = vmatmul.mubr.f32.gmra.mxu0 %v2608
    %v2676 = vpop.f32.mrf.mxu0
    %v2677 = vadd.f32 0.0, %v2676
    %v2678 = vpop.f32.mrf.mxu0
    %2679 = vdwg.mxu0
    %v2680 = vpack.c.bf16 %v2677, %v2677
    %v2682 = vsel %vm610, %v1961, 0
    %v2685 = vsel %vm610, %v2023, 0
    %2687 = vmatprep.subr.mxu0 0.0
    %2688 = vmatpush1.xpose.msra.mxu0 0.0
    %2689 = vmatprep.subr.mxu0 0.0
    %2690 = vmatpush1.xpose.msra.mxu0 0.0
    %2691 = vmatprep.subr.mxu0 0.0
    %2692 = vmatpush1.xpose.msra.mxu0 0.0
    %2693 = vmatprep.subr.mxu0 0.0
    %2694 = vmatpush1.xpose.msra.mxu0 0.0
    %2695 = vmatprep.subr.mxu0 0.0
    %2696 = vmatpush1.xpose.msra.mxu0 0.0
    %2697 = vmatprep.subr.mxu0 0.0
    %2698 = vmatpush1.xpose.msra.mxu0 0.0
    %2699 = vmatprep.subr.mxu0 0.0
    %2700 = vmatpush1.xpose.msra.mxu0 0.0
    %2701 = vmatprep.subr.mxu0 0.0
    %2702 = vmatpush1.xpose.msra.mxu0 0.0
    %2703 = vmatprep.subr.mxu0 0.0
    %2704 = vmatpush1.xpose.msra.mxu0 0.0
    %2705 = vmatprep.subr.mxu0 0.0
    %2706 = vmatpush1.xpose.msra.mxu0 0.0
    %2707 = vmatprep.subr.mxu0 0.0
    %2708 = vmatpush1.xpose.msra.mxu0 0.0
    %2709 = vmatprep.subr.mxu0 0.0
    %2710 = vmatpush1.xpose.msra.mxu0 0.0
    %2711 = vmatprep.subr.mxu0 0.0
    %2712 = vmatpush1.xpose.msra.mxu0 0.0
    %2713 = vmatprep.subr.mxu0 0.0
    %2714 = vmatpush1.xpose.msra.mxu0 0.0
    %2715 = vmatprep.subr.mxu0 0.0
    %2716 = vmatpush1.xpose.msra.mxu0 0.0
    %2717 = vmatprep.subr.mxu0 0.0
    %2718 = vmatpush1.xpose.msra.mxu0 %v2685
    %2719 = vmatprep.subr.mxu0 0.0
    %2720 = vmatpush2.xpose.msra.mxu0 0.0
    %2721 = vmatprep.subr.mxu0 0.0
    %2722 = vmatpush2.xpose.msra.mxu0 0.0
    %2723 = vmatprep.subr.mxu0 0.0
    %2724 = vmatpush2.xpose.msra.mxu0 0.0
    %2725 = vmatprep.subr.mxu0 0.0
    %2726 = vmatpush2.xpose.msra.mxu0 0.0
    %2727 = vmatprep.subr.mxu0 0.0
    %2728 = vmatpush2.xpose.msra.mxu0 0.0
    %2729 = vmatprep.subr.mxu0 0.0
    %2730 = vmatpush2.xpose.msra.mxu0 0.0
    %2731 = vmatprep.subr.mxu0 0.0
    %2732 = vmatpush2.xpose.msra.mxu0 0.0
    %2733 = vmatprep.subr.mxu0 0.0
    %2734 = vmatpush2.xpose.msra.mxu0 0.0
    %2735 = vmatprep.subr.mxu0 0.0
    %2736 = vmatpush2.xpose.msra.mxu0 0.0
    %2737 = vmatprep.subr.mxu0 0.0
    %2738 = vmatpush2.xpose.msra.mxu0 0.0
    %2739 = vmatprep.subr.mxu0 0.0
    %2740 = vmatpush2.xpose.msra.mxu0 0.0
    %2741 = vmatprep.subr.mxu0 0.0
    %2742 = vmatpush2.xpose.msra.mxu0 0.0
    %2743 = vmatprep.subr.mxu0 0.0
    %2744 = vmatpush2.xpose.msra.mxu0 0.0
    %2745 = vmatprep.subr.mxu0 0.0
    %2746 = vmatpush2.xpose.msra.mxu0 0.0
    %2747 = vmatprep.subr.mxu0 0.0
    %2748 = vmatpush2.xpose.msra.mxu0 0.0
    %2749 = vmatprep.subr.mxu0 0.0
    %2750 = vmatpush2.xpose.msra.mxu0 0.0
    %2751 = vmatprep.mubr.f32.mxu0 0.0
    %2752 = vmatmul.mubr.f32.gmra.mxu0 %v2682
    %v2753 = vpop.f32.mrf.mxu0
    %v2754 = vadd.f32 0.0, %v2753
    %v2755 = vpop.f32.mrf.mxu0
    %2756 = vdwg.mxu0
    %v2757 = vmul.f32 %v2754, 0.25
    %v2758 = vadd.f32 %v2757, %v1125
    %v2759 = vsel %vm693, %v2758, -inf
    %2760 = vmax.xlane.f32.xlu0 %v2759
    %v2761 = vpop.xlane.xlu0 %2760
    %v2762 = vsub.f32 %v2758, %v2761
    %v2763 = vmul.f32 %v2762, 1.442695
    %v2764 = vpow.pop %v2763
    %v2765 = vsel %vm693, %v2764, 0.0
    %2766 = vadd.xlane.f32.xlu0 %v2765
    %v2767 = vpop.xlane.xlu0 %2766
    %v2768 = vrcp.pop %v2767
    %v2769 = vmul.f32 %v2764, %v2768
    %v2771 = vsel %vm693, %v2769, 0
    %2773 = vmatprep.subr.mxu0 0.0
    %2774 = vmatpush1.msra.mxu0 0.0
    %2775 = vmatprep.subr.mxu0 0.0
    %2776 = vmatpush1.msra.mxu0 0.0
    %2777 = vmatprep.subr.mxu0 0.0
    %2778 = vmatpush1.msra.mxu0 0.0
    %2779 = vmatprep.subr.mxu0 0.0
    %2780 = vmatpush1.msra.mxu0 0.0
    %2781 = vmatprep.subr.mxu0 0.0
    %2782 = vmatpush1.msra.mxu0 0.0
    %2783 = vmatprep.subr.mxu0 0.0
    %2784 = vmatpush1.msra.mxu0 0.0
    %2785 = vmatprep.subr.mxu0 0.0
    %2786 = vmatpush1.msra.mxu0 0.0
    %2787 = vmatprep.subr.mxu0 0.0
    %2788 = vmatpush1.msra.mxu0 0.0
    %2789 = vmatprep.subr.mxu0 0.0
    %2790 = vmatpush1.msra.mxu0 0.0
    %2791 = vmatprep.subr.mxu0 0.0
    %2792 = vmatpush1.msra.mxu0 0.0
    %2793 = vmatprep.subr.mxu0 0.0
    %2794 = vmatpush1.msra.mxu0 0.0
    %2795 = vmatprep.subr.mxu0 0.0
    %2796 = vmatpush1.msra.mxu0 0.0
    %2797 = vmatprep.subr.mxu0 0.0
    %2798 = vmatpush1.msra.mxu0 0.0
    %2799 = vmatprep.subr.mxu0 0.0
    %2800 = vmatpush1.msra.mxu0 0.0
    %2801 = vmatprep.subr.mxu0 0.0
    %2802 = vmatpush1.msra.mxu0 0.0
    %2803 = vmatprep.subr.mxu0 0.0
    %2804 = vmatpush1.msra.mxu0 %v2085
    %2805 = vmatprep.subr.mxu0 0.0
    %2806 = vmatpush2.msra.mxu0 0.0
    %2807 = vmatprep.subr.mxu0 0.0
    %2808 = vmatpush2.msra.mxu0 0.0
    %2809 = vmatprep.subr.mxu0 0.0
    %2810 = vmatpush2.msra.mxu0 0.0
    %2811 = vmatprep.subr.mxu0 0.0
    %2812 = vmatpush2.msra.mxu0 0.0
    %2813 = vmatprep.subr.mxu0 0.0
    %2814 = vmatpush2.msra.mxu0 0.0
    %2815 = vmatprep.subr.mxu0 0.0
    %2816 = vmatpush2.msra.mxu0 0.0
    %2817 = vmatprep.subr.mxu0 0.0
    %2818 = vmatpush2.msra.mxu0 0.0
    %2819 = vmatprep.subr.mxu0 0.0
    %2820 = vmatpush2.msra.mxu0 0.0
    %2821 = vmatprep.subr.mxu0 0.0
    %2822 = vmatpush2.msra.mxu0 0.0
    %2823 = vmatprep.subr.mxu0 0.0
    %2824 = vmatpush2.msra.mxu0 0.0
    %2825 = vmatprep.subr.mxu0 0.0
    %2826 = vmatpush2.msra.mxu0 0.0
    %2827 = vmatprep.subr.mxu0 0.0
    %2828 = vmatpush2.msra.mxu0 0.0
    %2829 = vmatprep.subr.mxu0 0.0
    %2830 = vmatpush2.msra.mxu0 0.0
    %2831 = vmatprep.subr.mxu0 0.0
    %2832 = vmatpush2.msra.mxu0 0.0
    %2833 = vmatprep.subr.mxu0 0.0
    %2834 = vmatpush2.msra.mxu0 0.0
    %2835 = vmatprep.subr.mxu0 0.0
    %2836 = vmatpush2.msra.mxu0 0.0
    %2837 = vmatprep.mubr.f32.mxu0 0.0
    %2838 = vmatmul.mubr.f32.gmra.mxu0 %v2771
    %v2839 = vpop.f32.mrf.mxu0
    %v2840 = vadd.f32 0.0, %v2839
    %v2841 = vpop.f32.mrf.mxu0
    %2842 = vdwg.mxu0
    %v2843 = vpack.c.bf16 %v2840, %v2840
    %v2845 = vsel %vm610, %v2843, 0
    %2847 = vmatprep.subr.bf16.mxu0 0
    %2848 = vmatpush1.bf16.msra.mxu0 0
    %2849 = vmatprep.subr.bf16.mxu0 0
    %2850 = vmatpush1.bf16.msra.mxu0 0
    %2851 = vmatprep.subr.bf16.mxu0 0
    %2852 = vmatpush1.bf16.msra.mxu0 0
    %2853 = vmatprep.subr.bf16.mxu0 0
    %2854 = vmatpush1.bf16.msra.mxu0 0
    %2855 = vmatprep.subr.bf16.mxu0 0
    %2856 = vmatpush1.bf16.msra.mxu0 0
    %2857 = vmatprep.subr.bf16.mxu0 0
    %2858 = vmatpush1.bf16.msra.mxu0 0
    %2859 = vmatprep.subr.bf16.mxu0 0
    %2860 = vmatpush1.bf16.msra.mxu0 0
    %2861 = vmatprep.subr.bf16.mxu0 0
    %2862 = vmatpush1.bf16.msra.mxu0 %v2424
    %2863 = vmatprep.subr.bf16.mxu0 0
    %2864 = vmatpush2.bf16.msra.mxu0 0
    %2865 = vmatprep.subr.bf16.mxu0 0
    %2866 = vmatpush2.bf16.msra.mxu0 0
    %2867 = vmatprep.subr.bf16.mxu0 0
    %2868 = vmatpush2.bf16.msra.mxu0 0
    %2869 = vmatprep.subr.bf16.mxu0 0
    %2870 = vmatpush2.bf16.msra.mxu0 0
    %2871 = vmatprep.subr.bf16.mxu0 0
    %2872 = vmatpush2.bf16.msra.mxu0 0
    %2873 = vmatprep.subr.bf16.mxu0 0
    %2874 = vmatpush2.bf16.msra.mxu0 0
    %2875 = vmatprep.subr.bf16.mxu0 0
    %2876 = vmatpush2.bf16.msra.mxu0 0
    %2877 = vmatprep.subr.bf16.mxu0 0
    %2878 = vmatpush2.bf16.msra.mxu0 0
    %2879 = vmatprep.mubr.bf16.mxu0 0
    %2880 = vmatmul.mubr.bf16.gmra.mxu0 %v2845
    %v2881 = vpop.f32.mrf.mxu0
    %v2882 = vadd.f32 0.0, %v2881
    %v2883 = vpop.f32.mrf.mxu0
    %v2884 = vpop.f32.mrf.mxu0
    %v2885 = vpop.f32.mrf.mxu0
    %2886 = vdwg.mxu0
    %v2888 = vsel %vm610, %v2680, 0
    %2890 = vmatprep.subr.bf16.mxu0 0
    %2891 = vmatpush1.bf16.msra.mxu0 0
    %2892 = vmatprep.subr.bf16.mxu0 0
    %2893 = vmatpush1.bf16.msra.mxu0 0
    %2894 = vmatprep.subr.bf16.mxu0 0
    %2895 = vmatpush1.bf16.msra.mxu0 0
    %2896 = vmatprep.subr.bf16.mxu0 0
    %2897 = vmatpush1.bf16.msra.mxu0 0
    %2898 = vmatprep.subr.bf16.mxu0 0
    %2899 = vmatpush1.bf16.msra.mxu0 0
    %2900 = vmatprep.subr.bf16.mxu0 0
    %2901 = vmatpush1.bf16.msra.mxu0 0
    %2902 = vmatprep.subr.bf16.mxu0 0
    %2903 = vmatpush1.bf16.msra.mxu0 0
    %2904 = vmatprep.subr.bf16.mxu0 0
    %2905 = vmatpush1.bf16.msra.mxu0 %v2473
    %2906 = vmatprep.subr.bf16.mxu0 0
    %2907 = vmatpush2.bf16.msra.mxu0 0
    %2908 = vmatprep.subr.bf16.mxu0 0
    %2909 = vmatpush2.bf16.msra.mxu0 0
    %2910 = vmatprep.subr.bf16.mxu0 0
    %2911 = vmatpush2.bf16.msra.mxu0 0
    %2912 = vmatprep.subr.bf16.mxu0 0
    %2913 = vmatpush2.bf16.msra.mxu0 0
    %2914 = vmatprep.subr.bf16.mxu0 0
    %2915 = vmatpush2.bf16.msra.mxu0 0
    %2916 = vmatprep.subr.bf16.mxu0 0
    %2917 = vmatpush2.bf16.msra.mxu0 0
    %2918 = vmatprep.subr.bf16.mxu0 0
    %2919 = vmatpush2.bf16.msra.mxu0 0
    %2920 = vmatprep.subr.bf16.mxu0 0
    %2921 = vmatpush2.bf16.msra.mxu0 0
    %2922 = vmatprep.mubr.bf16.mxu0 0
    %2923 = vmatmul.mubr.bf16.gmra.mxu0 %v2888
    %v2924 = vpop.f32.mrf.mxu0
    %v2925 = vadd.f32 %v2882, %v2924
    %v2926 = vpop.f32.mrf.mxu0
    %v2927 = vpop.f32.mrf.mxu0
    %v2928 = vpop.f32.mrf.mxu0
    %2929 = vdwg.mxu0
    %v2930 = vlaneseq
    %v2931 = vshrl.u32 %v2930, 7
    %v2932 = vsub.s32 7, %v2931
    %v2933 = vrot.slane %v44, %v2932
    %v2934 = vadd.f32 %v2513, %v2933
    %v2935 = vadd.f32 %v2925, %v2933
    %v2936 = vadd.f32 %v1710, %v2934
    %v2937 = vadd.f32 %v1711, %v2935
    %v2938 = vsel %vm191, %v2936, 0.0
    %2939 = vadd.xlane.f32.xlu0 %v2938
    %v2940 = vpop.xlane.xlu0 %2939
    %v2941 = vsel %vm191, %v2937, 0.0
    %2942 = vadd.xlane.f32.xlu0 %v2941
    %v2943 = vpop.xlane.xlu0 %2942
    %v2944 = vmul.f32 %v2940, %v198
    %v2945 = vmul.f32 %v2943, %v198
    %v2946 = vsub.f32 %v2936, %v2944
    %v2947 = vsub.f32 %v2937, %v2945
    %v2948 = vmul.f32 %v2946, %v2946
    %v2949 = vmul.f32 %v2947, %v2947
    %v2950 = vsel %vm191, %v2948, 0.0
    %2951 = vadd.xlane.f32.xlu0 %v2950
    %v2952 = vpop.xlane.xlu0 %2951
    %v2953 = vsel %vm191, %v2949, 0.0
    %2954 = vadd.xlane.f32.xlu0 %v2953
    %v2955 = vpop.xlane.xlu0 %2954
    %v2956 = vmul.f32 %v2952, %v198
    %v2957 = vmul.f32 %v2955, %v198
    %v2958 = vadd.f32 %v2956, 1e-12
    %v2959 = vadd.f32 %v2957, 1e-12
    %v2960 = vrsqrt.pop %v2958
    %v2961 = vrsqrt.pop %v2959
    %v2962 = vmul.f32 %v2946, %v2960
    %v2963 = vmul.f32 %v2947, %v2961
    %v2964 = vlaneseq
    %v2965 = vshrl.u32 %v2964, 7
    %v2966 = vsub.s32 2, %v2965
    %v2967 = vrot.slane %v45, %v2966
    %v2968 = vmul.f32 %v2962, %v2967
    %v2969 = vmul.f32 %v2963, %v2967
    %v2970 = vlaneseq
    %v2971 = vshrl.u32 %v2970, 7
    %v2972 = vsub.s32 6, %v2971
    %v2973 = vrot.slane %v45, %v2972
    %v2974 = vadd.f32 %v2968, %v2973
    %v2975 = vadd.f32 %v2969, %v2973
    %v2976 = vpack.c.bf16 %v2975, %v2974
    %s2977 = scalar_lea.vmem %s9, 16
    %v2978 = vld [vmem:[%s2977] sm:$0xf]
    %v2979 = vld [vmem:[%s2977 + $0x4] sm:$0xf]
    %v2980 = vld [vmem:[%s2977 + $0x8] sm:$0xf]
    %v2981 = vld [vmem:[%s2977 + $0xc] sm:$0xf]
    %v2982 = vlaneseq
    %v2983 = vshrl.u32 %v2982, 7
    %v2984 = vsub.s32 1, %v2983
    %v2985 = vrot.slane %v46, %v2984
    %v2990 = vunpack.c.l.b16 %v2978
    %v2991 = vunpack.c.l.b16 %v2979
    %v2992 = vunpack.c.l.b16 %v2980
    %v2993 = vunpack.c.l.b16 %v2981
    %v2994 = vpack.c.b16 %v2991, %v2990
    %v2995 = vpack.c.b16 %v2993, %v2992
    %v2999 = vsel %vm191, %v2976, 0
    %3001 = vmatprep.subr.bf16.mxu0 0
    %3002 = vmatpush1.bf16.msra.mxu0 0
    %3003 = vmatprep.subr.bf16.mxu0 0
    %3004 = vmatpush1.bf16.msra.mxu0 0
    %3005 = vmatprep.subr.bf16.mxu0 0
    %3006 = vmatpush1.bf16.msra.mxu0 0
    %3007 = vmatprep.subr.bf16.mxu0 0
    %3008 = vmatpush1.bf16.msra.mxu0 0
    %3009 = vmatprep.subr.bf16.mxu0 0
    %3010 = vmatpush1.bf16.msra.mxu0 0
    %3011 = vmatprep.subr.bf16.mxu0 0
    %3012 = vmatpush1.bf16.msra.mxu0 0
    %3013 = vmatprep.subr.bf16.mxu0 0
    %3014 = vmatpush1.bf16.msra.mxu0 %v2995
    %3015 = vmatprep.subr.bf16.mxu0 0
    %3016 = vmatpush1.bf16.msra.mxu0 %v2994
    %3017 = vmatprep.subr.bf16.mxu0 0
    %3018 = vmatpush2.bf16.msra.mxu0 0
    %3019 = vmatprep.subr.bf16.mxu0 0
    %3020 = vmatpush2.bf16.msra.mxu0 0
    %3021 = vmatprep.subr.bf16.mxu0 0
    %3022 = vmatpush2.bf16.msra.mxu0 0
    %3023 = vmatprep.subr.bf16.mxu0 0
    %3024 = vmatpush2.bf16.msra.mxu0 0
    %3025 = vmatprep.subr.bf16.mxu0 0
    %3026 = vmatpush2.bf16.msra.mxu0 0
    %3027 = vmatprep.subr.bf16.mxu0 0
    %3028 = vmatpush2.bf16.msra.mxu0 0
    %3029 = vmatprep.subr.bf16.mxu0 0
    %3030 = vmatpush2.bf16.msra.mxu0 0
    %3031 = vmatprep.subr.bf16.mxu0 0
    %3032 = vmatpush2.bf16.msra.mxu0 0
    %3033 = vmatprep.mubr.bf16.mxu0 0
    %3034 = vmatmul.mubr.bf16.gmra.mxu0 %v2999
    %v3035 = vpop.f32.mrf.mxu0
    %v3036 = vadd.f32 %v2985, %v3035
    %v3037 = vpop.f32.mrf.mxu0
    %v3038 = vpop.f32.mrf.mxu0
    %v3039 = vadd.f32 %v2985, %v3038
    %v3040 = vpop.f32.mrf.mxu0
    %3041 = vdwg.mxu0
    %v3042 = vmul.f32 %v3036, 0.5
    %v3043 = vmul.f32 %v3039, 0.5
    %v3044 = vmul.f32 %v3036, 0.044715
    %v3045 = vmul.f32 %v3039, 0.044715
    %v3046 = vmul.f32 %v3044, %v3036
    %v3047 = vmul.f32 %v3045, %v3039
    %v3048 = vmul.f32 %v3046, %v3036
    %v3049 = vmul.f32 %v3047, %v3039
    %v3050 = vadd.f32 %v3036, %v3048
    %v3051 = vadd.f32 %v3039, %v3049
    %v3052 = vmul.f32 %v3050, 0.7978846
    %v3053 = vmul.f32 %v3051, 0.7978846
    %v3054 = vtanh.pop %v3052
    %v3055 = vtanh.pop %v3053
    %v3056 = vadd.f32 %v3054, 1.0
    %v3057 = vadd.f32 %v3055, 1.0
    %v3058 = vmul.f32 %v3042, %v3056
    %v3059 = vmul.f32 %v3043, %v3057
    %v3060 = vpack.c.bf16 %v3059, %v3058
    %s3061 = scalar_lea.vmem %s10, 32
    %v3062 = vld [vmem:[%s3061] sm:$0xf]
    %v3063 = vld [vmem:[%s3061 + $0x4] sm:$0xf]
    %v3064 = vld [vmem:[%s3061 + $0x8] sm:$0xf]
    %v3065 = vld [vmem:[%s3061 + $0xc] sm:$0xf]
    %v3066 = vld [vmem:[%s3061 + $0x10] sm:$0xf]
    %v3067 = vld [vmem:[%s3061 + $0x14] sm:$0xf]
    %v3068 = vld [vmem:[%s3061 + $0x18] sm:$0xf]
    %v3069 = vld [vmem:[%s3061 + $0x1c] sm:$0xf]
    %v3070 = vlaneseq
    %v3071 = vshrl.u32 %v3070, 7
    %v3072 = vsub.s32 3, %v3071
    %v3073 = vrot.slane %v46, %v3072
    %v3082 = vunpack.c.l.b16 %v3062
    %v3083 = vunpack.c.l.b16 %v3063
    %v3084 = vunpack.c.l.b16 %v3064
    %v3085 = vunpack.c.l.b16 %v3065
    %v3086 = vunpack.c.l.b16 %v3066
    %v3087 = vunpack.c.l.b16 %v3067
    %v3088 = vunpack.c.l.b16 %v3068
    %v3089 = vunpack.c.l.b16 %v3069
    %v3090 = vpack.c.b16 %v3083, %v3082
    %v3091 = vpack.c.b16 %v3085, %v3084
    %v3092 = vpack.c.b16 %v3087, %v3086
    %v3093 = vpack.c.b16 %v3089, %v3088
    %v3099 = vsel %vm1627, %v3060, 0
    %3101 = vmatprep.subr.bf16.mxu0 0
    %3102 = vmatpush1.bf16.msra.mxu0 0
    %3103 = vmatprep.subr.bf16.mxu0 0
    %3104 = vmatpush1.bf16.msra.mxu0 0
    %3105 = vmatprep.subr.bf16.mxu0 0
    %3106 = vmatpush1.bf16.msra.mxu0 0
    %3107 = vmatprep.subr.bf16.mxu0 0
    %3108 = vmatpush1.bf16.msra.mxu0 0
    %3109 = vmatprep.subr.bf16.mxu0 0
    %3110 = vmatpush1.bf16.msra.mxu0 %v3093
    %3111 = vmatprep.subr.bf16.mxu0 0
    %3112 = vmatpush1.bf16.msra.mxu0 %v3092
    %3113 = vmatprep.subr.bf16.mxu0 0
    %3114 = vmatpush1.bf16.msra.mxu0 %v3091
    %3115 = vmatprep.subr.bf16.mxu0 0
    %3116 = vmatpush1.bf16.msra.mxu0 %v3090
    %3117 = vmatprep.subr.bf16.mxu0 0
    %3118 = vmatpush2.bf16.msra.mxu0 0
    %3119 = vmatprep.subr.bf16.mxu0 0
    %3120 = vmatpush2.bf16.msra.mxu0 0
    %3121 = vmatprep.subr.bf16.mxu0 0
    %3122 = vmatpush2.bf16.msra.mxu0 0
    %3123 = vmatprep.subr.bf16.mxu0 0
    %3124 = vmatpush2.bf16.msra.mxu0 0
    %3125 = vmatprep.subr.bf16.mxu0 0
    %3126 = vmatpush2.bf16.msra.mxu0 0
    %3127 = vmatprep.subr.bf16.mxu0 0
    %3128 = vmatpush2.bf16.msra.mxu0 0
    %3129 = vmatprep.subr.bf16.mxu0 0
    %3130 = vmatpush2.bf16.msra.mxu0 0
    %3131 = vmatprep.subr.bf16.mxu0 0
    %3132 = vmatpush2.bf16.msra.mxu0 0
    %3133 = vmatprep.mubr.bf16.mxu0 0
    %3134 = vmatmul.mubr.bf16.gmra.mxu0 %v3099
    %v3135 = vpop.f32.mrf.mxu0
    %v3136 = vadd.f32 %v3073, %v3135
    %v3137 = vpop.f32.mrf.mxu0
    %v3138 = vpop.f32.mrf.mxu0
    %v3139 = vadd.f32 %v3073, %v3138
    %v3140 = vpop.f32.mrf.mxu0
    %3141 = vdwg.mxu0
    %v3142 = vadd.f32 %v2974, %v3136
    %v3143 = vadd.f32 %v2975, %v3139
    %v3144 = vsel %vm191, %v3142, 0.0
    %3145 = vadd.xlane.f32.xlu0 %v3144
    %v3146 = vpop.xlane.xlu0 %3145
    %v3147 = vsel %vm191, %v3143, 0.0
    %3148 = vadd.xlane.f32.xlu0 %v3147
    %v3149 = vpop.xlane.xlu0 %3148
    %v3150 = vmul.f32 %v3146, %v198
    %v3151 = vmul.f32 %v3149, %v198
    %v3152 = vsub.f32 %v3142, %v3150
    %v3153 = vsub.f32 %v3143, %v3151
    %v3154 = vmul.f32 %v3152, %v3152
    %v3155 = vmul.f32 %v3153, %v3153
    %v3156 = vsel %vm191, %v3154, 0.0
    %3157 = vadd.xlane.f32.xlu0 %v3156
    %v3158 = vpop.xlane.xlu0 %3157
    %v3159 = vsel %vm191, %v3155, 0.0
    %3160 = vadd.xlane.f32.xlu0 %v3159
    %v3161 = vpop.xlane.xlu0 %3160
    %v3162 = vmul.f32 %v3158, %v198
    %v3163 = vmul.f32 %v3161, %v198
    %v3164 = vadd.f32 %v3162, 1e-12
    %v3165 = vadd.f32 %v3163, 1e-12
    %v3166 = vrsqrt.pop %v3164
    %v3167 = vrsqrt.pop %v3165
    %v3168 = vmul.f32 %v3152, %v3166
    %v3169 = vmul.f32 %v3153, %v3167
    %v3170 = vlaneseq
    %v3171 = vshrl.u32 %v3170, 7
    %v3172 = vsub.s32 3, %v3171
    %v3173 = vrot.slane %v45, %v3172
    %v3174 = vmul.f32 %v3168, %v3173
    %v3175 = vmul.f32 %v3169, %v3173
    %v3176 = vlaneseq
    %v3177 = vshrl.u32 %v3176, 7
    %v3178 = vsub.s32 7, %v3177
    %v3179 = vrot.slane %v45, %v3178
    %v3180 = vadd.f32 %v3174, %v3179
    %v3181 = vadd.f32 %v3175, %v3179
    %v3183 = vrot.slane %v3181, 7
    %vm3185 = vcmask 1040384
    %v3186 = vsel %vm3185, %v3180, %v3183
    %v3187 = vpack.c.bf16 %v3186, %v3186
    %v3188 = vld [vmem:[%s11] sm:$0xf]
    %v3189 = vld [vmem:[%s11 + $0x4] sm:$0xf]
    %v3190 = vld [vmem:[%s11 + $0x8] sm:$0xf]
    %v3191 = vld [vmem:[%s11 + $0xc] sm:$0xf]
    %v3192 = vlaneseq
    %v3193 = vshrl.u32 %v3192, 7
    %v3194 = vsub.s32 4, %v3193
    %v3195 = vrot.slane %v46, %v3194
    %v3200 = vunpack.c.l.b16 %v3188
    %v3201 = vunpack.c.l.b16 %v3189
    %v3202 = vunpack.c.l.b16 %v3190
    %v3203 = vunpack.c.l.b16 %v3191
    %v3204 = vpack.c.b16 %v3201, %v3200
    %v3205 = vpack.c.b16 %v3203, %v3202
    %v3209 = vsel %vm191, %v3187, 0
    %3211 = vmatprep.subr.bf16.mxu0 0
    %3212 = vmatpush1.bf16.msra.mxu0 0
    %3213 = vmatprep.subr.bf16.mxu0 0
    %3214 = vmatpush1.bf16.msra.mxu0 0
    %3215 = vmatprep.subr.bf16.mxu0 0
    %3216 = vmatpush1.bf16.msra.mxu0 0
    %3217 = vmatprep.subr.bf16.mxu0 0
    %3218 = vmatpush1.bf16.msra.mxu0 0
    %3219 = vmatprep.subr.bf16.mxu0 0
    %3220 = vmatpush1.bf16.msra.mxu0 0
    %3221 = vmatprep.subr.bf16.mxu0 0
    %3222 = vmatpush1.bf16.msra.mxu0 0
    %3223 = vmatprep.subr.bf16.mxu0 0
    %3224 = vmatpush1.bf16.msra.mxu0 %v3205
    %3225 = vmatprep.subr.bf16.mxu0 0
    %3226 = vmatpush1.bf16.msra.mxu0 %v3204
    %3227 = vmatprep.subr.bf16.mxu0 0
    %3228 = vmatpush2.bf16.msra.mxu0 0
    %3229 = vmatprep.subr.bf16.mxu0 0
    %3230 = vmatpush2.bf16.msra.mxu0 0
    %3231 = vmatprep.subr.bf16.mxu0 0
    %3232 = vmatpush2.bf16.msra.mxu0 0
    %3233 = vmatprep.subr.bf16.mxu0 0
    %3234 = vmatpush2.bf16.msra.mxu0 0
    %3235 = vmatprep.subr.bf16.mxu0 0
    %3236 = vmatpush2.bf16.msra.mxu0 0
    %3237 = vmatprep.subr.bf16.mxu0 0
    %3238 = vmatpush2.bf16.msra.mxu0 0
    %3239 = vmatprep.subr.bf16.mxu0 0
    %3240 = vmatpush2.bf16.msra.mxu0 0
    %3241 = vmatprep.subr.bf16.mxu0 0
    %3242 = vmatpush2.bf16.msra.mxu0 0
    %3243 = vmatprep.mubr.bf16.mxu0 0
    %3244 = vmatmul.mubr.bf16.gmra.mxu0 %v3209
    %v3245 = vpop.f32.mrf.mxu0
    %v3246 = vadd.f32 %v3195, %v3245
    %v3247 = vpop.f32.mrf.mxu0
    %v3248 = vpop.f32.mrf.mxu0
    %v3249 = vpop.f32.mrf.mxu0
    %3250 = vdwg.mxu0
    %vm3251 = vcmask 74752
    %3252 = vst.msk [vmem:[#allocation2] sm:$0x3] %vm3251, %v3246
    // Predicated region
    $region50: #{bert_classifier_forward.1} parent=1 // pred_check
      _
    $region51: #{bert_classifier_forward.1} parent=1 // pred_check_branch
      %3254 = sbr.rel (0) target = $region53
    $region52: #{bert_classifier_forward.1} parent=1 // pred_region
      %s3256 = ssub.s32 32, 32
      %3257 = vsyncadd [#allocation3], %s3256
      %s3259 = sshll.u32 [#allocation2], 4
      %s3260 = int_to_ptr.vmem [resolvable:$true] %s3259
      %3262 = dma.vmem_to_hbm [thread:$0]  %s3260, 32, %s12, [#allocation3]
    $region53: #{bert_classifier_forward.1} parent=1 // pred_fallthru
      _
    // Predicated region
    $region54: #{bert_classifier_forward.1} parent=1 // pred_check
      _
    $region55: #{bert_classifier_forward.1} parent=1 // pred_check_branch
      %3264 = sbr.rel (0) target = $region57
    $region56: #{bert_classifier_forward.1} parent=1 // pred_region
      %3265 = dma.done [#allocation3], 32
    $region57: #{bert_classifier_forward.1} parent=1 // pred_fallthru
      _
    %3266 = vsyncpa [#allocation3], 1

</llo_original>
